<compile_context>
chip_gen: v7x
topology: tpu7x:2x2x1
jax: 0.10.0
libtpu: 0.0.40
codegen_flags: <defaults>
</compile_context>

<pallas_src>
import jax
import jax.numpy as jnp
from jax.experimental import pallas as pl
from jax.experimental.pallas import tpu as pltpu

_LANE = 128


def _pad_axis(x, size, axis):
    pad = size - x.shape[axis]
    if pad <= 0:
        return x
    widths = [(0, 0)] * x.ndim
    widths[axis] = (0, pad)
    return jnp.pad(x, widths)


def _cnn_kernel(ids_ref, wfused_hbm, convb_ref, fcw_ref, fcb_ref, out_ref,
                xbuf, sems):
    """One grid step: logits for a tile of TB batch rows.

    ids_ref    SMEM (B_pad, S) int32   scalar-prefetched token ids (batch-major)
    wfused_hbm HBM  (V, Fp)            embed @ conv_w fused table (stays in HBM)
    convb_ref  VMEM (1, Fp)            conv bias (zero-padded to Fp)
    fcw_ref    VMEM (Fp, Op)           fc weight (zero-padded)
    fcb_ref    VMEM (1, Op)            fc bias (zero-padded)
    out_ref    VMEM (TB, Op)           logits for this batch tile
    xbuf       VMEM (TB*S, Fp)         gathered fused-embedding rows
    sems       DMA semaphores (TB*S,)
    """
    i = pl.program_id(0)
    TB, _ = out_ref.shape
    S = ids_ref.shape[1]
    Fp = xbuf.shape[1]

    # --- embedding (+ fused 1xE conv) gather: one row-DMA per token ----------
    # ids are addressing data and live in SMEM; each row is a contiguous
    # Fp*4-byte DMA from HBM.  Static unroll is fine at these toy sizes; for
    # large TB*S this would become a pl.loop with double-buffered slots.
    copies = []
    for b in range(TB):
        for s in range(S):
            r = b * S + s
            tok = ids_ref[i * TB + b, s]
            cp = pltpu.make_async_copy(
                wfused_hbm.at[pl.ds(tok, 1), :],
                xbuf.at[pl.ds(r, 1), :],
                sems.at[r])
            cp.start()
            copies.append(cp)
    for cp in copies:
        cp.wait()

    # (dropout: identity in eval mode)
    x = xbuf[...].reshape(TB, S, Fp)                    # sublane regroup only
    conved = jnp.maximum(x + convb_ref[...].reshape(1, 1, Fp), 0.0)   # bias+ReLU
    pooled = jnp.max(conved, axis=1)                    # max_pool1d, full extent
    out_ref[...] = (jnp.dot(pooled, fcw_ref[...],
                            preferred_element_type=jnp.float32)
                    + fcb_ref[...])


def cnn_forward(text_sb, params):
    """text_sb: (seq_len, batch) int32 token ids (PyTorch convention)."""
    V, E = params["embed"].shape
    FS, _, F = params["conv_w"].shape
    O = params["fc_w"].shape[1]
    assert FS == 1, ("reference torch.cat(pooled, dim=1) / fc in_features only "
                     "work for filter_size == 1")

    # text.permute(1, 0) -> (B, S); clip ids so a bad token can't OOB the DMA
    # (nn.Embedding would raise; we clamp instead).
    ids = jnp.clip(text_sb.T.astype(jnp.int32), 0, V - 1)
    B, S = ids.shape

    Fp = pl.cdiv(F, _LANE) * _LANE                     # lane-pad n_filter
    Op = pl.cdiv(O, _LANE) * _LANE                     # lane-pad output_dim
    TB = min(128, pl.cdiv(B, 8) * 8)                   # batch rows per grid step
    B_pad = pl.cdiv(B, TB) * TB

    # Fold Conv2d(1, F, (1, E)) into the embedding table: (V, F) fused table.
    w_fused = jnp.dot(params["embed"], params["conv_w"][0],
                      preferred_element_type=jnp.float32,
                      precision=jax.lax.Precision.HIGHEST)          # (V, F)
    w_fused = _pad_axis(w_fused, Fp, 1)                              # (V, Fp)
    conv_b = _pad_axis(params["conv_b"].reshape(1, F), Fp, 1)        # (1, Fp)
    fc_w = _pad_axis(_pad_axis(params["fc_w"], Fp, 0), Op, 1)        # (Fp, Op)
    fc_b = _pad_axis(params["fc_b"].reshape(1, O), Op, 1)            # (1, Op)
    ids_p = _pad_axis(ids, B_pad, 0)                                 # (B_pad, S)

    out = pl.pallas_call(
        _cnn_kernel,
        out_shape=jax.ShapeDtypeStruct((B_pad, Op), jnp.float32),
        grid_spec=pltpu.PrefetchScalarGridSpec(
            num_scalar_prefetch=1,                     # ids -> SMEM
            grid=(B_pad // TB,),
            in_specs=[
                pl.BlockSpec(memory_space=pl.ANY),                 # fused table stays in HBM
                pl.BlockSpec((1, Fp), lambda i, ids: (0, 0)),      # conv bias
                pl.BlockSpec((Fp, Op), lambda i, ids: (0, 0)),     # fc weight
                pl.BlockSpec((1, Op), lambda i, ids: (0, 0)),      # fc bias
            ],
            out_specs=pl.BlockSpec((TB, Op), lambda i, ids: (i, 0)),
            scratch_shapes=[
                pltpu.VMEM((TB * S, Fp), jnp.float32),
                pltpu.SemaphoreType.DMA((TB * S,)),
            ]),
        compiler_params=pltpu.CompilerParams(
            dimension_semantics=("parallel",)),        # batch tiles across TCs (v7x)
    )(ids_p, w_fused, conv_b, fc_w, fc_b)
    return out[:B, :O]


def cnn_forward_ref(text_sb, params):
    """Pure-JAX reference of the same (repaired) forward semantics."""
    ids = text_sb.T
    emb = params["embed"][ids]                                  # (B, S, E)
    FS = params["conv_w"].shape[0]
    L = emb.shape[1] - FS + 1
    conved = sum(jnp.einsum("ble,ef->blf", emb[:, k:k + L, :], params["conv_w"][k],
                            precision=jax.lax.Precision.HIGHEST)
                 for k in range(FS)) + params["conv_b"][None]   # (B, L, F)
    conved = jnp.maximum(conved, 0.0)
    pooled = jnp.max(conved, axis=1)                            # (B, F)
    return pooled @ params["fc_w"] + params["fc_b"]


def init_params(key, vocab_size, embed_dim, n_filter, filter_size, output_dim):
    k1, k2, k3, k4, k5 = jax.random.split(key, 5)
    embed = jax.random.normal(k1, (vocab_size, embed_dim), jnp.float32)
    # Conv2d weight (n_filter, 1, filter_size, embed_dim) stored in kernel layout
    # (filter_size, embed_dim, n_filter); biases stored as 2-D rows.
    conv_w = 0.1 * jax.random.normal(k2, (filter_size, embed_dim, n_filter), jnp.float32)
    conv_b = 0.1 * jax.random.normal(k3, (1, n_filter), jnp.float32)
    fc_in = filter_size * n_filter                              # nn.Linear(filter_size*n_filter, out)
    fc_w = 0.1 * jax.random.normal(k4, (fc_in, output_dim), jnp.float32)
    fc_b = 0.1 * jax.random.normal(k5, (1, output_dim), jnp.float32)
    return dict(embed=embed, conv_w=conv_w, conv_b=conv_b, fc_w=fc_w, fc_b=fc_b)


if __name__ == "__main__":
    vocab_size, embed_dim = 50, 32
    n_filter, filter_size, output_dim = 8, 1, 4     # filter_size=1 keeps fc dims consistent
    seq_len, batch = 8, 2
    dropout_rate = 0.5                              # unused: eval mode

    key = jax.random.PRNGKey(0)
    kp, kt = jax.random.split(key)
    params = init_params(kp, vocab_size, embed_dim, n_filter, filter_size, output_dim)
    text = jax.random.randint(kt, (seq_len, batch), 0, vocab_size, dtype=jnp.int32)

    out = jax.block_until_ready(cnn_forward(text, params))
    ref = cnn_forward_ref(text, params)
    assert out.shape == (batch, output_dim)
    assert jnp.allclose(out, ref, atol=1e-3, rtol=1e-3), (out, ref)
    print("KERNEL_OK")
</pallas_src>

<mosaic_0001>
module attributes {stable_mosaic.version = 11 : i64} {
  func.func @_cnn_kernel(%arg0: i32, %arg1: memref<8x8xi32, #tpu.memory_space<smem>>, %arg2: memref<50x128xf32, #tpu.memory_space<any>>, %arg3: memref<1x128xf32, #tpu.memory_space<vmem>>, %arg4: memref<128x128xf32, #tpu.memory_space<vmem>>, %arg5: memref<1x128xf32, #tpu.memory_space<vmem>>, %arg6: memref<8x128xf32, #tpu.memory_space<vmem>>, %arg7: memref<64x128xf32, #tpu.memory_space<vmem>>, %arg8: memref<64x!tpu.dma_semaphore, #tpu.memory_space<semaphore_mem>>) attributes {dimension_semantics = [#tpu.dimension_semantics<parallel>], iteration_bounds = array<i64: 1>, scalar_prefetch = 1 : i64, scratch_operands = 2 : i64, tpu.core_type = #tpu.core_type<tc>, window_params = [{}, {pipeline_mode = #tpu.pipeline_mode<synchronous>, transform_indices = @transform_1, window_bounds = array<i64: 1, 128>}, {pipeline_mode = #tpu.pipeline_mode<synchronous>, transform_indices = @transform_2, window_bounds = array<i64: 128, 128>}, {pipeline_mode = #tpu.pipeline_mode<synchronous>, transform_indices = @transform_3, window_bounds = array<i64: 1, 128>}, {transform_indices = @transform_4, window_bounds = array<i64: 8, 128>}]} {
    %c8_i32 = arith.constant 8 : i32
    %0 = arith.muli %arg0, %c8_i32 : i32
    %c0_i32 = arith.constant 0 : i32
    %1 = arith.addi %0, %c0_i32 : i32
    %2 = arith.index_cast %1 : i32 to index
    %c0 = arith.constant 0 : index
    %3 = memref.load %arg1[%2, %c0] : memref<8x8xi32, #tpu.memory_space<smem>>
    %c0_i32_0 = arith.constant 0 : i32
    %c0_i32_1 = arith.constant 0 : i32
    %4 = tpu.memref_slice %arg2[%3, %c0_i32_1] : memref<50x128xf32, #tpu.memory_space<any>> -> memref<1x128xf32, #tpu.memory_space<any>>
    %c0_i32_2 = arith.constant 0 : i32
    %c0_i32_3 = arith.constant 0 : i32
    %5 = tpu.memref_slice %arg7[%c0_i32_2, %c0_i32_3] : memref<64x128xf32, #tpu.memory_space<vmem>> -> memref<1x128xf32, #tpu.memory_space<vmem>>
    %6 = tpu.memref_slice %arg8[%c0_i32_0] : memref<64x!tpu.dma_semaphore, #tpu.memory_space<semaphore_mem>> -> memref<1x!tpu.dma_semaphore, #tpu.memory_space<semaphore_mem>>
    %7 = tpu.memref_squeeze %6 : memref<1x!tpu.dma_semaphore, #tpu.memory_space<semaphore_mem>> -> memref<!tpu.dma_semaphore, #tpu.memory_space<semaphore_mem>>
    tpu.enqueue_dma source(%4 : memref<1x128xf32, #tpu.memory_space<any>>) target(%5 : memref<1x128xf32, #tpu.memory_space<vmem>>) target_semaphore(%7 : memref<!tpu.dma_semaphore, #tpu.memory_space<semaphore_mem>>)
    %c8_i32_4 = arith.constant 8 : i32
    %8 = arith.muli %arg0, %c8_i32_4 : i32
    %c0_i32_5 = arith.constant 0 : i32
    %9 = arith.addi %8, %c0_i32_5 : i32
    %10 = arith.index_cast %9 : i32 to index
    %c1 = arith.constant 1 : index
    %11 = memref.load %arg1[%10, %c1] : memref<8x8xi32, #tpu.memory_space<smem>>
    %c1_i32 = arith.constant 1 : i32
    %c0_i32_6 = arith.constant 0 : i32
    %12 = tpu.memref_slice %arg2[%11, %c0_i32_6] : memref<50x128xf32, #tpu.memory_space<any>> -> memref<1x128xf32, #tpu.memory_space<any>>
    %c1_i32_7 = arith.constant 1 : i32
    %c0_i32_8 = arith.constant 0 : i32
    %13 = tpu.memref_slice %arg7[%c1_i32_7, %c0_i32_8] : memref<64x128xf32, #tpu.memory_space<vmem>> -> memref<1x128xf32, #tpu.memory_space<vmem>>
    %14 = tpu.memref_slice %arg8[%c1_i32] : memref<64x!tpu.dma_semaphore, #tpu.memory_space<semaphore_mem>> -> memref<1x!tpu.dma_semaphore, #tpu.memory_space<semaphore_mem>>
    %15 = tpu.memref_squeeze %14 : memref<1x!tpu.dma_semaphore, #tpu.memory_space<semaphore_mem>> -> memref<!tpu.dma_semaphore, #tpu.memory_space<semaphore_mem>>
    tpu.enqueue_dma source(%12 : memref<1x128xf32, #tpu.memory_space<any>>) target(%13 : memref<1x128xf32, #tpu.memory_space<vmem>>) target_semaphore(%15 : memref<!tpu.dma_semaphore, #tpu.memory_space<semaphore_mem>>)
    %c8_i32_9 = arith.constant 8 : i32
    %16 = arith.muli %arg0, %c8_i32_9 : i32
    %c0_i32_10 = arith.constant 0 : i32
    %17 = arith.addi %16, %c0_i32_10 : i32
    %18 = arith.index_cast %17 : i32 to index
    %c2 = arith.constant 2 : index
    %19 = memref.load %arg1[%18, %c2] : memref<8x8xi32, #tpu.memory_space<smem>>
    %c2_i32 = arith.constant 2 : i32
    %c0_i32_11 = arith.constant 0 : i32
    %20 = tpu.memref_slice %arg2[%19, %c0_i32_11] : memref<50x128xf32, #tpu.memory_space<any>> -> memref<1x128xf32, #tpu.memory_space<any>>
    %c2_i32_12 = arith.constant 2 : i32
    %c0_i32_13 = arith.constant 0 : i32
    %21 = tpu.memref_slice %arg7[%c2_i32_12, %c0_i32_13] : memref<64x128xf32, #tpu.memory_space<vmem>> -> memref<1x128xf32, #tpu.memory_space<vmem>>
    %22 = tpu.memref_slice %arg8[%c2_i32] : memref<64x!tpu.dma_semaphore, #tpu.memory_space<semaphore_mem>> -> memref<1x!tpu.dma_semaphore, #tpu.memory_space<semaphore_mem>>
    %23 = tpu.memref_squeeze %22 : memref<1x!tpu.dma_semaphore, #tpu.memory_space<semaphore_mem>> -> memref<!tpu.dma_semaphore, #tpu.memory_space<semaphore_mem>>
    tpu.enqueue_dma source(%20 : memref<1x128xf32, #tpu.memory_space<any>>) target(%21 : memref<1x128xf32, #tpu.memory_space<vmem>>) target_semaphore(%23 : memref<!tpu.dma_semaphore, #tpu.memory_space<semaphore_mem>>)
    %c8_i32_14 = arith.constant 8 : i32
    %24 = arith.muli %arg0, %c8_i32_14 : i32
    %c0_i32_15 = arith.constant 0 : i32
    %25 = arith.addi %24, %c0_i32_15 : i32
    %26 = arith.index_cast %25 : i32 to index
    %c3 = arith.constant 3 : index
    %27 = memref.load %arg1[%26, %c3] : memref<8x8xi32, #tpu.memory_space<smem>>
    %c3_i32 = arith.constant 3 : i32
    %c0_i32_16 = arith.constant 0 : i32
    %28 = tpu.memref_slice %arg2[%27, %c0_i32_16] : memref<50x128xf32, #tpu.memory_space<any>> -> memref<1x128xf32, #tpu.memory_space<any>>
    %c3_i32_17 = arith.constant 3 : i32
    %c0_i32_18 = arith.constant 0 : i32
    %29 = tpu.memref_slice %arg7[%c3_i32_17, %c0_i32_18] : memref<64x128xf32, #tpu.memory_space<vmem>> -> memref<1x128xf32, #tpu.memory_space<vmem>>
    %30 = tpu.memref_slice %arg8[%c3_i32] : memref<64x!tpu.dma_semaphore, #tpu.memory_space<semaphore_mem>> -> memref<1x!tpu.dma_semaphore, #tpu.memory_space<semaphore_mem>>
    %31 = tpu.memref_squeeze %30 : memref<1x!tpu.dma_semaphore, #tpu.memory_space<semaphore_mem>> -> memref<!tpu.dma_semaphore, #tpu.memory_space<semaphore_mem>>
    tpu.enqueue_dma source(%28 : memref<1x128xf32, #tpu.memory_space<any>>) target(%29 : memref<1x128xf32, #tpu.memory_space<vmem>>) target_semaphore(%31 : memref<!tpu.dma_semaphore, #tpu.memory_space<semaphore_mem>>)
    %c8_i32_19 = arith.constant 8 : i32
    %32 = arith.muli %arg0, %c8_i32_19 : i32
    %c0_i32_20 = arith.constant 0 : i32
    %33 = arith.addi %32, %c0_i32_20 : i32
    %34 = arith.index_cast %33 : i32 to index
    %c4 = arith.constant 4 : index
    %35 = memref.load %arg1[%34, %c4] : memref<8x8xi32, #tpu.memory_space<smem>>
    %c4_i32 = arith.constant 4 : i32
    %c0_i32_21 = arith.constant 0 : i32
    %36 = tpu.memref_slice %arg2[%35, %c0_i32_21] : memref<50x128xf32, #tpu.memory_space<any>> -> memref<1x128xf32, #tpu.memory_space<any>>
    %c4_i32_22 = arith.constant 4 : i32
    %c0_i32_23 = arith.constant 0 : i32
    %37 = tpu.memref_slice %arg7[%c4_i32_22, %c0_i32_23] : memref<64x128xf32, #tpu.memory_space<vmem>> -> memref<1x128xf32, #tpu.memory_space<vmem>>
    %38 = tpu.memref_slice %arg8[%c4_i32] : memref<64x!tpu.dma_semaphore, #tpu.memory_space<semaphore_mem>> -> memref<1x!tpu.dma_semaphore, #tpu.memory_space<semaphore_mem>>
    %39 = tpu.memref_squeeze %38 : memref<1x!tpu.dma_semaphore, #tpu.memory_space<semaphore_mem>> -> memref<!tpu.dma_semaphore, #tpu.memory_space<semaphore_mem>>
    tpu.enqueue_dma source(%36 : memref<1x128xf32, #tpu.memory_space<any>>) target(%37 : memref<1x128xf32, #tpu.memory_space<vmem>>) target_semaphore(%39 : memref<!tpu.dma_semaphore, #tpu.memory_space<semaphore_mem>>)
    %c8_i32_24 = arith.constant 8 : i32
    %40 = arith.muli %arg0, %c8_i32_24 : i32
    %c0_i32_25 = arith.constant 0 : i32
    %41 = arith.addi %40, %c0_i32_25 : i32
    %42 = arith.index_cast %41 : i32 to index
    %c5 = arith.constant 5 : index
    %43 = memref.load %arg1[%42, %c5] : memref<8x8xi32, #tpu.memory_space<smem>>
    %c5_i32 = arith.constant 5 : i32
    %c0_i32_26 = arith.constant 0 : i32
    %44 = tpu.memref_slice %arg2[%43, %c0_i32_26] : memref<50x128xf32, #tpu.memory_space<any>> -> memref<1x128xf32, #tpu.memory_space<any>>
    %c5_i32_27 = arith.constant 5 : i32
    %c0_i32_28 = arith.constant 0 : i32
    %45 = tpu.memref_slice %arg7[%c5_i32_27, %c0_i32_28] : memref<64x128xf32, #tpu.memory_space<vmem>> -> memref<1x128xf32, #tpu.memory_space<vmem>>
    %46 = tpu.memref_slice %arg8[%c5_i32] : memref<64x!tpu.dma_semaphore, #tpu.memory_space<semaphore_mem>> -> memref<1x!tpu.dma_semaphore, #tpu.memory_space<semaphore_mem>>
    %47 = tpu.memref_squeeze %46 : memref<1x!tpu.dma_semaphore, #tpu.memory_space<semaphore_mem>> -> memref<!tpu.dma_semaphore, #tpu.memory_space<semaphore_mem>>
    tpu.enqueue_dma source(%44 : memref<1x128xf32, #tpu.memory_space<any>>) target(%45 : memref<1x128xf32, #tpu.memory_space<vmem>>) target_semaphore(%47 : memref<!tpu.dma_semaphore, #tpu.memory_space<semaphore_mem>>)
    %c8_i32_29 = arith.constant 8 : i32
    %48 = arith.muli %arg0, %c8_i32_29 : i32
    %c0_i32_30 = arith.constant 0 : i32
    %49 = arith.addi %48, %c0_i32_30 : i32
    %50 = arith.index_cast %49 : i32 to index
    %c6 = arith.constant 6 : index
    %51 = memref.load %arg1[%50, %c6] : memref<8x8xi32, #tpu.memory_space<smem>>
    %c6_i32 = arith.constant 6 : i32
    %c0_i32_31 = arith.constant 0 : i32
    %52 = tpu.memref_slice %arg2[%51, %c0_i32_31] : memref<50x128xf32, #tpu.memory_space<any>> -> memref<1x128xf32, #tpu.memory_space<any>>
    %c6_i32_32 = arith.constant 6 : i32
    %c0_i32_33 = arith.constant 0 : i32
    %53 = tpu.memref_slice %arg7[%c6_i32_32, %c0_i32_33] : memref<64x128xf32, #tpu.memory_space<vmem>> -> memref<1x128xf32, #tpu.memory_space<vmem>>
    %54 = tpu.memref_slice %arg8[%c6_i32] : memref<64x!tpu.dma_semaphore, #tpu.memory_space<semaphore_mem>> -> memref<1x!tpu.dma_semaphore, #tpu.memory_space<semaphore_mem>>
    %55 = tpu.memref_squeeze %54 : memref<1x!tpu.dma_semaphore, #tpu.memory_space<semaphore_mem>> -> memref<!tpu.dma_semaphore, #tpu.memory_space<semaphore_mem>>
    tpu.enqueue_dma source(%52 : memref<1x128xf32, #tpu.memory_space<any>>) target(%53 : memref<1x128xf32, #tpu.memory_space<vmem>>) target_semaphore(%55 : memref<!tpu.dma_semaphore, #tpu.memory_space<semaphore_mem>>)
    %c8_i32_34 = arith.constant 8 : i32
    %56 = arith.muli %arg0, %c8_i32_34 : i32
    %c0_i32_35 = arith.constant 0 : i32
    %57 = arith.addi %56, %c0_i32_35 : i32
    %58 = arith.index_cast %57 : i32 to index
    %c7 = arith.constant 7 : index
    %59 = memref.load %arg1[%58, %c7] : memref<8x8xi32, #tpu.memory_space<smem>>
    %c7_i32 = arith.constant 7 : i32
    %c0_i32_36 = arith.constant 0 : i32
    %60 = tpu.memref_slice %arg2[%59, %c0_i32_36] : memref<50x128xf32, #tpu.memory_space<any>> -> memref<1x128xf32, #tpu.memory_space<any>>
    %c7_i32_37 = arith.constant 7 : i32
    %c0_i32_38 = arith.constant 0 : i32
    %61 = tpu.memref_slice %arg7[%c7_i32_37, %c0_i32_38] : memref<64x128xf32, #tpu.memory_space<vmem>> -> memref<1x128xf32, #tpu.memory_space<vmem>>
    %62 = tpu.memref_slice %arg8[%c7_i32] : memref<64x!tpu.dma_semaphore, #tpu.memory_space<semaphore_mem>> -> memref<1x!tpu.dma_semaphore, #tpu.memory_space<semaphore_mem>>
    %63 = tpu.memref_squeeze %62 : memref<1x!tpu.dma_semaphore, #tpu.memory_space<semaphore_mem>> -> memref<!tpu.dma_semaphore, #tpu.memory_space<semaphore_mem>>
    tpu.enqueue_dma source(%60 : memref<1x128xf32, #tpu.memory_space<any>>) target(%61 : memref<1x128xf32, #tpu.memory_space<vmem>>) target_semaphore(%63 : memref<!tpu.dma_semaphore, #tpu.memory_space<semaphore_mem>>)
    %c8_i32_39 = arith.constant 8 : i32
    %64 = arith.muli %arg0, %c8_i32_39 : i32
    %c1_i32_40 = arith.constant 1 : i32
    %65 = arith.addi %64, %c1_i32_40 : i32
    %66 = arith.index_cast %65 : i32 to index
    %c0_41 = arith.constant 0 : index
    %67 = memref.load %arg1[%66, %c0_41] : memref<8x8xi32, #tpu.memory_space<smem>>
    %c8_i32_42 = arith.constant 8 : i32
    %c0_i32_43 = arith.constant 0 : i32
    %68 = tpu.memref_slice %arg2[%67, %c0_i32_43] : memref<50x128xf32, #tpu.memory_space<any>> -> memref<1x128xf32, #tpu.memory_space<any>>
    %c8_i32_44 = arith.constant 8 : i32
    %c0_i32_45 = arith.constant 0 : i32
    %69 = tpu.memref_slice %arg7[%c8_i32_44, %c0_i32_45] : memref<64x128xf32, #tpu.memory_space<vmem>> -> memref<1x128xf32, #tpu.memory_space<vmem>>
    %70 = tpu.memref_slice %arg8[%c8_i32_42] : memref<64x!tpu.dma_semaphore, #tpu.memory_space<semaphore_mem>> -> memref<1x!tpu.dma_semaphore, #tpu.memory_space<semaphore_mem>>
    %71 = tpu.memref_squeeze %70 : memref<1x!tpu.dma_semaphore, #tpu.memory_space<semaphore_mem>> -> memref<!tpu.dma_semaphore, #tpu.memory_space<semaphore_mem>>
    tpu.enqueue_dma source(%68 : memref<1x128xf32, #tpu.memory_space<any>>) target(%69 : memref<1x128xf32, #tpu.memory_space<vmem>>) target_semaphore(%71 : memref<!tpu.dma_semaphore, #tpu.memory_space<semaphore_mem>>)
    %c8_i32_46 = arith.constant 8 : i32
    %72 = arith.muli %arg0, %c8_i32_46 : i32
    %c1_i32_47 = arith.constant 1 : i32
    %73 = arith.addi %72, %c1_i32_47 : i32
    %74 = arith.index_cast %73 : i32 to index
    %c1_48 = arith.constant 1 : index
    %75 = memref.load %arg1[%74, %c1_48] : memref<8x8xi32, #tpu.memory_space<smem>>
    %c9_i32 = arith.constant 9 : i32
    %c0_i32_49 = arith.constant 0 : i32
    %76 = tpu.memref_slice %arg2[%75, %c0_i32_49] : memref<50x128xf32, #tpu.memory_space<any>> -> memref<1x128xf32, #tpu.memory_space<any>>
    %c9_i32_50 = arith.constant 9 : i32
    %c0_i32_51 = arith.constant 0 : i32
    %77 = tpu.memref_slice %arg7[%c9_i32_50, %c0_i32_51] : memref<64x128xf32, #tpu.memory_space<vmem>> -> memref<1x128xf32, #tpu.memory_space<vmem>>
    %78 = tpu.memref_slice %arg8[%c9_i32] : memref<64x!tpu.dma_semaphore, #tpu.memory_space<semaphore_mem>> -> memref<1x!tpu.dma_semaphore, #tpu.memory_space<semaphore_mem>>
    %79 = tpu.memref_squeeze %78 : memref<1x!tpu.dma_semaphore, #tpu.memory_space<semaphore_mem>> -> memref<!tpu.dma_semaphore, #tpu.memory_space<semaphore_mem>>
    tpu.enqueue_dma source(%76 : memref<1x128xf32, #tpu.memory_space<any>>) target(%77 : memref<1x128xf32, #tpu.memory_space<vmem>>) target_semaphore(%79 : memref<!tpu.dma_semaphore, #tpu.memory_space<semaphore_mem>>)
    %c8_i32_52 = arith.constant 8 : i32
    %80 = arith.muli %arg0, %c8_i32_52 : i32
    %c1_i32_53 = arith.constant 1 : i32
    %81 = arith.addi %80, %c1_i32_53 : i32
    %82 = arith.index_cast %81 : i32 to index
    %c2_54 = arith.constant 2 : index
    %83 = memref.load %arg1[%82, %c2_54] : memref<8x8xi32, #tpu.memory_space<smem>>
    %c10_i32 = arith.constant 10 : i32
    %c0_i32_55 = arith.constant 0 : i32
    %84 = tpu.memref_slice %arg2[%83, %c0_i32_55] : memref<50x128xf32, #tpu.memory_space<any>> -> memref<1x128xf32, #tpu.memory_space<any>>
    %c10_i32_56 = arith.constant 10 : i32
    %c0_i32_57 = arith.constant 0 : i32
    %85 = tpu.memref_slice %arg7[%c10_i32_56, %c0_i32_57] : memref<64x128xf32, #tpu.memory_space<vmem>> -> memref<1x128xf32, #tpu.memory_space<vmem>>
    %86 = tpu.memref_slice %arg8[%c10_i32] : memref<64x!tpu.dma_semaphore, #tpu.memory_space<semaphore_mem>> -> memref<1x!tpu.dma_semaphore, #tpu.memory_space<semaphore_mem>>
    %87 = tpu.memref_squeeze %86 : memref<1x!tpu.dma_semaphore, #tpu.memory_space<semaphore_mem>> -> memref<!tpu.dma_semaphore, #tpu.memory_space<semaphore_mem>>
    tpu.enqueue_dma source(%84 : memref<1x128xf32, #tpu.memory_space<any>>) target(%85 : memref<1x128xf32, #tpu.memory_space<vmem>>) target_semaphore(%87 : memref<!tpu.dma_semaphore, #tpu.memory_space<semaphore_mem>>)
    %c8_i32_58 = arith.constant 8 : i32
    %88 = arith.muli %arg0, %c8_i32_58 : i32
    %c1_i32_59 = arith.constant 1 : i32
    %89 = arith.addi %88, %c1_i32_59 : i32
    %90 = arith.index_cast %89 : i32 to index
    %c3_60 = arith.constant 3 : index
    %91 = memref.load %arg1[%90, %c3_60] : memref<8x8xi32, #tpu.memory_space<smem>>
    %c11_i32 = arith.constant 11 : i32
    %c0_i32_61 = arith.constant 0 : i32
    %92 = tpu.memref_slice %arg2[%91, %c0_i32_61] : memref<50x128xf32, #tpu.memory_space<any>> -> memref<1x128xf32, #tpu.memory_space<any>>
    %c11_i32_62 = arith.constant 11 : i32
    %c0_i32_63 = arith.constant 0 : i32
    %93 = tpu.memref_slice %arg7[%c11_i32_62, %c0_i32_63] : memref<64x128xf32, #tpu.memory_space<vmem>> -> memref<1x128xf32, #tpu.memory_space<vmem>>
    %94 = tpu.memref_slice %arg8[%c11_i32] : memref<64x!tpu.dma_semaphore, #tpu.memory_space<semaphore_mem>> -> memref<1x!tpu.dma_semaphore, #tpu.memory_space<semaphore_mem>>
    %95 = tpu.memref_squeeze %94 : memref<1x!tpu.dma_semaphore, #tpu.memory_space<semaphore_mem>> -> memref<!tpu.dma_semaphore, #tpu.memory_space<semaphore_mem>>
    tpu.enqueue_dma source(%92 : memref<1x128xf32, #tpu.memory_space<any>>) target(%93 : memref<1x128xf32, #tpu.memory_space<vmem>>) target_semaphore(%95 : memref<!tpu.dma_semaphore, #tpu.memory_space<semaphore_mem>>)
    %c8_i32_64 = arith.constant 8 : i32
    %96 = arith.muli %arg0, %c8_i32_64 : i32
    %c1_i32_65 = arith.constant 1 : i32
    %97 = arith.addi %96, %c1_i32_65 : i32
    %98 = arith.index_cast %97 : i32 to index
    %c4_66 = arith.constant 4 : index
    %99 = memref.load %arg1[%98, %c4_66] : memref<8x8xi32, #tpu.memory_space<smem>>
    %c12_i32 = arith.constant 12 : i32
    %c0_i32_67 = arith.constant 0 : i32
    %100 = tpu.memref_slice %arg2[%99, %c0_i32_67] : memref<50x128xf32, #tpu.memory_space<any>> -> memref<1x128xf32, #tpu.memory_space<any>>
    %c12_i32_68 = arith.constant 12 : i32
    %c0_i32_69 = arith.constant 0 : i32
    %101 = tpu.memref_slice %arg7[%c12_i32_68, %c0_i32_69] : memref<64x128xf32, #tpu.memory_space<vmem>> -> memref<1x128xf32, #tpu.memory_space<vmem>>
    %102 = tpu.memref_slice %arg8[%c12_i32] : memref<64x!tpu.dma_semaphore, #tpu.memory_space<semaphore_mem>> -> memref<1x!tpu.dma_semaphore, #tpu.memory_space<semaphore_mem>>
    %103 = tpu.memref_squeeze %102 : memref<1x!tpu.dma_semaphore, #tpu.memory_space<semaphore_mem>> -> memref<!tpu.dma_semaphore, #tpu.memory_space<semaphore_mem>>
    tpu.enqueue_dma source(%100 : memref<1x128xf32, #tpu.memory_space<any>>) target(%101 : memref<1x128xf32, #tpu.memory_space<vmem>>) target_semaphore(%103 : memref<!tpu.dma_semaphore, #tpu.memory_space<semaphore_mem>>)
    %c8_i32_70 = arith.constant 8 : i32
    %104 = arith.muli %arg0, %c8_i32_70 : i32
    %c1_i32_71 = arith.constant 1 : i32
    %105 = arith.addi %104, %c1_i32_71 : i32
    %106 = arith.index_cast %105 : i32 to index
    %c5_72 = arith.constant 5 : index
    %107 = memref.load %arg1[%106, %c5_72] : memref<8x8xi32, #tpu.memory_space<smem>>
    %c13_i32 = arith.constant 13 : i32
    %c0_i32_73 = arith.constant 0 : i32
    %108 = tpu.memref_slice %arg2[%107, %c0_i32_73] : memref<50x128xf32, #tpu.memory_space<any>> -> memref<1x128xf32, #tpu.memory_space<any>>
    %c13_i32_74 = arith.constant 13 : i32
    %c0_i32_75 = arith.constant 0 : i32
    %109 = tpu.memref_slice %arg7[%c13_i32_74, %c0_i32_75] : memref<64x128xf32, #tpu.memory_space<vmem>> -> memref<1x128xf32, #tpu.memory_space<vmem>>
    %110 = tpu.memref_slice %arg8[%c13_i32] : memref<64x!tpu.dma_semaphore, #tpu.memory_space<semaphore_mem>> -> memref<1x!tpu.dma_semaphore, #tpu.memory_space<semaphore_mem>>
    %111 = tpu.memref_squeeze %110 : memref<1x!tpu.dma_semaphore, #tpu.memory_space<semaphore_mem>> -> memref<!tpu.dma_semaphore, #tpu.memory_space<semaphore_mem>>
    tpu.enqueue_dma source(%108 : memref<1x128xf32, #tpu.memory_space<any>>) target(%109 : memref<1x128xf32, #tpu.memory_space<vmem>>) target_semaphore(%111 : memref<!tpu.dma_semaphore, #tpu.memory_space<semaphore_mem>>)
    %c8_i32_76 = arith.constant 8 : i32
    %112 = arith.muli %arg0, %c8_i32_76 : i32
    %c1_i32_77 = arith.constant 1 : i32
    %113 = arith.addi %112, %c1_i32_77 : i32
    %114 = arith.index_cast %113 : i32 to index
    %c6_78 = arith.constant 6 : index
    %115 = memref.load %arg1[%114, %c6_78] : memref<8x8xi32, #tpu.memory_space<smem>>
    %c14_i32 = arith.constant 14 : i32
    %c0_i32_79 = arith.constant 0 : i32
    %116 = tpu.memref_slice %arg2[%115, %c0_i32_79] : memref<50x128xf32, #tpu.memory_space<any>> -> memref<1x128xf32, #tpu.memory_space<any>>
    %c14_i32_80 = arith.constant 14 : i32
    %c0_i32_81 = arith.constant 0 : i32
    %117 = tpu.memref_slice %arg7[%c14_i32_80, %c0_i32_81] : memref<64x128xf32, #tpu.memory_space<vmem>> -> memref<1x128xf32, #tpu.memory_space<vmem>>
    %118 = tpu.memref_slice %arg8[%c14_i32] : memref<64x!tpu.dma_semaphore, #tpu.memory_space<semaphore_mem>> -> memref<1x!tpu.dma_semaphore, #tpu.memory_space<semaphore_mem>>
    %119 = tpu.memref_squeeze %118 : memref<1x!tpu.dma_semaphore, #tpu.memory_space<semaphore_mem>> -> memref<!tpu.dma_semaphore, #tpu.memory_space<semaphore_mem>>
    tpu.enqueue_dma source(%116 : memref<1x128xf32, #tpu.memory_space<any>>) target(%117 : memref<1x128xf32, #tpu.memory_space<vmem>>) target_semaphore(%119 : memref<!tpu.dma_semaphore, #tpu.memory_space<semaphore_mem>>)
    %c8_i32_82 = arith.constant 8 : i32
    %120 = arith.muli %arg0, %c8_i32_82 : i32
    %c1_i32_83 = arith.constant 1 : i32
    %121 = arith.addi %120, %c1_i32_83 : i32
    %122 = arith.index_cast %121 : i32 to index
    %c7_84 = arith.constant 7 : index
    %123 = memref.load %arg1[%122, %c7_84] : memref<8x8xi32, #tpu.memory_space<smem>>
    %c15_i32 = arith.constant 15 : i32
    %c0_i32_85 = arith.constant 0 : i32
    %124 = tpu.memref_slice %arg2[%123, %c0_i32_85] : memref<50x128xf32, #tpu.memory_space<any>> -> memref<1x128xf32, #tpu.memory_space<any>>
    %c15_i32_86 = arith.constant 15 : i32
    %c0_i32_87 = arith.constant 0 : i32
    %125 = tpu.memref_slice %arg7[%c15_i32_86, %c0_i32_87] : memref<64x128xf32, #tpu.memory_space<vmem>> -> memref<1x128xf32, #tpu.memory_space<vmem>>
    %126 = tpu.memref_slice %arg8[%c15_i32] : memref<64x!tpu.dma_semaphore, #tpu.memory_space<semaphore_mem>> -> memref<1x!tpu.dma_semaphore, #tpu.memory_space<semaphore_mem>>
    %127 = tpu.memref_squeeze %126 : memref<1x!tpu.dma_semaphore, #tpu.memory_space<semaphore_mem>> -> memref<!tpu.dma_semaphore, #tpu.memory_space<semaphore_mem>>
    tpu.enqueue_dma source(%124 : memref<1x128xf32, #tpu.memory_space<any>>) target(%125 : memref<1x128xf32, #tpu.memory_space<vmem>>) target_semaphore(%127 : memref<!tpu.dma_semaphore, #tpu.memory_space<semaphore_mem>>)
    %c8_i32_88 = arith.constant 8 : i32
    %128 = arith.muli %arg0, %c8_i32_88 : i32
    %c2_i32_89 = arith.constant 2 : i32
    %129 = arith.addi %128, %c2_i32_89 : i32
    %130 = arith.index_cast %129 : i32 to index
    %c0_90 = arith.constant 0 : index
    %131 = memref.load %arg1[%130, %c0_90] : memref<8x8xi32, #tpu.memory_space<smem>>
    %c16_i32 = arith.constant 16 : i32
    %c0_i32_91 = arith.constant 0 : i32
    %132 = tpu.memref_slice %arg2[%131, %c0_i32_91] : memref<50x128xf32, #tpu.memory_space<any>> -> memref<1x128xf32, #tpu.memory_space<any>>
    %c16_i32_92 = arith.constant 16 : i32
    %c0_i32_93 = arith.constant 0 : i32
    %133 = tpu.memref_slice %arg7[%c16_i32_92, %c0_i32_93] : memref<64x128xf32, #tpu.memory_space<vmem>> -> memref<1x128xf32, #tpu.memory_space<vmem>>
    %134 = tpu.memref_slice %arg8[%c16_i32] : memref<64x!tpu.dma_semaphore, #tpu.memory_space<semaphore_mem>> -> memref<1x!tpu.dma_semaphore, #tpu.memory_space<semaphore_mem>>
    %135 = tpu.memref_squeeze %134 : memref<1x!tpu.dma_semaphore, #tpu.memory_space<semaphore_mem>> -> memref<!tpu.dma_semaphore, #tpu.memory_space<semaphore_mem>>
    tpu.enqueue_dma source(%132 : memref<1x128xf32, #tpu.memory_space<any>>) target(%133 : memref<1x128xf32, #tpu.memory_space<vmem>>) target_semaphore(%135 : memref<!tpu.dma_semaphore, #tpu.memory_space<semaphore_mem>>)
    %c8_i32_94 = arith.constant 8 : i32
    %136 = arith.muli %arg0, %c8_i32_94 : i32
    %c2_i32_95 = arith.constant 2 : i32
    %137 = arith.addi %136, %c2_i32_95 : i32
    %138 = arith.index_cast %137 : i32 to index
    %c1_96 = arith.constant 1 : index
    %139 = memref.load %arg1[%138, %c1_96] : memref<8x8xi32, #tpu.memory_space<smem>>
    %c17_i32 = arith.constant 17 : i32
    %c0_i32_97 = arith.constant 0 : i32
    %140 = tpu.memref_slice %arg2[%139, %c0_i32_97] : memref<50x128xf32, #tpu.memory_space<any>> -> memref<1x128xf32, #tpu.memory_space<any>>
    %c17_i32_98 = arith.constant 17 : i32
    %c0_i32_99 = arith.constant 0 : i32
    %141 = tpu.memref_slice %arg7[%c17_i32_98, %c0_i32_99] : memref<64x128xf32, #tpu.memory_space<vmem>> -> memref<1x128xf32, #tpu.memory_space<vmem>>
    %142 = tpu.memref_slice %arg8[%c17_i32] : memref<64x!tpu.dma_semaphore, #tpu.memory_space<semaphore_mem>> -> memref<1x!tpu.dma_semaphore, #tpu.memory_space<semaphore_mem>>
    %143 = tpu.memref_squeeze %142 : memref<1x!tpu.dma_semaphore, #tpu.memory_space<semaphore_mem>> -> memref<!tpu.dma_semaphore, #tpu.memory_space<semaphore_mem>>
    tpu.enqueue_dma source(%140 : memref<1x128xf32, #tpu.memory_space<any>>) target(%141 : memref<1x128xf32, #tpu.memory_space<vmem>>) target_semaphore(%143 : memref<!tpu.dma_semaphore, #tpu.memory_space<semaphore_mem>>)
    %c8_i32_100 = arith.constant 8 : i32
    %144 = arith.muli %arg0, %c8_i32_100 : i32
    %c2_i32_101 = arith.constant 2 : i32
    %145 = arith.addi %144, %c2_i32_101 : i32
    %146 = arith.index_cast %145 : i32 to index
    %c2_102 = arith.constant 2 : index
    %147 = memref.load %arg1[%146, %c2_102] : memref<8x8xi32, #tpu.memory_space<smem>>
    %c18_i32 = arith.constant 18 : i32
    %c0_i32_103 = arith.constant 0 : i32
    %148 = tpu.memref_slice %arg2[%147, %c0_i32_103] : memref<50x128xf32, #tpu.memory_space<any>> -> memref<1x128xf32, #tpu.memory_space<any>>
    %c18_i32_104 = arith.constant 18 : i32
    %c0_i32_105 = arith.constant 0 : i32
    %149 = tpu.memref_slice %arg7[%c18_i32_104, %c0_i32_105] : memref<64x128xf32, #tpu.memory_space<vmem>> -> memref<1x128xf32, #tpu.memory_space<vmem>>
    %150 = tpu.memref_slice %arg8[%c18_i32] : memref<64x!tpu.dma_semaphore, #tpu.memory_space<semaphore_mem>> -> memref<1x!tpu.dma_semaphore, #tpu.memory_space<semaphore_mem>>
    %151 = tpu.memref_squeeze %150 : memref<1x!tpu.dma_semaphore, #tpu.memory_space<semaphore_mem>> -> memref<!tpu.dma_semaphore, #tpu.memory_space<semaphore_mem>>
    tpu.enqueue_dma source(%148 : memref<1x128xf32, #tpu.memory_space<any>>) target(%149 : memref<1x128xf32, #tpu.memory_space<vmem>>) target_semaphore(%151 : memref<!tpu.dma_semaphore, #tpu.memory_space<semaphore_mem>>)
    %c8_i32_106 = arith.constant 8 : i32
    %152 = arith.muli %arg0, %c8_i32_106 : i32
    %c2_i32_107 = arith.constant 2 : i32
    %153 = arith.addi %152, %c2_i32_107 : i32
    %154 = arith.index_cast %153 : i32 to index
    %c3_108 = arith.constant 3 : index
    %155 = memref.load %arg1[%154, %c3_108] : memref<8x8xi32, #tpu.memory_space<smem>>
    %c19_i32 = arith.constant 19 : i32
    %c0_i32_109 = arith.constant 0 : i32
    %156 = tpu.memref_slice %arg2[%155, %c0_i32_109] : memref<50x128xf32, #tpu.memory_space<any>> -> memref<1x128xf32, #tpu.memory_space<any>>
    %c19_i32_110 = arith.constant 19 : i32
    %c0_i32_111 = arith.constant 0 : i32
    %157 = tpu.memref_slice %arg7[%c19_i32_110, %c0_i32_111] : memref<64x128xf32, #tpu.memory_space<vmem>> -> memref<1x128xf32, #tpu.memory_space<vmem>>
    %158 = tpu.memref_slice %arg8[%c19_i32] : memref<64x!tpu.dma_semaphore, #tpu.memory_space<semaphore_mem>> -> memref<1x!tpu.dma_semaphore, #tpu.memory_space<semaphore_mem>>
    %159 = tpu.memref_squeeze %158 : memref<1x!tpu.dma_semaphore, #tpu.memory_space<semaphore_mem>> -> memref<!tpu.dma_semaphore, #tpu.memory_space<semaphore_mem>>
    tpu.enqueue_dma source(%156 : memref<1x128xf32, #tpu.memory_space<any>>) target(%157 : memref<1x128xf32, #tpu.memory_space<vmem>>) target_semaphore(%159 : memref<!tpu.dma_semaphore, #tpu.memory_space<semaphore_mem>>)
    %c8_i32_112 = arith.constant 8 : i32
    %160 = arith.muli %arg0, %c8_i32_112 : i32
    %c2_i32_113 = arith.constant 2 : i32
    %161 = arith.addi %160, %c2_i32_113 : i32
    %162 = arith.index_cast %161 : i32 to index
    %c4_114 = arith.constant 4 : index
    %163 = memref.load %arg1[%162, %c4_114] : memref<8x8xi32, #tpu.memory_space<smem>>
    %c20_i32 = arith.constant 20 : i32
    %c0_i32_115 = arith.constant 0 : i32
    %164 = tpu.memref_slice %arg2[%163, %c0_i32_115] : memref<50x128xf32, #tpu.memory_space<any>> -> memref<1x128xf32, #tpu.memory_space<any>>
    %c20_i32_116 = arith.constant 20 : i32
    %c0_i32_117 = arith.constant 0 : i32
    %165 = tpu.memref_slice %arg7[%c20_i32_116, %c0_i32_117] : memref<64x128xf32, #tpu.memory_space<vmem>> -> memref<1x128xf32, #tpu.memory_space<vmem>>
    %166 = tpu.memref_slice %arg8[%c20_i32] : memref<64x!tpu.dma_semaphore, #tpu.memory_space<semaphore_mem>> -> memref<1x!tpu.dma_semaphore, #tpu.memory_space<semaphore_mem>>
    %167 = tpu.memref_squeeze %166 : memref<1x!tpu.dma_semaphore, #tpu.memory_space<semaphore_mem>> -> memref<!tpu.dma_semaphore, #tpu.memory_space<semaphore_mem>>
    tpu.enqueue_dma source(%164 : memref<1x128xf32, #tpu.memory_space<any>>) target(%165 : memref<1x128xf32, #tpu.memory_space<vmem>>) target_semaphore(%167 : memref<!tpu.dma_semaphore, #tpu.memory_space<semaphore_mem>>)
    %c8_i32_118 = arith.constant 8 : i32
    %168 = arith.muli %arg0, %c8_i32_118 : i32
    %c2_i32_119 = arith.constant 2 : i32
    %169 = arith.addi %168, %c2_i32_119 : i32
    %170 = arith.index_cast %169 : i32 to index
    %c5_120 = arith.constant 5 : index
    %171 = memref.load %arg1[%170, %c5_120] : memref<8x8xi32, #tpu.memory_space<smem>>
    %c21_i32 = arith.constant 21 : i32
    %c0_i32_121 = arith.constant 0 : i32
    %172 = tpu.memref_slice %arg2[%171, %c0_i32_121] : memref<50x128xf32, #tpu.memory_space<any>> -> memref<1x128xf32, #tpu.memory_space<any>>
    %c21_i32_122 = arith.constant 21 : i32
    %c0_i32_123 = arith.constant 0 : i32
    %173 = tpu.memref_slice %arg7[%c21_i32_122, %c0_i32_123] : memref<64x128xf32, #tpu.memory_space<vmem>> -> memref<1x128xf32, #tpu.memory_space<vmem>>
    %174 = tpu.memref_slice %arg8[%c21_i32] : memref<64x!tpu.dma_semaphore, #tpu.memory_space<semaphore_mem>> -> memref<1x!tpu.dma_semaphore, #tpu.memory_space<semaphore_mem>>
    %175 = tpu.memref_squeeze %174 : memref<1x!tpu.dma_semaphore, #tpu.memory_space<semaphore_mem>> -> memref<!tpu.dma_semaphore, #tpu.memory_space<semaphore_mem>>
    tpu.enqueue_dma source(%172 : memref<1x128xf32, #tpu.memory_space<any>>) target(%173 : memref<1x128xf32, #tpu.memory_space<vmem>>) target_semaphore(%175 : memref<!tpu.dma_semaphore, #tpu.memory_space<semaphore_mem>>)
    %c8_i32_124 = arith.constant 8 : i32
    %176 = arith.muli %arg0, %c8_i32_124 : i32
    %c2_i32_125 = arith.constant 2 : i32
    %177 = arith.addi %176, %c2_i32_125 : i32
    %178 = arith.index_cast %177 : i32 to index
    %c6_126 = arith.constant 6 : index
    %179 = memref.load %arg1[%178, %c6_126] : memref<8x8xi32, #tpu.memory_space<smem>>
    %c22_i32 = arith.constant 22 : i32
    %c0_i32_127 = arith.constant 0 : i32
    %180 = tpu.memref_slice %arg2[%179, %c0_i32_127] : memref<50x128xf32, #tpu.memory_space<any>> -> memref<1x128xf32, #tpu.memory_space<any>>
    %c22_i32_128 = arith.constant 22 : i32
    %c0_i32_129 = arith.constant 0 : i32
    %181 = tpu.memref_slice %arg7[%c22_i32_128, %c0_i32_129] : memref<64x128xf32, #tpu.memory_space<vmem>> -> memref<1x128xf32, #tpu.memory_space<vmem>>
    %182 = tpu.memref_slice %arg8[%c22_i32] : memref<64x!tpu.dma_semaphore, #tpu.memory_space<semaphore_mem>> -> memref<1x!tpu.dma_semaphore, #tpu.memory_space<semaphore_mem>>
    %183 = tpu.memref_squeeze %182 : memref<1x!tpu.dma_semaphore, #tpu.memory_space<semaphore_mem>> -> memref<!tpu.dma_semaphore, #tpu.memory_space<semaphore_mem>>
    tpu.enqueue_dma source(%180 : memref<1x128xf32, #tpu.memory_space<any>>) target(%181 : memref<1x128xf32, #tpu.memory_space<vmem>>) target_semaphore(%183 : memref<!tpu.dma_semaphore, #tpu.memory_space<semaphore_mem>>)
    %c8_i32_130 = arith.constant 8 : i32
    %184 = arith.muli %arg0, %c8_i32_130 : i32
    %c2_i32_131 = arith.constant 2 : i32
    %185 = arith.addi %184, %c2_i32_131 : i32
    %186 = arith.index_cast %185 : i32 to index
    %c7_132 = arith.constant 7 : index
    %187 = memref.load %arg1[%186, %c7_132] : memref<8x8xi32, #tpu.memory_space<smem>>
    %c23_i32 = arith.constant 23 : i32
    %c0_i32_133 = arith.constant 0 : i32
    %188 = tpu.memref_slice %arg2[%187, %c0_i32_133] : memref<50x128xf32, #tpu.memory_space<any>> -> memref<1x128xf32, #tpu.memory_space<any>>
    %c23_i32_134 = arith.constant 23 : i32
    %c0_i32_135 = arith.constant 0 : i32
    %189 = tpu.memref_slice %arg7[%c23_i32_134, %c0_i32_135] : memref<64x128xf32, #tpu.memory_space<vmem>> -> memref<1x128xf32, #tpu.memory_space<vmem>>
    %190 = tpu.memref_slice %arg8[%c23_i32] : memref<64x!tpu.dma_semaphore, #tpu.memory_space<semaphore_mem>> -> memref<1x!tpu.dma_semaphore, #tpu.memory_space<semaphore_mem>>
    %191 = tpu.memref_squeeze %190 : memref<1x!tpu.dma_semaphore, #tpu.memory_space<semaphore_mem>> -> memref<!tpu.dma_semaphore, #tpu.memory_space<semaphore_mem>>
    tpu.enqueue_dma source(%188 : memref<1x128xf32, #tpu.memory_space<any>>) target(%189 : memref<1x128xf32, #tpu.memory_space<vmem>>) target_semaphore(%191 : memref<!tpu.dma_semaphore, #tpu.memory_space<semaphore_mem>>)
    %c8_i32_136 = arith.constant 8 : i32
    %192 = arith.muli %arg0, %c8_i32_136 : i32
    %c3_i32_137 = arith.constant 3 : i32
    %193 = arith.addi %192, %c3_i32_137 : i32
    %194 = arith.index_cast %193 : i32 to index
    %c0_138 = arith.constant 0 : index
    %195 = memref.load %arg1[%194, %c0_138] : memref<8x8xi32, #tpu.memory_space<smem>>
    %c24_i32 = arith.constant 24 : i32
    %c0_i32_139 = arith.constant 0 : i32
    %196 = tpu.memref_slice %arg2[%195, %c0_i32_139] : memref<50x128xf32, #tpu.memory_space<any>> -> memref<1x128xf32, #tpu.memory_space<any>>
    %c24_i32_140 = arith.constant 24 : i32
    %c0_i32_141 = arith.constant 0 : i32
    %197 = tpu.memref_slice %arg7[%c24_i32_140, %c0_i32_141] : memref<64x128xf32, #tpu.memory_space<vmem>> -> memref<1x128xf32, #tpu.memory_space<vmem>>
    %198 = tpu.memref_slice %arg8[%c24_i32] : memref<64x!tpu.dma_semaphore, #tpu.memory_space<semaphore_mem>> -> memref<1x!tpu.dma_semaphore, #tpu.memory_space<semaphore_mem>>
    %199 = tpu.memref_squeeze %198 : memref<1x!tpu.dma_semaphore, #tpu.memory_space<semaphore_mem>> -> memref<!tpu.dma_semaphore, #tpu.memory_space<semaphore_mem>>
    tpu.enqueue_dma source(%196 : memref<1x128xf32, #tpu.memory_space<any>>) target(%197 : memref<1x128xf32, #tpu.memory_space<vmem>>) target_semaphore(%199 : memref<!tpu.dma_semaphore, #tpu.memory_space<semaphore_mem>>)
    %c8_i32_142 = arith.constant 8 : i32
    %200 = arith.muli %arg0, %c8_i32_142 : i32
    %c3_i32_143 = arith.constant 3 : i32
    %201 = arith.addi %200, %c3_i32_143 : i32
    %202 = arith.index_cast %201 : i32 to index
    %c1_144 = arith.constant 1 : index
    %203 = memref.load %arg1[%202, %c1_144] : memref<8x8xi32, #tpu.memory_space<smem>>
    %c25_i32 = arith.constant 25 : i32
    %c0_i32_145 = arith.constant 0 : i32
    %204 = tpu.memref_slice %arg2[%203, %c0_i32_145] : memref<50x128xf32, #tpu.memory_space<any>> -> memref<1x128xf32, #tpu.memory_space<any>>
    %c25_i32_146 = arith.constant 25 : i32
    %c0_i32_147 = arith.constant 0 : i32
    %205 = tpu.memref_slice %arg7[%c25_i32_146, %c0_i32_147] : memref<64x128xf32, #tpu.memory_space<vmem>> -> memref<1x128xf32, #tpu.memory_space<vmem>>
    %206 = tpu.memref_slice %arg8[%c25_i32] : memref<64x!tpu.dma_semaphore, #tpu.memory_space<semaphore_mem>> -> memref<1x!tpu.dma_semaphore, #tpu.memory_space<semaphore_mem>>
    %207 = tpu.memref_squeeze %206 : memref<1x!tpu.dma_semaphore, #tpu.memory_space<semaphore_mem>> -> memref<!tpu.dma_semaphore, #tpu.memory_space<semaphore_mem>>
    tpu.enqueue_dma source(%204 : memref<1x128xf32, #tpu.memory_space<any>>) target(%205 : memref<1x128xf32, #tpu.memory_space<vmem>>) target_semaphore(%207 : memref<!tpu.dma_semaphore, #tpu.memory_space<semaphore_mem>>)
    %c8_i32_148 = arith.constant 8 : i32
    %208 = arith.muli %arg0, %c8_i32_148 : i32
    %c3_i32_149 = arith.constant 3 : i32
    %209 = arith.addi %208, %c3_i32_149 : i32
    %210 = arith.index_cast %209 : i32 to index
    %c2_150 = arith.constant 2 : index
    %211 = memref.load %arg1[%210, %c2_150] : memref<8x8xi32, #tpu.memory_space<smem>>
    %c26_i32 = arith.constant 26 : i32
    %c0_i32_151 = arith.constant 0 : i32
    %212 = tpu.memref_slice %arg2[%211, %c0_i32_151] : memref<50x128xf32, #tpu.memory_space<any>> -> memref<1x128xf32, #tpu.memory_space<any>>
    %c26_i32_152 = arith.constant 26 : i32
    %c0_i32_153 = arith.constant 0 : i32
    %213 = tpu.memref_slice %arg7[%c26_i32_152, %c0_i32_153] : memref<64x128xf32, #tpu.memory_space<vmem>> -> memref<1x128xf32, #tpu.memory_space<vmem>>
    %214 = tpu.memref_slice %arg8[%c26_i32] : memref<64x!tpu.dma_semaphore, #tpu.memory_space<semaphore_mem>> -> memref<1x!tpu.dma_semaphore, #tpu.memory_space<semaphore_mem>>
    %215 = tpu.memref_squeeze %214 : memref<1x!tpu.dma_semaphore, #tpu.memory_space<semaphore_mem>> -> memref<!tpu.dma_semaphore, #tpu.memory_space<semaphore_mem>>
    tpu.enqueue_dma source(%212 : memref<1x128xf32, #tpu.memory_space<any>>) target(%213 : memref<1x128xf32, #tpu.memory_space<vmem>>) target_semaphore(%215 : memref<!tpu.dma_semaphore, #tpu.memory_space<semaphore_mem>>)
    %c8_i32_154 = arith.constant 8 : i32
    %216 = arith.muli %arg0, %c8_i32_154 : i32
    %c3_i32_155 = arith.constant 3 : i32
    %217 = arith.addi %216, %c3_i32_155 : i32
    %218 = arith.index_cast %217 : i32 to index
    %c3_156 = arith.constant 3 : index
    %219 = memref.load %arg1[%218, %c3_156] : memref<8x8xi32, #tpu.memory_space<smem>>
    %c27_i32 = arith.constant 27 : i32
    %c0_i32_157 = arith.constant 0 : i32
    %220 = tpu.memref_slice %arg2[%219, %c0_i32_157] : memref<50x128xf32, #tpu.memory_space<any>> -> memref<1x128xf32, #tpu.memory_space<any>>
    %c27_i32_158 = arith.constant 27 : i32
    %c0_i32_159 = arith.constant 0 : i32
    %221 = tpu.memref_slice %arg7[%c27_i32_158, %c0_i32_159] : memref<64x128xf32, #tpu.memory_space<vmem>> -> memref<1x128xf32, #tpu.memory_space<vmem>>
    %222 = tpu.memref_slice %arg8[%c27_i32] : memref<64x!tpu.dma_semaphore, #tpu.memory_space<semaphore_mem>> -> memref<1x!tpu.dma_semaphore, #tpu.memory_space<semaphore_mem>>
    %223 = tpu.memref_squeeze %222 : memref<1x!tpu.dma_semaphore, #tpu.memory_space<semaphore_mem>> -> memref<!tpu.dma_semaphore, #tpu.memory_space<semaphore_mem>>
    tpu.enqueue_dma source(%220 : memref<1x128xf32, #tpu.memory_space<any>>) target(%221 : memref<1x128xf32, #tpu.memory_space<vmem>>) target_semaphore(%223 : memref<!tpu.dma_semaphore, #tpu.memory_space<semaphore_mem>>)
    %c8_i32_160 = arith.constant 8 : i32
    %224 = arith.muli %arg0, %c8_i32_160 : i32
    %c3_i32_161 = arith.constant 3 : i32
    %225 = arith.addi %224, %c3_i32_161 : i32
    %226 = arith.index_cast %225 : i32 to index
    %c4_162 = arith.constant 4 : index
    %227 = memref.load %arg1[%226, %c4_162] : memref<8x8xi32, #tpu.memory_space<smem>>
    %c28_i32 = arith.constant 28 : i32
    %c0_i32_163 = arith.constant 0 : i32
    %228 = tpu.memref_slice %arg2[%227, %c0_i32_163] : memref<50x128xf32, #tpu.memory_space<any>> -> memref<1x128xf32, #tpu.memory_space<any>>
    %c28_i32_164 = arith.constant 28 : i32
    %c0_i32_165 = arith.constant 0 : i32
    %229 = tpu.memref_slice %arg7[%c28_i32_164, %c0_i32_165] : memref<64x128xf32, #tpu.memory_space<vmem>> -> memref<1x128xf32, #tpu.memory_space<vmem>>
    %230 = tpu.memref_slice %arg8[%c28_i32] : memref<64x!tpu.dma_semaphore, #tpu.memory_space<semaphore_mem>> -> memref<1x!tpu.dma_semaphore, #tpu.memory_space<semaphore_mem>>
    %231 = tpu.memref_squeeze %230 : memref<1x!tpu.dma_semaphore, #tpu.memory_space<semaphore_mem>> -> memref<!tpu.dma_semaphore, #tpu.memory_space<semaphore_mem>>
    tpu.enqueue_dma source(%228 : memref<1x128xf32, #tpu.memory_space<any>>) target(%229 : memref<1x128xf32, #tpu.memory_space<vmem>>) target_semaphore(%231 : memref<!tpu.dma_semaphore, #tpu.memory_space<semaphore_mem>>)
    %c8_i32_166 = arith.constant 8 : i32
    %232 = arith.muli %arg0, %c8_i32_166 : i32
    %c3_i32_167 = arith.constant 3 : i32
    %233 = arith.addi %232, %c3_i32_167 : i32
    %234 = arith.index_cast %233 : i32 to index
    %c5_168 = arith.constant 5 : index
    %235 = memref.load %arg1[%234, %c5_168] : memref<8x8xi32, #tpu.memory_space<smem>>
    %c29_i32 = arith.constant 29 : i32
    %c0_i32_169 = arith.constant 0 : i32
    %236 = tpu.memref_slice %arg2[%235, %c0_i32_169] : memref<50x128xf32, #tpu.memory_space<any>> -> memref<1x128xf32, #tpu.memory_space<any>>
    %c29_i32_170 = arith.constant 29 : i32
    %c0_i32_171 = arith.constant 0 : i32
    %237 = tpu.memref_slice %arg7[%c29_i32_170, %c0_i32_171] : memref<64x128xf32, #tpu.memory_space<vmem>> -> memref<1x128xf32, #tpu.memory_space<vmem>>
    %238 = tpu.memref_slice %arg8[%c29_i32] : memref<64x!tpu.dma_semaphore, #tpu.memory_space<semaphore_mem>> -> memref<1x!tpu.dma_semaphore, #tpu.memory_space<semaphore_mem>>
    %239 = tpu.memref_squeeze %238 : memref<1x!tpu.dma_semaphore, #tpu.memory_space<semaphore_mem>> -> memref<!tpu.dma_semaphore, #tpu.memory_space<semaphore_mem>>
    tpu.enqueue_dma source(%236 : memref<1x128xf32, #tpu.memory_space<any>>) target(%237 : memref<1x128xf32, #tpu.memory_space<vmem>>) target_semaphore(%239 : memref<!tpu.dma_semaphore, #tpu.memory_space<semaphore_mem>>)
    %c8_i32_172 = arith.constant 8 : i32
    %240 = arith.muli %arg0, %c8_i32_172 : i32
    %c3_i32_173 = arith.constant 3 : i32
    %241 = arith.addi %240, %c3_i32_173 : i32
    %242 = arith.index_cast %241 : i32 to index
    %c6_174 = arith.constant 6 : index
    %243 = memref.load %arg1[%242, %c6_174] : memref<8x8xi32, #tpu.memory_space<smem>>
    %c30_i32 = arith.constant 30 : i32
    %c0_i32_175 = arith.constant 0 : i32
    %244 = tpu.memref_slice %arg2[%243, %c0_i32_175] : memref<50x128xf32, #tpu.memory_space<any>> -> memref<1x128xf32, #tpu.memory_space<any>>
    %c30_i32_176 = arith.constant 30 : i32
    %c0_i32_177 = arith.constant 0 : i32
    %245 = tpu.memref_slice %arg7[%c30_i32_176, %c0_i32_177] : memref<64x128xf32, #tpu.memory_space<vmem>> -> memref<1x128xf32, #tpu.memory_space<vmem>>
    %246 = tpu.memref_slice %arg8[%c30_i32] : memref<64x!tpu.dma_semaphore, #tpu.memory_space<semaphore_mem>> -> memref<1x!tpu.dma_semaphore, #tpu.memory_space<semaphore_mem>>
    %247 = tpu.memref_squeeze %246 : memref<1x!tpu.dma_semaphore, #tpu.memory_space<semaphore_mem>> -> memref<!tpu.dma_semaphore, #tpu.memory_space<semaphore_mem>>
    tpu.enqueue_dma source(%244 : memref<1x128xf32, #tpu.memory_space<any>>) target(%245 : memref<1x128xf32, #tpu.memory_space<vmem>>) target_semaphore(%247 : memref<!tpu.dma_semaphore, #tpu.memory_space<semaphore_mem>>)
    %c8_i32_178 = arith.constant 8 : i32
    %248 = arith.muli %arg0, %c8_i32_178 : i32
    %c3_i32_179 = arith.constant 3 : i32
    %249 = arith.addi %248, %c3_i32_179 : i32
    %250 = arith.index_cast %249 : i32 to index
    %c7_180 = arith.constant 7 : index
    %251 = memref.load %arg1[%250, %c7_180] : memref<8x8xi32, #tpu.memory_space<smem>>
    %c31_i32 = arith.constant 31 : i32
    %c0_i32_181 = arith.constant 0 : i32
    %252 = tpu.memref_slice %arg2[%251, %c0_i32_181] : memref<50x128xf32, #tpu.memory_space<any>> -> memref<1x128xf32, #tpu.memory_space<any>>
    %c31_i32_182 = arith.constant 31 : i32
    %c0_i32_183 = arith.constant 0 : i32
    %253 = tpu.memref_slice %arg7[%c31_i32_182, %c0_i32_183] : memref<64x128xf32, #tpu.memory_space<vmem>> -> memref<1x128xf32, #tpu.memory_space<vmem>>
    %254 = tpu.memref_slice %arg8[%c31_i32] : memref<64x!tpu.dma_semaphore, #tpu.memory_space<semaphore_mem>> -> memref<1x!tpu.dma_semaphore, #tpu.memory_space<semaphore_mem>>
    %255 = tpu.memref_squeeze %254 : memref<1x!tpu.dma_semaphore, #tpu.memory_space<semaphore_mem>> -> memref<!tpu.dma_semaphore, #tpu.memory_space<semaphore_mem>>
    tpu.enqueue_dma source(%252 : memref<1x128xf32, #tpu.memory_space<any>>) target(%253 : memref<1x128xf32, #tpu.memory_space<vmem>>) target_semaphore(%255 : memref<!tpu.dma_semaphore, #tpu.memory_space<semaphore_mem>>)
    %c8_i32_184 = arith.constant 8 : i32
    %256 = arith.muli %arg0, %c8_i32_184 : i32
    %c4_i32_185 = arith.constant 4 : i32
    %257 = arith.addi %256, %c4_i32_185 : i32
    %258 = arith.index_cast %257 : i32 to index
    %c0_186 = arith.constant 0 : index
    %259 = memref.load %arg1[%258, %c0_186] : memref<8x8xi32, #tpu.memory_space<smem>>
    %c32_i32 = arith.constant 32 : i32
    %c0_i32_187 = arith.constant 0 : i32
    %260 = tpu.memref_slice %arg2[%259, %c0_i32_187] : memref<50x128xf32, #tpu.memory_space<any>> -> memref<1x128xf32, #tpu.memory_space<any>>
    %c32_i32_188 = arith.constant 32 : i32
    %c0_i32_189 = arith.constant 0 : i32
    %261 = tpu.memref_slice %arg7[%c32_i32_188, %c0_i32_189] : memref<64x128xf32, #tpu.memory_space<vmem>> -> memref<1x128xf32, #tpu.memory_space<vmem>>
    %262 = tpu.memref_slice %arg8[%c32_i32] : memref<64x!tpu.dma_semaphore, #tpu.memory_space<semaphore_mem>> -> memref<1x!tpu.dma_semaphore, #tpu.memory_space<semaphore_mem>>
    %263 = tpu.memref_squeeze %262 : memref<1x!tpu.dma_semaphore, #tpu.memory_space<semaphore_mem>> -> memref<!tpu.dma_semaphore, #tpu.memory_space<semaphore_mem>>
    tpu.enqueue_dma source(%260 : memref<1x128xf32, #tpu.memory_space<any>>) target(%261 : memref<1x128xf32, #tpu.memory_space<vmem>>) target_semaphore(%263 : memref<!tpu.dma_semaphore, #tpu.memory_space<semaphore_mem>>)
    %c8_i32_190 = arith.constant 8 : i32
    %264 = arith.muli %arg0, %c8_i32_190 : i32
    %c4_i32_191 = arith.constant 4 : i32
    %265 = arith.addi %264, %c4_i32_191 : i32
    %266 = arith.index_cast %265 : i32 to index
    %c1_192 = arith.constant 1 : index
    %267 = memref.load %arg1[%266, %c1_192] : memref<8x8xi32, #tpu.memory_space<smem>>
    %c33_i32 = arith.constant 33 : i32
    %c0_i32_193 = arith.constant 0 : i32
    %268 = tpu.memref_slice %arg2[%267, %c0_i32_193] : memref<50x128xf32, #tpu.memory_space<any>> -> memref<1x128xf32, #tpu.memory_space<any>>
    %c33_i32_194 = arith.constant 33 : i32
    %c0_i32_195 = arith.constant 0 : i32
    %269 = tpu.memref_slice %arg7[%c33_i32_194, %c0_i32_195] : memref<64x128xf32, #tpu.memory_space<vmem>> -> memref<1x128xf32, #tpu.memory_space<vmem>>
    %270 = tpu.memref_slice %arg8[%c33_i32] : memref<64x!tpu.dma_semaphore, #tpu.memory_space<semaphore_mem>> -> memref<1x!tpu.dma_semaphore, #tpu.memory_space<semaphore_mem>>
    %271 = tpu.memref_squeeze %270 : memref<1x!tpu.dma_semaphore, #tpu.memory_space<semaphore_mem>> -> memref<!tpu.dma_semaphore, #tpu.memory_space<semaphore_mem>>
    tpu.enqueue_dma source(%268 : memref<1x128xf32, #tpu.memory_space<any>>) target(%269 : memref<1x128xf32, #tpu.memory_space<vmem>>) target_semaphore(%271 : memref<!tpu.dma_semaphore, #tpu.memory_space<semaphore_mem>>)
    %c8_i32_196 = arith.constant 8 : i32
    %272 = arith.muli %arg0, %c8_i32_196 : i32
    %c4_i32_197 = arith.constant 4 : i32
    %273 = arith.addi %272, %c4_i32_197 : i32
    %274 = arith.index_cast %273 : i32 to index
    %c2_198 = arith.constant 2 : index
    %275 = memref.load %arg1[%274, %c2_198] : memref<8x8xi32, #tpu.memory_space<smem>>
    %c34_i32 = arith.constant 34 : i32
    %c0_i32_199 = arith.constant 0 : i32
    %276 = tpu.memref_slice %arg2[%275, %c0_i32_199] : memref<50x128xf32, #tpu.memory_space<any>> -> memref<1x128xf32, #tpu.memory_space<any>>
    %c34_i32_200 = arith.constant 34 : i32
    %c0_i32_201 = arith.constant 0 : i32
    %277 = tpu.memref_slice %arg7[%c34_i32_200, %c0_i32_201] : memref<64x128xf32, #tpu.memory_space<vmem>> -> memref<1x128xf32, #tpu.memory_space<vmem>>
    %278 = tpu.memref_slice %arg8[%c34_i32] : memref<64x!tpu.dma_semaphore, #tpu.memory_space<semaphore_mem>> -> memref<1x!tpu.dma_semaphore, #tpu.memory_space<semaphore_mem>>
    %279 = tpu.memref_squeeze %278 : memref<1x!tpu.dma_semaphore, #tpu.memory_space<semaphore_mem>> -> memref<!tpu.dma_semaphore, #tpu.memory_space<semaphore_mem>>
    tpu.enqueue_dma source(%276 : memref<1x128xf32, #tpu.memory_space<any>>) target(%277 : memref<1x128xf32, #tpu.memory_space<vmem>>) target_semaphore(%279 : memref<!tpu.dma_semaphore, #tpu.memory_space<semaphore_mem>>)
    %c8_i32_202 = arith.constant 8 : i32
    %280 = arith.muli %arg0, %c8_i32_202 : i32
    %c4_i32_203 = arith.constant 4 : i32
    %281 = arith.addi %280, %c4_i32_203 : i32
    %282 = arith.index_cast %281 : i32 to index
    %c3_204 = arith.constant 3 : index
    %283 = memref.load %arg1[%282, %c3_204] : memref<8x8xi32, #tpu.memory_space<smem>>
    %c35_i32 = arith.constant 35 : i32
    %c0_i32_205 = arith.constant 0 : i32
    %284 = tpu.memref_slice %arg2[%283, %c0_i32_205] : memref<50x128xf32, #tpu.memory_space<any>> -> memref<1x128xf32, #tpu.memory_space<any>>
    %c35_i32_206 = arith.constant 35 : i32
    %c0_i32_207 = arith.constant 0 : i32
    %285 = tpu.memref_slice %arg7[%c35_i32_206, %c0_i32_207] : memref<64x128xf32, #tpu.memory_space<vmem>> -> memref<1x128xf32, #tpu.memory_space<vmem>>
    %286 = tpu.memref_slice %arg8[%c35_i32] : memref<64x!tpu.dma_semaphore, #tpu.memory_space<semaphore_mem>> -> memref<1x!tpu.dma_semaphore, #tpu.memory_space<semaphore_mem>>
    %287 = tpu.memref_squeeze %286 : memref<1x!tpu.dma_semaphore, #tpu.memory_space<semaphore_mem>> -> memref<!tpu.dma_semaphore, #tpu.memory_space<semaphore_mem>>
    tpu.enqueue_dma source(%284 : memref<1x128xf32, #tpu.memory_space<any>>) target(%285 : memref<1x128xf32, #tpu.memory_space<vmem>>) target_semaphore(%287 : memref<!tpu.dma_semaphore, #tpu.memory_space<semaphore_mem>>)
    %c8_i32_208 = arith.constant 8 : i32
    %288 = arith.muli %arg0, %c8_i32_208 : i32
    %c4_i32_209 = arith.constant 4 : i32
    %289 = arith.addi %288, %c4_i32_209 : i32
    %290 = arith.index_cast %289 : i32 to index
    %c4_210 = arith.constant 4 : index
    %291 = memref.load %arg1[%290, %c4_210] : memref<8x8xi32, #tpu.memory_space<smem>>
    %c36_i32 = arith.constant 36 : i32
    %c0_i32_211 = arith.constant 0 : i32
    %292 = tpu.memref_slice %arg2[%291, %c0_i32_211] : memref<50x128xf32, #tpu.memory_space<any>> -> memref<1x128xf32, #tpu.memory_space<any>>
    %c36_i32_212 = arith.constant 36 : i32
    %c0_i32_213 = arith.constant 0 : i32
    %293 = tpu.memref_slice %arg7[%c36_i32_212, %c0_i32_213] : memref<64x128xf32, #tpu.memory_space<vmem>> -> memref<1x128xf32, #tpu.memory_space<vmem>>
    %294 = tpu.memref_slice %arg8[%c36_i32] : memref<64x!tpu.dma_semaphore, #tpu.memory_space<semaphore_mem>> -> memref<1x!tpu.dma_semaphore, #tpu.memory_space<semaphore_mem>>
    %295 = tpu.memref_squeeze %294 : memref<1x!tpu.dma_semaphore, #tpu.memory_space<semaphore_mem>> -> memref<!tpu.dma_semaphore, #tpu.memory_space<semaphore_mem>>
    tpu.enqueue_dma source(%292 : memref<1x128xf32, #tpu.memory_space<any>>) target(%293 : memref<1x128xf32, #tpu.memory_space<vmem>>) target_semaphore(%295 : memref<!tpu.dma_semaphore, #tpu.memory_space<semaphore_mem>>)
    %c8_i32_214 = arith.constant 8 : i32
    %296 = arith.muli %arg0, %c8_i32_214 : i32
    %c4_i32_215 = arith.constant 4 : i32
    %297 = arith.addi %296, %c4_i32_215 : i32
    %298 = arith.index_cast %297 : i32 to index
    %c5_216 = arith.constant 5 : index
    %299 = memref.load %arg1[%298, %c5_216] : memref<8x8xi32, #tpu.memory_space<smem>>
    %c37_i32 = arith.constant 37 : i32
    %c0_i32_217 = arith.constant 0 : i32
    %300 = tpu.memref_slice %arg2[%299, %c0_i32_217] : memref<50x128xf32, #tpu.memory_space<any>> -> memref<1x128xf32, #tpu.memory_space<any>>
    %c37_i32_218 = arith.constant 37 : i32
    %c0_i32_219 = arith.constant 0 : i32
    %301 = tpu.memref_slice %arg7[%c37_i32_218, %c0_i32_219] : memref<64x128xf32, #tpu.memory_space<vmem>> -> memref<1x128xf32, #tpu.memory_space<vmem>>
    %302 = tpu.memref_slice %arg8[%c37_i32] : memref<64x!tpu.dma_semaphore, #tpu.memory_space<semaphore_mem>> -> memref<1x!tpu.dma_semaphore, #tpu.memory_space<semaphore_mem>>
    %303 = tpu.memref_squeeze %302 : memref<1x!tpu.dma_semaphore, #tpu.memory_space<semaphore_mem>> -> memref<!tpu.dma_semaphore, #tpu.memory_space<semaphore_mem>>
    tpu.enqueue_dma source(%300 : memref<1x128xf32, #tpu.memory_space<any>>) target(%301 : memref<1x128xf32, #tpu.memory_space<vmem>>) target_semaphore(%303 : memref<!tpu.dma_semaphore, #tpu.memory_space<semaphore_mem>>)
    %c8_i32_220 = arith.constant 8 : i32
    %304 = arith.muli %arg0, %c8_i32_220 : i32
    %c4_i32_221 = arith.constant 4 : i32
    %305 = arith.addi %304, %c4_i32_221 : i32
    %306 = arith.index_cast %305 : i32 to index
    %c6_222 = arith.constant 6 : index
    %307 = memref.load %arg1[%306, %c6_222] : memref<8x8xi32, #tpu.memory_space<smem>>
    %c38_i32 = arith.constant 38 : i32
    %c0_i32_223 = arith.constant 0 : i32
    %308 = tpu.memref_slice %arg2[%307, %c0_i32_223] : memref<50x128xf32, #tpu.memory_space<any>> -> memref<1x128xf32, #tpu.memory_space<any>>
    %c38_i32_224 = arith.constant 38 : i32
    %c0_i32_225 = arith.constant 0 : i32
    %309 = tpu.memref_slice %arg7[%c38_i32_224, %c0_i32_225] : memref<64x128xf32, #tpu.memory_space<vmem>> -> memref<1x128xf32, #tpu.memory_space<vmem>>
    %310 = tpu.memref_slice %arg8[%c38_i32] : memref<64x!tpu.dma_semaphore, #tpu.memory_space<semaphore_mem>> -> memref<1x!tpu.dma_semaphore, #tpu.memory_space<semaphore_mem>>
    %311 = tpu.memref_squeeze %310 : memref<1x!tpu.dma_semaphore, #tpu.memory_space<semaphore_mem>> -> memref<!tpu.dma_semaphore, #tpu.memory_space<semaphore_mem>>
    tpu.enqueue_dma source(%308 : memref<1x128xf32, #tpu.memory_space<any>>) target(%309 : memref<1x128xf32, #tpu.memory_space<vmem>>) target_semaphore(%311 : memref<!tpu.dma_semaphore, #tpu.memory_space<semaphore_mem>>)
    %c8_i32_226 = arith.constant 8 : i32
    %312 = arith.muli %arg0, %c8_i32_226 : i32
    %c4_i32_227 = arith.constant 4 : i32
    %313 = arith.addi %312, %c4_i32_227 : i32
    %314 = arith.index_cast %313 : i32 to index
    %c7_228 = arith.constant 7 : index
    %315 = memref.load %arg1[%314, %c7_228] : memref<8x8xi32, #tpu.memory_space<smem>>
    %c39_i32 = arith.constant 39 : i32
    %c0_i32_229 = arith.constant 0 : i32
    %316 = tpu.memref_slice %arg2[%315, %c0_i32_229] : memref<50x128xf32, #tpu.memory_space<any>> -> memref<1x128xf32, #tpu.memory_space<any>>
    %c39_i32_230 = arith.constant 39 : i32
    %c0_i32_231 = arith.constant 0 : i32
    %317 = tpu.memref_slice %arg7[%c39_i32_230, %c0_i32_231] : memref<64x128xf32, #tpu.memory_space<vmem>> -> memref<1x128xf32, #tpu.memory_space<vmem>>
    %318 = tpu.memref_slice %arg8[%c39_i32] : memref<64x!tpu.dma_semaphore, #tpu.memory_space<semaphore_mem>> -> memref<1x!tpu.dma_semaphore, #tpu.memory_space<semaphore_mem>>
    %319 = tpu.memref_squeeze %318 : memref<1x!tpu.dma_semaphore, #tpu.memory_space<semaphore_mem>> -> memref<!tpu.dma_semaphore, #tpu.memory_space<semaphore_mem>>
    tpu.enqueue_dma source(%316 : memref<1x128xf32, #tpu.memory_space<any>>) target(%317 : memref<1x128xf32, #tpu.memory_space<vmem>>) target_semaphore(%319 : memref<!tpu.dma_semaphore, #tpu.memory_space<semaphore_mem>>)
    %c8_i32_232 = arith.constant 8 : i32
    %320 = arith.muli %arg0, %c8_i32_232 : i32
    %c5_i32_233 = arith.constant 5 : i32
    %321 = arith.addi %320, %c5_i32_233 : i32
    %322 = arith.index_cast %321 : i32 to index
    %c0_234 = arith.constant 0 : index
    %323 = memref.load %arg1[%322, %c0_234] : memref<8x8xi32, #tpu.memory_space<smem>>
    %c40_i32 = arith.constant 40 : i32
    %c0_i32_235 = arith.constant 0 : i32
    %324 = tpu.memref_slice %arg2[%323, %c0_i32_235] : memref<50x128xf32, #tpu.memory_space<any>> -> memref<1x128xf32, #tpu.memory_space<any>>
    %c40_i32_236 = arith.constant 40 : i32
    %c0_i32_237 = arith.constant 0 : i32
    %325 = tpu.memref_slice %arg7[%c40_i32_236, %c0_i32_237] : memref<64x128xf32, #tpu.memory_space<vmem>> -> memref<1x128xf32, #tpu.memory_space<vmem>>
    %326 = tpu.memref_slice %arg8[%c40_i32] : memref<64x!tpu.dma_semaphore, #tpu.memory_space<semaphore_mem>> -> memref<1x!tpu.dma_semaphore, #tpu.memory_space<semaphore_mem>>
    %327 = tpu.memref_squeeze %326 : memref<1x!tpu.dma_semaphore, #tpu.memory_space<semaphore_mem>> -> memref<!tpu.dma_semaphore, #tpu.memory_space<semaphore_mem>>
    tpu.enqueue_dma source(%324 : memref<1x128xf32, #tpu.memory_space<any>>) target(%325 : memref<1x128xf32, #tpu.memory_space<vmem>>) target_semaphore(%327 : memref<!tpu.dma_semaphore, #tpu.memory_space<semaphore_mem>>)
    %c8_i32_238 = arith.constant 8 : i32
    %328 = arith.muli %arg0, %c8_i32_238 : i32
    %c5_i32_239 = arith.constant 5 : i32
    %329 = arith.addi %328, %c5_i32_239 : i32
    %330 = arith.index_cast %329 : i32 to index
    %c1_240 = arith.constant 1 : index
    %331 = memref.load %arg1[%330, %c1_240] : memref<8x8xi32, #tpu.memory_space<smem>>
    %c41_i32 = arith.constant 41 : i32
    %c0_i32_241 = arith.constant 0 : i32
    %332 = tpu.memref_slice %arg2[%331, %c0_i32_241] : memref<50x128xf32, #tpu.memory_space<any>> -> memref<1x128xf32, #tpu.memory_space<any>>
    %c41_i32_242 = arith.constant 41 : i32
    %c0_i32_243 = arith.constant 0 : i32
    %333 = tpu.memref_slice %arg7[%c41_i32_242, %c0_i32_243] : memref<64x128xf32, #tpu.memory_space<vmem>> -> memref<1x128xf32, #tpu.memory_space<vmem>>
    %334 = tpu.memref_slice %arg8[%c41_i32] : memref<64x!tpu.dma_semaphore, #tpu.memory_space<semaphore_mem>> -> memref<1x!tpu.dma_semaphore, #tpu.memory_space<semaphore_mem>>
    %335 = tpu.memref_squeeze %334 : memref<1x!tpu.dma_semaphore, #tpu.memory_space<semaphore_mem>> -> memref<!tpu.dma_semaphore, #tpu.memory_space<semaphore_mem>>
    tpu.enqueue_dma source(%332 : memref<1x128xf32, #tpu.memory_space<any>>) target(%333 : memref<1x128xf32, #tpu.memory_space<vmem>>) target_semaphore(%335 : memref<!tpu.dma_semaphore, #tpu.memory_space<semaphore_mem>>)
    %c8_i32_244 = arith.constant 8 : i32
    %336 = arith.muli %arg0, %c8_i32_244 : i32
    %c5_i32_245 = arith.constant 5 : i32
    %337 = arith.addi %336, %c5_i32_245 : i32
    %338 = arith.index_cast %337 : i32 to index
    %c2_246 = arith.constant 2 : index
    %339 = memref.load %arg1[%338, %c2_246] : memref<8x8xi32, #tpu.memory_space<smem>>
    %c42_i32 = arith.constant 42 : i32
    %c0_i32_247 = arith.constant 0 : i32
    %340 = tpu.memref_slice %arg2[%339, %c0_i32_247] : memref<50x128xf32, #tpu.memory_space<any>> -> memref<1x128xf32, #tpu.memory_space<any>>
    %c42_i32_248 = arith.constant 42 : i32
    %c0_i32_249 = arith.constant 0 : i32
    %341 = tpu.memref_slice %arg7[%c42_i32_248, %c0_i32_249] : memref<64x128xf32, #tpu.memory_space<vmem>> -> memref<1x128xf32, #tpu.memory_space<vmem>>
    %342 = tpu.memref_slice %arg8[%c42_i32] : memref<64x!tpu.dma_semaphore, #tpu.memory_space<semaphore_mem>> -> memref<1x!tpu.dma_semaphore, #tpu.memory_space<semaphore_mem>>
    %343 = tpu.memref_squeeze %342 : memref<1x!tpu.dma_semaphore, #tpu.memory_space<semaphore_mem>> -> memref<!tpu.dma_semaphore, #tpu.memory_space<semaphore_mem>>
    tpu.enqueue_dma source(%340 : memref<1x128xf32, #tpu.memory_space<any>>) target(%341 : memref<1x128xf32, #tpu.memory_space<vmem>>) target_semaphore(%343 : memref<!tpu.dma_semaphore, #tpu.memory_space<semaphore_mem>>)
    %c8_i32_250 = arith.constant 8 : i32
    %344 = arith.muli %arg0, %c8_i32_250 : i32
    %c5_i32_251 = arith.constant 5 : i32
    %345 = arith.addi %344, %c5_i32_251 : i32
    %346 = arith.index_cast %345 : i32 to index
    %c3_252 = arith.constant 3 : index
    %347 = memref.load %arg1[%346, %c3_252] : memref<8x8xi32, #tpu.memory_space<smem>>
    %c43_i32 = arith.constant 43 : i32
    %c0_i32_253 = arith.constant 0 : i32
    %348 = tpu.memref_slice %arg2[%347, %c0_i32_253] : memref<50x128xf32, #tpu.memory_space<any>> -> memref<1x128xf32, #tpu.memory_space<any>>
    %c43_i32_254 = arith.constant 43 : i32
    %c0_i32_255 = arith.constant 0 : i32
    %349 = tpu.memref_slice %arg7[%c43_i32_254, %c0_i32_255] : memref<64x128xf32, #tpu.memory_space<vmem>> -> memref<1x128xf32, #tpu.memory_space<vmem>>
    %350 = tpu.memref_slice %arg8[%c43_i32] : memref<64x!tpu.dma_semaphore, #tpu.memory_space<semaphore_mem>> -> memref<1x!tpu.dma_semaphore, #tpu.memory_space<semaphore_mem>>
    %351 = tpu.memref_squeeze %350 : memref<1x!tpu.dma_semaphore, #tpu.memory_space<semaphore_mem>> -> memref<!tpu.dma_semaphore, #tpu.memory_space<semaphore_mem>>
    tpu.enqueue_dma source(%348 : memref<1x128xf32, #tpu.memory_space<any>>) target(%349 : memref<1x128xf32, #tpu.memory_space<vmem>>) target_semaphore(%351 : memref<!tpu.dma_semaphore, #tpu.memory_space<semaphore_mem>>)
    %c8_i32_256 = arith.constant 8 : i32
    %352 = arith.muli %arg0, %c8_i32_256 : i32
    %c5_i32_257 = arith.constant 5 : i32
    %353 = arith.addi %352, %c5_i32_257 : i32
    %354 = arith.index_cast %353 : i32 to index
    %c4_258 = arith.constant 4 : index
    %355 = memref.load %arg1[%354, %c4_258] : memref<8x8xi32, #tpu.memory_space<smem>>
    %c44_i32 = arith.constant 44 : i32
    %c0_i32_259 = arith.constant 0 : i32
    %356 = tpu.memref_slice %arg2[%355, %c0_i32_259] : memref<50x128xf32, #tpu.memory_space<any>> -> memref<1x128xf32, #tpu.memory_space<any>>
    %c44_i32_260 = arith.constant 44 : i32
    %c0_i32_261 = arith.constant 0 : i32
    %357 = tpu.memref_slice %arg7[%c44_i32_260, %c0_i32_261] : memref<64x128xf32, #tpu.memory_space<vmem>> -> memref<1x128xf32, #tpu.memory_space<vmem>>
    %358 = tpu.memref_slice %arg8[%c44_i32] : memref<64x!tpu.dma_semaphore, #tpu.memory_space<semaphore_mem>> -> memref<1x!tpu.dma_semaphore, #tpu.memory_space<semaphore_mem>>
    %359 = tpu.memref_squeeze %358 : memref<1x!tpu.dma_semaphore, #tpu.memory_space<semaphore_mem>> -> memref<!tpu.dma_semaphore, #tpu.memory_space<semaphore_mem>>
    tpu.enqueue_dma source(%356 : memref<1x128xf32, #tpu.memory_space<any>>) target(%357 : memref<1x128xf32, #tpu.memory_space<vmem>>) target_semaphore(%359 : memref<!tpu.dma_semaphore, #tpu.memory_space<semaphore_mem>>)
    %c8_i32_262 = arith.constant 8 : i32
    %360 = arith.muli %arg0, %c8_i32_262 : i32
    %c5_i32_263 = arith.constant 5 : i32
    %361 = arith.addi %360, %c5_i32_263 : i32
    %362 = arith.index_cast %361 : i32 to index
    %c5_264 = arith.constant 5 : index
    %363 = memref.load %arg1[%362, %c5_264] : memref<8x8xi32, #tpu.memory_space<smem>>
    %c45_i32 = arith.constant 45 : i32
    %c0_i32_265 = arith.constant 0 : i32
    %364 = tpu.memref_slice %arg2[%363, %c0_i32_265] : memref<50x128xf32, #tpu.memory_space<any>> -> memref<1x128xf32, #tpu.memory_space<any>>
    %c45_i32_266 = arith.constant 45 : i32
    %c0_i32_267 = arith.constant 0 : i32
    %365 = tpu.memref_slice %arg7[%c45_i32_266, %c0_i32_267] : memref<64x128xf32, #tpu.memory_space<vmem>> -> memref<1x128xf32, #tpu.memory_space<vmem>>
    %366 = tpu.memref_slice %arg8[%c45_i32] : memref<64x!tpu.dma_semaphore, #tpu.memory_space<semaphore_mem>> -> memref<1x!tpu.dma_semaphore, #tpu.memory_space<semaphore_mem>>
    %367 = tpu.memref_squeeze %366 : memref<1x!tpu.dma_semaphore, #tpu.memory_space<semaphore_mem>> -> memref<!tpu.dma_semaphore, #tpu.memory_space<semaphore_mem>>
    tpu.enqueue_dma source(%364 : memref<1x128xf32, #tpu.memory_space<any>>) target(%365 : memref<1x128xf32, #tpu.memory_space<vmem>>) target_semaphore(%367 : memref<!tpu.dma_semaphore, #tpu.memory_space<semaphore_mem>>)
    %c8_i32_268 = arith.constant 8 : i32
    %368 = arith.muli %arg0, %c8_i32_268 : i32
    %c5_i32_269 = arith.constant 5 : i32
    %369 = arith.addi %368, %c5_i32_269 : i32
    %370 = arith.index_cast %369 : i32 to index
    %c6_270 = arith.constant 6 : index
    %371 = memref.load %arg1[%370, %c6_270] : memref<8x8xi32, #tpu.memory_space<smem>>
    %c46_i32 = arith.constant 46 : i32
    %c0_i32_271 = arith.constant 0 : i32
    %372 = tpu.memref_slice %arg2[%371, %c0_i32_271] : memref<50x128xf32, #tpu.memory_space<any>> -> memref<1x128xf32, #tpu.memory_space<any>>
    %c46_i32_272 = arith.constant 46 : i32
    %c0_i32_273 = arith.constant 0 : i32
    %373 = tpu.memref_slice %arg7[%c46_i32_272, %c0_i32_273] : memref<64x128xf32, #tpu.memory_space<vmem>> -> memref<1x128xf32, #tpu.memory_space<vmem>>
    %374 = tpu.memref_slice %arg8[%c46_i32] : memref<64x!tpu.dma_semaphore, #tpu.memory_space<semaphore_mem>> -> memref<1x!tpu.dma_semaphore, #tpu.memory_space<semaphore_mem>>
    %375 = tpu.memref_squeeze %374 : memref<1x!tpu.dma_semaphore, #tpu.memory_space<semaphore_mem>> -> memref<!tpu.dma_semaphore, #tpu.memory_space<semaphore_mem>>
    tpu.enqueue_dma source(%372 : memref<1x128xf32, #tpu.memory_space<any>>) target(%373 : memref<1x128xf32, #tpu.memory_space<vmem>>) target_semaphore(%375 : memref<!tpu.dma_semaphore, #tpu.memory_space<semaphore_mem>>)
    %c8_i32_274 = arith.constant 8 : i32
    %376 = arith.muli %arg0, %c8_i32_274 : i32
    %c5_i32_275 = arith.constant 5 : i32
    %377 = arith.addi %376, %c5_i32_275 : i32
    %378 = arith.index_cast %377 : i32 to index
    %c7_276 = arith.constant 7 : index
    %379 = memref.load %arg1[%378, %c7_276] : memref<8x8xi32, #tpu.memory_space<smem>>
    %c47_i32 = arith.constant 47 : i32
    %c0_i32_277 = arith.constant 0 : i32
    %380 = tpu.memref_slice %arg2[%379, %c0_i32_277] : memref<50x128xf32, #tpu.memory_space<any>> -> memref<1x128xf32, #tpu.memory_space<any>>
    %c47_i32_278 = arith.constant 47 : i32
    %c0_i32_279 = arith.constant 0 : i32
    %381 = tpu.memref_slice %arg7[%c47_i32_278, %c0_i32_279] : memref<64x128xf32, #tpu.memory_space<vmem>> -> memref<1x128xf32, #tpu.memory_space<vmem>>
    %382 = tpu.memref_slice %arg8[%c47_i32] : memref<64x!tpu.dma_semaphore, #tpu.memory_space<semaphore_mem>> -> memref<1x!tpu.dma_semaphore, #tpu.memory_space<semaphore_mem>>
    %383 = tpu.memref_squeeze %382 : memref<1x!tpu.dma_semaphore, #tpu.memory_space<semaphore_mem>> -> memref<!tpu.dma_semaphore, #tpu.memory_space<semaphore_mem>>
    tpu.enqueue_dma source(%380 : memref<1x128xf32, #tpu.memory_space<any>>) target(%381 : memref<1x128xf32, #tpu.memory_space<vmem>>) target_semaphore(%383 : memref<!tpu.dma_semaphore, #tpu.memory_space<semaphore_mem>>)
    %c8_i32_280 = arith.constant 8 : i32
    %384 = arith.muli %arg0, %c8_i32_280 : i32
    %c6_i32_281 = arith.constant 6 : i32
    %385 = arith.addi %384, %c6_i32_281 : i32
    %386 = arith.index_cast %385 : i32 to index
    %c0_282 = arith.constant 0 : index
    %387 = memref.load %arg1[%386, %c0_282] : memref<8x8xi32, #tpu.memory_space<smem>>
    %c48_i32 = arith.constant 48 : i32
    %c0_i32_283 = arith.constant 0 : i32
    %388 = tpu.memref_slice %arg2[%387, %c0_i32_283] : memref<50x128xf32, #tpu.memory_space<any>> -> memref<1x128xf32, #tpu.memory_space<any>>
    %c48_i32_284 = arith.constant 48 : i32
    %c0_i32_285 = arith.constant 0 : i32
    %389 = tpu.memref_slice %arg7[%c48_i32_284, %c0_i32_285] : memref<64x128xf32, #tpu.memory_space<vmem>> -> memref<1x128xf32, #tpu.memory_space<vmem>>
    %390 = tpu.memref_slice %arg8[%c48_i32] : memref<64x!tpu.dma_semaphore, #tpu.memory_space<semaphore_mem>> -> memref<1x!tpu.dma_semaphore, #tpu.memory_space<semaphore_mem>>
    %391 = tpu.memref_squeeze %390 : memref<1x!tpu.dma_semaphore, #tpu.memory_space<semaphore_mem>> -> memref<!tpu.dma_semaphore, #tpu.memory_space<semaphore_mem>>
    tpu.enqueue_dma source(%388 : memref<1x128xf32, #tpu.memory_space<any>>) target(%389 : memref<1x128xf32, #tpu.memory_space<vmem>>) target_semaphore(%391 : memref<!tpu.dma_semaphore, #tpu.memory_space<semaphore_mem>>)
    %c8_i32_286 = arith.constant 8 : i32
    %392 = arith.muli %arg0, %c8_i32_286 : i32
    %c6_i32_287 = arith.constant 6 : i32
    %393 = arith.addi %392, %c6_i32_287 : i32
    %394 = arith.index_cast %393 : i32 to index
    %c1_288 = arith.constant 1 : index
    %395 = memref.load %arg1[%394, %c1_288] : memref<8x8xi32, #tpu.memory_space<smem>>
    %c49_i32 = arith.constant 49 : i32
    %c0_i32_289 = arith.constant 0 : i32
    %396 = tpu.memref_slice %arg2[%395, %c0_i32_289] : memref<50x128xf32, #tpu.memory_space<any>> -> memref<1x128xf32, #tpu.memory_space<any>>
    %c49_i32_290 = arith.constant 49 : i32
    %c0_i32_291 = arith.constant 0 : i32
    %397 = tpu.memref_slice %arg7[%c49_i32_290, %c0_i32_291] : memref<64x128xf32, #tpu.memory_space<vmem>> -> memref<1x128xf32, #tpu.memory_space<vmem>>
    %398 = tpu.memref_slice %arg8[%c49_i32] : memref<64x!tpu.dma_semaphore, #tpu.memory_space<semaphore_mem>> -> memref<1x!tpu.dma_semaphore, #tpu.memory_space<semaphore_mem>>
    %399 = tpu.memref_squeeze %398 : memref<1x!tpu.dma_semaphore, #tpu.memory_space<semaphore_mem>> -> memref<!tpu.dma_semaphore, #tpu.memory_space<semaphore_mem>>
    tpu.enqueue_dma source(%396 : memref<1x128xf32, #tpu.memory_space<any>>) target(%397 : memref<1x128xf32, #tpu.memory_space<vmem>>) target_semaphore(%399 : memref<!tpu.dma_semaphore, #tpu.memory_space<semaphore_mem>>)
    %c8_i32_292 = arith.constant 8 : i32
    %400 = arith.muli %arg0, %c8_i32_292 : i32
    %c6_i32_293 = arith.constant 6 : i32
    %401 = arith.addi %400, %c6_i32_293 : i32
    %402 = arith.index_cast %401 : i32 to index
    %c2_294 = arith.constant 2 : index
    %403 = memref.load %arg1[%402, %c2_294] : memref<8x8xi32, #tpu.memory_space<smem>>
    %c50_i32 = arith.constant 50 : i32
    %c0_i32_295 = arith.constant 0 : i32
    %404 = tpu.memref_slice %arg2[%403, %c0_i32_295] : memref<50x128xf32, #tpu.memory_space<any>> -> memref<1x128xf32, #tpu.memory_space<any>>
    %c50_i32_296 = arith.constant 50 : i32
    %c0_i32_297 = arith.constant 0 : i32
    %405 = tpu.memref_slice %arg7[%c50_i32_296, %c0_i32_297] : memref<64x128xf32, #tpu.memory_space<vmem>> -> memref<1x128xf32, #tpu.memory_space<vmem>>
    %406 = tpu.memref_slice %arg8[%c50_i32] : memref<64x!tpu.dma_semaphore, #tpu.memory_space<semaphore_mem>> -> memref<1x!tpu.dma_semaphore, #tpu.memory_space<semaphore_mem>>
    %407 = tpu.memref_squeeze %406 : memref<1x!tpu.dma_semaphore, #tpu.memory_space<semaphore_mem>> -> memref<!tpu.dma_semaphore, #tpu.memory_space<semaphore_mem>>
    tpu.enqueue_dma source(%404 : memref<1x128xf32, #tpu.memory_space<any>>) target(%405 : memref<1x128xf32, #tpu.memory_space<vmem>>) target_semaphore(%407 : memref<!tpu.dma_semaphore, #tpu.memory_space<semaphore_mem>>)
    %c8_i32_298 = arith.constant 8 : i32
    %408 = arith.muli %arg0, %c8_i32_298 : i32
    %c6_i32_299 = arith.constant 6 : i32
    %409 = arith.addi %408, %c6_i32_299 : i32
    %410 = arith.index_cast %409 : i32 to index
    %c3_300 = arith.constant 3 : index
    %411 = memref.load %arg1[%410, %c3_300] : memref<8x8xi32, #tpu.memory_space<smem>>
    %c51_i32 = arith.constant 51 : i32
    %c0_i32_301 = arith.constant 0 : i32
    %412 = tpu.memref_slice %arg2[%411, %c0_i32_301] : memref<50x128xf32, #tpu.memory_space<any>> -> memref<1x128xf32, #tpu.memory_space<any>>
    %c51_i32_302 = arith.constant 51 : i32
    %c0_i32_303 = arith.constant 0 : i32
    %413 = tpu.memref_slice %arg7[%c51_i32_302, %c0_i32_303] : memref<64x128xf32, #tpu.memory_space<vmem>> -> memref<1x128xf32, #tpu.memory_space<vmem>>
    %414 = tpu.memref_slice %arg8[%c51_i32] : memref<64x!tpu.dma_semaphore, #tpu.memory_space<semaphore_mem>> -> memref<1x!tpu.dma_semaphore, #tpu.memory_space<semaphore_mem>>
    %415 = tpu.memref_squeeze %414 : memref<1x!tpu.dma_semaphore, #tpu.memory_space<semaphore_mem>> -> memref<!tpu.dma_semaphore, #tpu.memory_space<semaphore_mem>>
    tpu.enqueue_dma source(%412 : memref<1x128xf32, #tpu.memory_space<any>>) target(%413 : memref<1x128xf32, #tpu.memory_space<vmem>>) target_semaphore(%415 : memref<!tpu.dma_semaphore, #tpu.memory_space<semaphore_mem>>)
    %c8_i32_304 = arith.constant 8 : i32
    %416 = arith.muli %arg0, %c8_i32_304 : i32
    %c6_i32_305 = arith.constant 6 : i32
    %417 = arith.addi %416, %c6_i32_305 : i32
    %418 = arith.index_cast %417 : i32 to index
    %c4_306 = arith.constant 4 : index
    %419 = memref.load %arg1[%418, %c4_306] : memref<8x8xi32, #tpu.memory_space<smem>>
    %c52_i32 = arith.constant 52 : i32
    %c0_i32_307 = arith.constant 0 : i32
    %420 = tpu.memref_slice %arg2[%419, %c0_i32_307] : memref<50x128xf32, #tpu.memory_space<any>> -> memref<1x128xf32, #tpu.memory_space<any>>
    %c52_i32_308 = arith.constant 52 : i32
    %c0_i32_309 = arith.constant 0 : i32
    %421 = tpu.memref_slice %arg7[%c52_i32_308, %c0_i32_309] : memref<64x128xf32, #tpu.memory_space<vmem>> -> memref<1x128xf32, #tpu.memory_space<vmem>>
    %422 = tpu.memref_slice %arg8[%c52_i32] : memref<64x!tpu.dma_semaphore, #tpu.memory_space<semaphore_mem>> -> memref<1x!tpu.dma_semaphore, #tpu.memory_space<semaphore_mem>>
    %423 = tpu.memref_squeeze %422 : memref<1x!tpu.dma_semaphore, #tpu.memory_space<semaphore_mem>> -> memref<!tpu.dma_semaphore, #tpu.memory_space<semaphore_mem>>
    tpu.enqueue_dma source(%420 : memref<1x128xf32, #tpu.memory_space<any>>) target(%421 : memref<1x128xf32, #tpu.memory_space<vmem>>) target_semaphore(%423 : memref<!tpu.dma_semaphore, #tpu.memory_space<semaphore_mem>>)
    %c8_i32_310 = arith.constant 8 : i32
    %424 = arith.muli %arg0, %c8_i32_310 : i32
    %c6_i32_311 = arith.constant 6 : i32
    %425 = arith.addi %424, %c6_i32_311 : i32
    %426 = arith.index_cast %425 : i32 to index
    %c5_312 = arith.constant 5 : index
    %427 = memref.load %arg1[%426, %c5_312] : memref<8x8xi32, #tpu.memory_space<smem>>
    %c53_i32 = arith.constant 53 : i32
    %c0_i32_313 = arith.constant 0 : i32
    %428 = tpu.memref_slice %arg2[%427, %c0_i32_313] : memref<50x128xf32, #tpu.memory_space<any>> -> memref<1x128xf32, #tpu.memory_space<any>>
    %c53_i32_314 = arith.constant 53 : i32
    %c0_i32_315 = arith.constant 0 : i32
    %429 = tpu.memref_slice %arg7[%c53_i32_314, %c0_i32_315] : memref<64x128xf32, #tpu.memory_space<vmem>> -> memref<1x128xf32, #tpu.memory_space<vmem>>
    %430 = tpu.memref_slice %arg8[%c53_i32] : memref<64x!tpu.dma_semaphore, #tpu.memory_space<semaphore_mem>> -> memref<1x!tpu.dma_semaphore, #tpu.memory_space<semaphore_mem>>
    %431 = tpu.memref_squeeze %430 : memref<1x!tpu.dma_semaphore, #tpu.memory_space<semaphore_mem>> -> memref<!tpu.dma_semaphore, #tpu.memory_space<semaphore_mem>>
    tpu.enqueue_dma source(%428 : memref<1x128xf32, #tpu.memory_space<any>>) target(%429 : memref<1x128xf32, #tpu.memory_space<vmem>>) target_semaphore(%431 : memref<!tpu.dma_semaphore, #tpu.memory_space<semaphore_mem>>)
    %c8_i32_316 = arith.constant 8 : i32
    %432 = arith.muli %arg0, %c8_i32_316 : i32
    %c6_i32_317 = arith.constant 6 : i32
    %433 = arith.addi %432, %c6_i32_317 : i32
    %434 = arith.index_cast %433 : i32 to index
    %c6_318 = arith.constant 6 : index
    %435 = memref.load %arg1[%434, %c6_318] : memref<8x8xi32, #tpu.memory_space<smem>>
    %c54_i32 = arith.constant 54 : i32
    %c0_i32_319 = arith.constant 0 : i32
    %436 = tpu.memref_slice %arg2[%435, %c0_i32_319] : memref<50x128xf32, #tpu.memory_space<any>> -> memref<1x128xf32, #tpu.memory_space<any>>
    %c54_i32_320 = arith.constant 54 : i32
    %c0_i32_321 = arith.constant 0 : i32
    %437 = tpu.memref_slice %arg7[%c54_i32_320, %c0_i32_321] : memref<64x128xf32, #tpu.memory_space<vmem>> -> memref<1x128xf32, #tpu.memory_space<vmem>>
    %438 = tpu.memref_slice %arg8[%c54_i32] : memref<64x!tpu.dma_semaphore, #tpu.memory_space<semaphore_mem>> -> memref<1x!tpu.dma_semaphore, #tpu.memory_space<semaphore_mem>>
    %439 = tpu.memref_squeeze %438 : memref<1x!tpu.dma_semaphore, #tpu.memory_space<semaphore_mem>> -> memref<!tpu.dma_semaphore, #tpu.memory_space<semaphore_mem>>
    tpu.enqueue_dma source(%436 : memref<1x128xf32, #tpu.memory_space<any>>) target(%437 : memref<1x128xf32, #tpu.memory_space<vmem>>) target_semaphore(%439 : memref<!tpu.dma_semaphore, #tpu.memory_space<semaphore_mem>>)
    %c8_i32_322 = arith.constant 8 : i32
    %440 = arith.muli %arg0, %c8_i32_322 : i32
    %c6_i32_323 = arith.constant 6 : i32
    %441 = arith.addi %440, %c6_i32_323 : i32
    %442 = arith.index_cast %441 : i32 to index
    %c7_324 = arith.constant 7 : index
    %443 = memref.load %arg1[%442, %c7_324] : memref<8x8xi32, #tpu.memory_space<smem>>
    %c55_i32 = arith.constant 55 : i32
    %c0_i32_325 = arith.constant 0 : i32
    %444 = tpu.memref_slice %arg2[%443, %c0_i32_325] : memref<50x128xf32, #tpu.memory_space<any>> -> memref<1x128xf32, #tpu.memory_space<any>>
    %c55_i32_326 = arith.constant 55 : i32
    %c0_i32_327 = arith.constant 0 : i32
    %445 = tpu.memref_slice %arg7[%c55_i32_326, %c0_i32_327] : memref<64x128xf32, #tpu.memory_space<vmem>> -> memref<1x128xf32, #tpu.memory_space<vmem>>
    %446 = tpu.memref_slice %arg8[%c55_i32] : memref<64x!tpu.dma_semaphore, #tpu.memory_space<semaphore_mem>> -> memref<1x!tpu.dma_semaphore, #tpu.memory_space<semaphore_mem>>
    %447 = tpu.memref_squeeze %446 : memref<1x!tpu.dma_semaphore, #tpu.memory_space<semaphore_mem>> -> memref<!tpu.dma_semaphore, #tpu.memory_space<semaphore_mem>>
    tpu.enqueue_dma source(%444 : memref<1x128xf32, #tpu.memory_space<any>>) target(%445 : memref<1x128xf32, #tpu.memory_space<vmem>>) target_semaphore(%447 : memref<!tpu.dma_semaphore, #tpu.memory_space<semaphore_mem>>)
    %c8_i32_328 = arith.constant 8 : i32
    %448 = arith.muli %arg0, %c8_i32_328 : i32
    %c7_i32_329 = arith.constant 7 : i32
    %449 = arith.addi %448, %c7_i32_329 : i32
    %450 = arith.index_cast %449 : i32 to index
    %c0_330 = arith.constant 0 : index
    %451 = memref.load %arg1[%450, %c0_330] : memref<8x8xi32, #tpu.memory_space<smem>>
    %c56_i32 = arith.constant 56 : i32
    %c0_i32_331 = arith.constant 0 : i32
    %452 = tpu.memref_slice %arg2[%451, %c0_i32_331] : memref<50x128xf32, #tpu.memory_space<any>> -> memref<1x128xf32, #tpu.memory_space<any>>
    %c56_i32_332 = arith.constant 56 : i32
    %c0_i32_333 = arith.constant 0 : i32
    %453 = tpu.memref_slice %arg7[%c56_i32_332, %c0_i32_333] : memref<64x128xf32, #tpu.memory_space<vmem>> -> memref<1x128xf32, #tpu.memory_space<vmem>>
    %454 = tpu.memref_slice %arg8[%c56_i32] : memref<64x!tpu.dma_semaphore, #tpu.memory_space<semaphore_mem>> -> memref<1x!tpu.dma_semaphore, #tpu.memory_space<semaphore_mem>>
    %455 = tpu.memref_squeeze %454 : memref<1x!tpu.dma_semaphore, #tpu.memory_space<semaphore_mem>> -> memref<!tpu.dma_semaphore, #tpu.memory_space<semaphore_mem>>
    tpu.enqueue_dma source(%452 : memref<1x128xf32, #tpu.memory_space<any>>) target(%453 : memref<1x128xf32, #tpu.memory_space<vmem>>) target_semaphore(%455 : memref<!tpu.dma_semaphore, #tpu.memory_space<semaphore_mem>>)
    %c8_i32_334 = arith.constant 8 : i32
    %456 = arith.muli %arg0, %c8_i32_334 : i32
    %c7_i32_335 = arith.constant 7 : i32
    %457 = arith.addi %456, %c7_i32_335 : i32
    %458 = arith.index_cast %457 : i32 to index
    %c1_336 = arith.constant 1 : index
    %459 = memref.load %arg1[%458, %c1_336] : memref<8x8xi32, #tpu.memory_space<smem>>
    %c57_i32 = arith.constant 57 : i32
    %c0_i32_337 = arith.constant 0 : i32
    %460 = tpu.memref_slice %arg2[%459, %c0_i32_337] : memref<50x128xf32, #tpu.memory_space<any>> -> memref<1x128xf32, #tpu.memory_space<any>>
    %c57_i32_338 = arith.constant 57 : i32
    %c0_i32_339 = arith.constant 0 : i32
    %461 = tpu.memref_slice %arg7[%c57_i32_338, %c0_i32_339] : memref<64x128xf32, #tpu.memory_space<vmem>> -> memref<1x128xf32, #tpu.memory_space<vmem>>
    %462 = tpu.memref_slice %arg8[%c57_i32] : memref<64x!tpu.dma_semaphore, #tpu.memory_space<semaphore_mem>> -> memref<1x!tpu.dma_semaphore, #tpu.memory_space<semaphore_mem>>
    %463 = tpu.memref_squeeze %462 : memref<1x!tpu.dma_semaphore, #tpu.memory_space<semaphore_mem>> -> memref<!tpu.dma_semaphore, #tpu.memory_space<semaphore_mem>>
    tpu.enqueue_dma source(%460 : memref<1x128xf32, #tpu.memory_space<any>>) target(%461 : memref<1x128xf32, #tpu.memory_space<vmem>>) target_semaphore(%463 : memref<!tpu.dma_semaphore, #tpu.memory_space<semaphore_mem>>)
    %c8_i32_340 = arith.constant 8 : i32
    %464 = arith.muli %arg0, %c8_i32_340 : i32
    %c7_i32_341 = arith.constant 7 : i32
    %465 = arith.addi %464, %c7_i32_341 : i32
    %466 = arith.index_cast %465 : i32 to index
    %c2_342 = arith.constant 2 : index
    %467 = memref.load %arg1[%466, %c2_342] : memref<8x8xi32, #tpu.memory_space<smem>>
    %c58_i32 = arith.constant 58 : i32
    %c0_i32_343 = arith.constant 0 : i32
    %468 = tpu.memref_slice %arg2[%467, %c0_i32_343] : memref<50x128xf32, #tpu.memory_space<any>> -> memref<1x128xf32, #tpu.memory_space<any>>
    %c58_i32_344 = arith.constant 58 : i32
    %c0_i32_345 = arith.constant 0 : i32
    %469 = tpu.memref_slice %arg7[%c58_i32_344, %c0_i32_345] : memref<64x128xf32, #tpu.memory_space<vmem>> -> memref<1x128xf32, #tpu.memory_space<vmem>>
    %470 = tpu.memref_slice %arg8[%c58_i32] : memref<64x!tpu.dma_semaphore, #tpu.memory_space<semaphore_mem>> -> memref<1x!tpu.dma_semaphore, #tpu.memory_space<semaphore_mem>>
    %471 = tpu.memref_squeeze %470 : memref<1x!tpu.dma_semaphore, #tpu.memory_space<semaphore_mem>> -> memref<!tpu.dma_semaphore, #tpu.memory_space<semaphore_mem>>
    tpu.enqueue_dma source(%468 : memref<1x128xf32, #tpu.memory_space<any>>) target(%469 : memref<1x128xf32, #tpu.memory_space<vmem>>) target_semaphore(%471 : memref<!tpu.dma_semaphore, #tpu.memory_space<semaphore_mem>>)
    %c8_i32_346 = arith.constant 8 : i32
    %472 = arith.muli %arg0, %c8_i32_346 : i32
    %c7_i32_347 = arith.constant 7 : i32
    %473 = arith.addi %472, %c7_i32_347 : i32
    %474 = arith.index_cast %473 : i32 to index
    %c3_348 = arith.constant 3 : index
    %475 = memref.load %arg1[%474, %c3_348] : memref<8x8xi32, #tpu.memory_space<smem>>
    %c59_i32 = arith.constant 59 : i32
    %c0_i32_349 = arith.constant 0 : i32
    %476 = tpu.memref_slice %arg2[%475, %c0_i32_349] : memref<50x128xf32, #tpu.memory_space<any>> -> memref<1x128xf32, #tpu.memory_space<any>>
    %c59_i32_350 = arith.constant 59 : i32
    %c0_i32_351 = arith.constant 0 : i32
    %477 = tpu.memref_slice %arg7[%c59_i32_350, %c0_i32_351] : memref<64x128xf32, #tpu.memory_space<vmem>> -> memref<1x128xf32, #tpu.memory_space<vmem>>
    %478 = tpu.memref_slice %arg8[%c59_i32] : memref<64x!tpu.dma_semaphore, #tpu.memory_space<semaphore_mem>> -> memref<1x!tpu.dma_semaphore, #tpu.memory_space<semaphore_mem>>
    %479 = tpu.memref_squeeze %478 : memref<1x!tpu.dma_semaphore, #tpu.memory_space<semaphore_mem>> -> memref<!tpu.dma_semaphore, #tpu.memory_space<semaphore_mem>>
    tpu.enqueue_dma source(%476 : memref<1x128xf32, #tpu.memory_space<any>>) target(%477 : memref<1x128xf32, #tpu.memory_space<vmem>>) target_semaphore(%479 : memref<!tpu.dma_semaphore, #tpu.memory_space<semaphore_mem>>)
    %c8_i32_352 = arith.constant 8 : i32
    %480 = arith.muli %arg0, %c8_i32_352 : i32
    %c7_i32_353 = arith.constant 7 : i32
    %481 = arith.addi %480, %c7_i32_353 : i32
    %482 = arith.index_cast %481 : i32 to index
    %c4_354 = arith.constant 4 : index
    %483 = memref.load %arg1[%482, %c4_354] : memref<8x8xi32, #tpu.memory_space<smem>>
    %c60_i32 = arith.constant 60 : i32
    %c0_i32_355 = arith.constant 0 : i32
    %484 = tpu.memref_slice %arg2[%483, %c0_i32_355] : memref<50x128xf32, #tpu.memory_space<any>> -> memref<1x128xf32, #tpu.memory_space<any>>
    %c60_i32_356 = arith.constant 60 : i32
    %c0_i32_357 = arith.constant 0 : i32
    %485 = tpu.memref_slice %arg7[%c60_i32_356, %c0_i32_357] : memref<64x128xf32, #tpu.memory_space<vmem>> -> memref<1x128xf32, #tpu.memory_space<vmem>>
    %486 = tpu.memref_slice %arg8[%c60_i32] : memref<64x!tpu.dma_semaphore, #tpu.memory_space<semaphore_mem>> -> memref<1x!tpu.dma_semaphore, #tpu.memory_space<semaphore_mem>>
    %487 = tpu.memref_squeeze %486 : memref<1x!tpu.dma_semaphore, #tpu.memory_space<semaphore_mem>> -> memref<!tpu.dma_semaphore, #tpu.memory_space<semaphore_mem>>
    tpu.enqueue_dma source(%484 : memref<1x128xf32, #tpu.memory_space<any>>) target(%485 : memref<1x128xf32, #tpu.memory_space<vmem>>) target_semaphore(%487 : memref<!tpu.dma_semaphore, #tpu.memory_space<semaphore_mem>>)
    %c8_i32_358 = arith.constant 8 : i32
    %488 = arith.muli %arg0, %c8_i32_358 : i32
    %c7_i32_359 = arith.constant 7 : i32
    %489 = arith.addi %488, %c7_i32_359 : i32
    %490 = arith.index_cast %489 : i32 to index
    %c5_360 = arith.constant 5 : index
    %491 = memref.load %arg1[%490, %c5_360] : memref<8x8xi32, #tpu.memory_space<smem>>
    %c61_i32 = arith.constant 61 : i32
    %c0_i32_361 = arith.constant 0 : i32
    %492 = tpu.memref_slice %arg2[%491, %c0_i32_361] : memref<50x128xf32, #tpu.memory_space<any>> -> memref<1x128xf32, #tpu.memory_space<any>>
    %c61_i32_362 = arith.constant 61 : i32
    %c0_i32_363 = arith.constant 0 : i32
    %493 = tpu.memref_slice %arg7[%c61_i32_362, %c0_i32_363] : memref<64x128xf32, #tpu.memory_space<vmem>> -> memref<1x128xf32, #tpu.memory_space<vmem>>
    %494 = tpu.memref_slice %arg8[%c61_i32] : memref<64x!tpu.dma_semaphore, #tpu.memory_space<semaphore_mem>> -> memref<1x!tpu.dma_semaphore, #tpu.memory_space<semaphore_mem>>
    %495 = tpu.memref_squeeze %494 : memref<1x!tpu.dma_semaphore, #tpu.memory_space<semaphore_mem>> -> memref<!tpu.dma_semaphore, #tpu.memory_space<semaphore_mem>>
    tpu.enqueue_dma source(%492 : memref<1x128xf32, #tpu.memory_space<any>>) target(%493 : memref<1x128xf32, #tpu.memory_space<vmem>>) target_semaphore(%495 : memref<!tpu.dma_semaphore, #tpu.memory_space<semaphore_mem>>)
    %c8_i32_364 = arith.constant 8 : i32
    %496 = arith.muli %arg0, %c8_i32_364 : i32
    %c7_i32_365 = arith.constant 7 : i32
    %497 = arith.addi %496, %c7_i32_365 : i32
    %498 = arith.index_cast %497 : i32 to index
    %c6_366 = arith.constant 6 : index
    %499 = memref.load %arg1[%498, %c6_366] : memref<8x8xi32, #tpu.memory_space<smem>>
    %c62_i32 = arith.constant 62 : i32
    %c0_i32_367 = arith.constant 0 : i32
    %500 = tpu.memref_slice %arg2[%499, %c0_i32_367] : memref<50x128xf32, #tpu.memory_space<any>> -> memref<1x128xf32, #tpu.memory_space<any>>
    %c62_i32_368 = arith.constant 62 : i32
    %c0_i32_369 = arith.constant 0 : i32
    %501 = tpu.memref_slice %arg7[%c62_i32_368, %c0_i32_369] : memref<64x128xf32, #tpu.memory_space<vmem>> -> memref<1x128xf32, #tpu.memory_space<vmem>>
    %502 = tpu.memref_slice %arg8[%c62_i32] : memref<64x!tpu.dma_semaphore, #tpu.memory_space<semaphore_mem>> -> memref<1x!tpu.dma_semaphore, #tpu.memory_space<semaphore_mem>>
    %503 = tpu.memref_squeeze %502 : memref<1x!tpu.dma_semaphore, #tpu.memory_space<semaphore_mem>> -> memref<!tpu.dma_semaphore, #tpu.memory_space<semaphore_mem>>
    tpu.enqueue_dma source(%500 : memref<1x128xf32, #tpu.memory_space<any>>) target(%501 : memref<1x128xf32, #tpu.memory_space<vmem>>) target_semaphore(%503 : memref<!tpu.dma_semaphore, #tpu.memory_space<semaphore_mem>>)
    %c8_i32_370 = arith.constant 8 : i32
    %504 = arith.muli %arg0, %c8_i32_370 : i32
    %c7_i32_371 = arith.constant 7 : i32
    %505 = arith.addi %504, %c7_i32_371 : i32
    %506 = arith.index_cast %505 : i32 to index
    %c7_372 = arith.constant 7 : index
    %507 = memref.load %arg1[%506, %c7_372] : memref<8x8xi32, #tpu.memory_space<smem>>
    %c63_i32 = arith.constant 63 : i32
    %c0_i32_373 = arith.constant 0 : i32
    %508 = tpu.memref_slice %arg2[%507, %c0_i32_373] : memref<50x128xf32, #tpu.memory_space<any>> -> memref<1x128xf32, #tpu.memory_space<any>>
    %c63_i32_374 = arith.constant 63 : i32
    %c0_i32_375 = arith.constant 0 : i32
    %509 = tpu.memref_slice %arg7[%c63_i32_374, %c0_i32_375] : memref<64x128xf32, #tpu.memory_space<vmem>> -> memref<1x128xf32, #tpu.memory_space<vmem>>
    %510 = tpu.memref_slice %arg8[%c63_i32] : memref<64x!tpu.dma_semaphore, #tpu.memory_space<semaphore_mem>> -> memref<1x!tpu.dma_semaphore, #tpu.memory_space<semaphore_mem>>
    %511 = tpu.memref_squeeze %510 : memref<1x!tpu.dma_semaphore, #tpu.memory_space<semaphore_mem>> -> memref<!tpu.dma_semaphore, #tpu.memory_space<semaphore_mem>>
    tpu.enqueue_dma source(%508 : memref<1x128xf32, #tpu.memory_space<any>>) target(%509 : memref<1x128xf32, #tpu.memory_space<vmem>>) target_semaphore(%511 : memref<!tpu.dma_semaphore, #tpu.memory_space<semaphore_mem>>)
    %c0_i32_376 = arith.constant 0 : i32
    %c0_i32_377 = arith.constant 0 : i32
    %512 = tpu.memref_slice %arg2[%3, %c0_i32_377] : memref<50x128xf32, #tpu.memory_space<any>> -> memref<1x128xf32, #tpu.memory_space<any>>
    %c0_i32_378 = arith.constant 0 : i32
    %c0_i32_379 = arith.constant 0 : i32
    %513 = tpu.memref_slice %arg7[%c0_i32_378, %c0_i32_379] : memref<64x128xf32, #tpu.memory_space<vmem>> -> memref<1x128xf32, #tpu.memory_space<vmem>>
    %514 = tpu.memref_slice %arg8[%c0_i32_376] : memref<64x!tpu.dma_semaphore, #tpu.memory_space<semaphore_mem>> -> memref<1x!tpu.dma_semaphore, #tpu.memory_space<semaphore_mem>>
    %515 = tpu.memref_squeeze %514 : memref<1x!tpu.dma_semaphore, #tpu.memory_space<semaphore_mem>> -> memref<!tpu.dma_semaphore, #tpu.memory_space<semaphore_mem>>
    tpu.wait_dma2 semaphore(%515 : memref<!tpu.dma_semaphore, #tpu.memory_space<semaphore_mem>>) src(%512 : memref<1x128xf32, #tpu.memory_space<any>>) dst(%513 : memref<1x128xf32, #tpu.memory_space<vmem>>)
    %c1_i32_380 = arith.constant 1 : i32
    %c0_i32_381 = arith.constant 0 : i32
    %516 = tpu.memref_slice %arg2[%11, %c0_i32_381] : memref<50x128xf32, #tpu.memory_space<any>> -> memref<1x128xf32, #tpu.memory_space<any>>
    %c1_i32_382 = arith.constant 1 : i32
    %c0_i32_383 = arith.constant 0 : i32
    %517 = tpu.memref_slice %arg7[%c1_i32_382, %c0_i32_383] : memref<64x128xf32, #tpu.memory_space<vmem>> -> memref<1x128xf32, #tpu.memory_space<vmem>>
    %518 = tpu.memref_slice %arg8[%c1_i32_380] : memref<64x!tpu.dma_semaphore, #tpu.memory_space<semaphore_mem>> -> memref<1x!tpu.dma_semaphore, #tpu.memory_space<semaphore_mem>>
    %519 = tpu.memref_squeeze %518 : memref<1x!tpu.dma_semaphore, #tpu.memory_space<semaphore_mem>> -> memref<!tpu.dma_semaphore, #tpu.memory_space<semaphore_mem>>
    tpu.wait_dma2 semaphore(%519 : memref<!tpu.dma_semaphore, #tpu.memory_space<semaphore_mem>>) src(%516 : memref<1x128xf32, #tpu.memory_space<any>>) dst(%517 : memref<1x128xf32, #tpu.memory_space<vmem>>)
    %c2_i32_384 = arith.constant 2 : i32
    %c0_i32_385 = arith.constant 0 : i32
    %520 = tpu.memref_slice %arg2[%19, %c0_i32_385] : memref<50x128xf32, #tpu.memory_space<any>> -> memref<1x128xf32, #tpu.memory_space<any>>
    %c2_i32_386 = arith.constant 2 : i32
    %c0_i32_387 = arith.constant 0 : i32
    %521 = tpu.memref_slice %arg7[%c2_i32_386, %c0_i32_387] : memref<64x128xf32, #tpu.memory_space<vmem>> -> memref<1x128xf32, #tpu.memory_space<vmem>>
    %522 = tpu.memref_slice %arg8[%c2_i32_384] : memref<64x!tpu.dma_semaphore, #tpu.memory_space<semaphore_mem>> -> memref<1x!tpu.dma_semaphore, #tpu.memory_space<semaphore_mem>>
    %523 = tpu.memref_squeeze %522 : memref<1x!tpu.dma_semaphore, #tpu.memory_space<semaphore_mem>> -> memref<!tpu.dma_semaphore, #tpu.memory_space<semaphore_mem>>
    tpu.wait_dma2 semaphore(%523 : memref<!tpu.dma_semaphore, #tpu.memory_space<semaphore_mem>>) src(%520 : memref<1x128xf32, #tpu.memory_space<any>>) dst(%521 : memref<1x128xf32, #tpu.memory_space<vmem>>)
    %c3_i32_388 = arith.constant 3 : i32
    %c0_i32_389 = arith.constant 0 : i32
    %524 = tpu.memref_slice %arg2[%27, %c0_i32_389] : memref<50x128xf32, #tpu.memory_space<any>> -> memref<1x128xf32, #tpu.memory_space<any>>
    %c3_i32_390 = arith.constant 3 : i32
    %c0_i32_391 = arith.constant 0 : i32
    %525 = tpu.memref_slice %arg7[%c3_i32_390, %c0_i32_391] : memref<64x128xf32, #tpu.memory_space<vmem>> -> memref<1x128xf32, #tpu.memory_space<vmem>>
    %526 = tpu.memref_slice %arg8[%c3_i32_388] : memref<64x!tpu.dma_semaphore, #tpu.memory_space<semaphore_mem>> -> memref<1x!tpu.dma_semaphore, #tpu.memory_space<semaphore_mem>>
    %527 = tpu.memref_squeeze %526 : memref<1x!tpu.dma_semaphore, #tpu.memory_space<semaphore_mem>> -> memref<!tpu.dma_semaphore, #tpu.memory_space<semaphore_mem>>
    tpu.wait_dma2 semaphore(%527 : memref<!tpu.dma_semaphore, #tpu.memory_space<semaphore_mem>>) src(%524 : memref<1x128xf32, #tpu.memory_space<any>>) dst(%525 : memref<1x128xf32, #tpu.memory_space<vmem>>)
    %c4_i32_392 = arith.constant 4 : i32
    %c0_i32_393 = arith.constant 0 : i32
    %528 = tpu.memref_slice %arg2[%35, %c0_i32_393] : memref<50x128xf32, #tpu.memory_space<any>> -> memref<1x128xf32, #tpu.memory_space<any>>
    %c4_i32_394 = arith.constant 4 : i32
    %c0_i32_395 = arith.constant 0 : i32
    %529 = tpu.memref_slice %arg7[%c4_i32_394, %c0_i32_395] : memref<64x128xf32, #tpu.memory_space<vmem>> -> memref<1x128xf32, #tpu.memory_space<vmem>>
    %530 = tpu.memref_slice %arg8[%c4_i32_392] : memref<64x!tpu.dma_semaphore, #tpu.memory_space<semaphore_mem>> -> memref<1x!tpu.dma_semaphore, #tpu.memory_space<semaphore_mem>>
    %531 = tpu.memref_squeeze %530 : memref<1x!tpu.dma_semaphore, #tpu.memory_space<semaphore_mem>> -> memref<!tpu.dma_semaphore, #tpu.memory_space<semaphore_mem>>
    tpu.wait_dma2 semaphore(%531 : memref<!tpu.dma_semaphore, #tpu.memory_space<semaphore_mem>>) src(%528 : memref<1x128xf32, #tpu.memory_space<any>>) dst(%529 : memref<1x128xf32, #tpu.memory_space<vmem>>)
    %c5_i32_396 = arith.constant 5 : i32
    %c0_i32_397 = arith.constant 0 : i32
    %532 = tpu.memref_slice %arg2[%43, %c0_i32_397] : memref<50x128xf32, #tpu.memory_space<any>> -> memref<1x128xf32, #tpu.memory_space<any>>
    %c5_i32_398 = arith.constant 5 : i32
    %c0_i32_399 = arith.constant 0 : i32
    %533 = tpu.memref_slice %arg7[%c5_i32_398, %c0_i32_399] : memref<64x128xf32, #tpu.memory_space<vmem>> -> memref<1x128xf32, #tpu.memory_space<vmem>>
    %534 = tpu.memref_slice %arg8[%c5_i32_396] : memref<64x!tpu.dma_semaphore, #tpu.memory_space<semaphore_mem>> -> memref<1x!tpu.dma_semaphore, #tpu.memory_space<semaphore_mem>>
    %535 = tpu.memref_squeeze %534 : memref<1x!tpu.dma_semaphore, #tpu.memory_space<semaphore_mem>> -> memref<!tpu.dma_semaphore, #tpu.memory_space<semaphore_mem>>
    tpu.wait_dma2 semaphore(%535 : memref<!tpu.dma_semaphore, #tpu.memory_space<semaphore_mem>>) src(%532 : memref<1x128xf32, #tpu.memory_space<any>>) dst(%533 : memref<1x128xf32, #tpu.memory_space<vmem>>)
    %c6_i32_400 = arith.constant 6 : i32
    %c0_i32_401 = arith.constant 0 : i32
    %536 = tpu.memref_slice %arg2[%51, %c0_i32_401] : memref<50x128xf32, #tpu.memory_space<any>> -> memref<1x128xf32, #tpu.memory_space<any>>
    %c6_i32_402 = arith.constant 6 : i32
    %c0_i32_403 = arith.constant 0 : i32
    %537 = tpu.memref_slice %arg7[%c6_i32_402, %c0_i32_403] : memref<64x128xf32, #tpu.memory_space<vmem>> -> memref<1x128xf32, #tpu.memory_space<vmem>>
    %538 = tpu.memref_slice %arg8[%c6_i32_400] : memref<64x!tpu.dma_semaphore, #tpu.memory_space<semaphore_mem>> -> memref<1x!tpu.dma_semaphore, #tpu.memory_space<semaphore_mem>>
    %539 = tpu.memref_squeeze %538 : memref<1x!tpu.dma_semaphore, #tpu.memory_space<semaphore_mem>> -> memref<!tpu.dma_semaphore, #tpu.memory_space<semaphore_mem>>
    tpu.wait_dma2 semaphore(%539 : memref<!tpu.dma_semaphore, #tpu.memory_space<semaphore_mem>>) src(%536 : memref<1x128xf32, #tpu.memory_space<any>>) dst(%537 : memref<1x128xf32, #tpu.memory_space<vmem>>)
    %c7_i32_404 = arith.constant 7 : i32
    %c0_i32_405 = arith.constant 0 : i32
    %540 = tpu.memref_slice %arg2[%59, %c0_i32_405] : memref<50x128xf32, #tpu.memory_space<any>> -> memref<1x128xf32, #tpu.memory_space<any>>
    %c7_i32_406 = arith.constant 7 : i32
    %c0_i32_407 = arith.constant 0 : i32
    %541 = tpu.memref_slice %arg7[%c7_i32_406, %c0_i32_407] : memref<64x128xf32, #tpu.memory_space<vmem>> -> memref<1x128xf32, #tpu.memory_space<vmem>>
    %542 = tpu.memref_slice %arg8[%c7_i32_404] : memref<64x!tpu.dma_semaphore, #tpu.memory_space<semaphore_mem>> -> memref<1x!tpu.dma_semaphore, #tpu.memory_space<semaphore_mem>>
    %543 = tpu.memref_squeeze %542 : memref<1x!tpu.dma_semaphore, #tpu.memory_space<semaphore_mem>> -> memref<!tpu.dma_semaphore, #tpu.memory_space<semaphore_mem>>
    tpu.wait_dma2 semaphore(%543 : memref<!tpu.dma_semaphore, #tpu.memory_space<semaphore_mem>>) src(%540 : memref<1x128xf32, #tpu.memory_space<any>>) dst(%541 : memref<1x128xf32, #tpu.memory_space<vmem>>)
    %c8_i32_408 = arith.constant 8 : i32
    %c0_i32_409 = arith.constant 0 : i32
    %544 = tpu.memref_slice %arg2[%67, %c0_i32_409] : memref<50x128xf32, #tpu.memory_space<any>> -> memref<1x128xf32, #tpu.memory_space<any>>
    %c8_i32_410 = arith.constant 8 : i32
    %c0_i32_411 = arith.constant 0 : i32
    %545 = tpu.memref_slice %arg7[%c8_i32_410, %c0_i32_411] : memref<64x128xf32, #tpu.memory_space<vmem>> -> memref<1x128xf32, #tpu.memory_space<vmem>>
    %546 = tpu.memref_slice %arg8[%c8_i32_408] : memref<64x!tpu.dma_semaphore, #tpu.memory_space<semaphore_mem>> -> memref<1x!tpu.dma_semaphore, #tpu.memory_space<semaphore_mem>>
    %547 = tpu.memref_squeeze %546 : memref<1x!tpu.dma_semaphore, #tpu.memory_space<semaphore_mem>> -> memref<!tpu.dma_semaphore, #tpu.memory_space<semaphore_mem>>
    tpu.wait_dma2 semaphore(%547 : memref<!tpu.dma_semaphore, #tpu.memory_space<semaphore_mem>>) src(%544 : memref<1x128xf32, #tpu.memory_space<any>>) dst(%545 : memref<1x128xf32, #tpu.memory_space<vmem>>)
    %c9_i32_412 = arith.constant 9 : i32
    %c0_i32_413 = arith.constant 0 : i32
    %548 = tpu.memref_slice %arg2[%75, %c0_i32_413] : memref<50x128xf32, #tpu.memory_space<any>> -> memref<1x128xf32, #tpu.memory_space<any>>
    %c9_i32_414 = arith.constant 9 : i32
    %c0_i32_415 = arith.constant 0 : i32
    %549 = tpu.memref_slice %arg7[%c9_i32_414, %c0_i32_415] : memref<64x128xf32, #tpu.memory_space<vmem>> -> memref<1x128xf32, #tpu.memory_space<vmem>>
    %550 = tpu.memref_slice %arg8[%c9_i32_412] : memref<64x!tpu.dma_semaphore, #tpu.memory_space<semaphore_mem>> -> memref<1x!tpu.dma_semaphore, #tpu.memory_space<semaphore_mem>>
    %551 = tpu.memref_squeeze %550 : memref<1x!tpu.dma_semaphore, #tpu.memory_space<semaphore_mem>> -> memref<!tpu.dma_semaphore, #tpu.memory_space<semaphore_mem>>
    tpu.wait_dma2 semaphore(%551 : memref<!tpu.dma_semaphore, #tpu.memory_space<semaphore_mem>>) src(%548 : memref<1x128xf32, #tpu.memory_space<any>>) dst(%549 : memref<1x128xf32, #tpu.memory_space<vmem>>)
    %c10_i32_416 = arith.constant 10 : i32
    %c0_i32_417 = arith.constant 0 : i32
    %552 = tpu.memref_slice %arg2[%83, %c0_i32_417] : memref<50x128xf32, #tpu.memory_space<any>> -> memref<1x128xf32, #tpu.memory_space<any>>
    %c10_i32_418 = arith.constant 10 : i32
    %c0_i32_419 = arith.constant 0 : i32
    %553 = tpu.memref_slice %arg7[%c10_i32_418, %c0_i32_419] : memref<64x128xf32, #tpu.memory_space<vmem>> -> memref<1x128xf32, #tpu.memory_space<vmem>>
    %554 = tpu.memref_slice %arg8[%c10_i32_416] : memref<64x!tpu.dma_semaphore, #tpu.memory_space<semaphore_mem>> -> memref<1x!tpu.dma_semaphore, #tpu.memory_space<semaphore_mem>>
    %555 = tpu.memref_squeeze %554 : memref<1x!tpu.dma_semaphore, #tpu.memory_space<semaphore_mem>> -> memref<!tpu.dma_semaphore, #tpu.memory_space<semaphore_mem>>
    tpu.wait_dma2 semaphore(%555 : memref<!tpu.dma_semaphore, #tpu.memory_space<semaphore_mem>>) src(%552 : memref<1x128xf32, #tpu.memory_space<any>>) dst(%553 : memref<1x128xf32, #tpu.memory_space<vmem>>)
    %c11_i32_420 = arith.constant 11 : i32
    %c0_i32_421 = arith.constant 0 : i32
    %556 = tpu.memref_slice %arg2[%91, %c0_i32_421] : memref<50x128xf32, #tpu.memory_space<any>> -> memref<1x128xf32, #tpu.memory_space<any>>
    %c11_i32_422 = arith.constant 11 : i32
    %c0_i32_423 = arith.constant 0 : i32
    %557 = tpu.memref_slice %arg7[%c11_i32_422, %c0_i32_423] : memref<64x128xf32, #tpu.memory_space<vmem>> -> memref<1x128xf32, #tpu.memory_space<vmem>>
    %558 = tpu.memref_slice %arg8[%c11_i32_420] : memref<64x!tpu.dma_semaphore, #tpu.memory_space<semaphore_mem>> -> memref<1x!tpu.dma_semaphore, #tpu.memory_space<semaphore_mem>>
    %559 = tpu.memref_squeeze %558 : memref<1x!tpu.dma_semaphore, #tpu.memory_space<semaphore_mem>> -> memref<!tpu.dma_semaphore, #tpu.memory_space<semaphore_mem>>
    tpu.wait_dma2 semaphore(%559 : memref<!tpu.dma_semaphore, #tpu.memory_space<semaphore_mem>>) src(%556 : memref<1x128xf32, #tpu.memory_space<any>>) dst(%557 : memref<1x128xf32, #tpu.memory_space<vmem>>)
    %c12_i32_424 = arith.constant 12 : i32
    %c0_i32_425 = arith.constant 0 : i32
    %560 = tpu.memref_slice %arg2[%99, %c0_i32_425] : memref<50x128xf32, #tpu.memory_space<any>> -> memref<1x128xf32, #tpu.memory_space<any>>
    %c12_i32_426 = arith.constant 12 : i32
    %c0_i32_427 = arith.constant 0 : i32
    %561 = tpu.memref_slice %arg7[%c12_i32_426, %c0_i32_427] : memref<64x128xf32, #tpu.memory_space<vmem>> -> memref<1x128xf32, #tpu.memory_space<vmem>>
    %562 = tpu.memref_slice %arg8[%c12_i32_424] : memref<64x!tpu.dma_semaphore, #tpu.memory_space<semaphore_mem>> -> memref<1x!tpu.dma_semaphore, #tpu.memory_space<semaphore_mem>>
    %563 = tpu.memref_squeeze %562 : memref<1x!tpu.dma_semaphore, #tpu.memory_space<semaphore_mem>> -> memref<!tpu.dma_semaphore, #tpu.memory_space<semaphore_mem>>
    tpu.wait_dma2 semaphore(%563 : memref<!tpu.dma_semaphore, #tpu.memory_space<semaphore_mem>>) src(%560 : memref<1x128xf32, #tpu.memory_space<any>>) dst(%561 : memref<1x128xf32, #tpu.memory_space<vmem>>)
    %c13_i32_428 = arith.constant 13 : i32
    %c0_i32_429 = arith.constant 0 : i32
    %564 = tpu.memref_slice %arg2[%107, %c0_i32_429] : memref<50x128xf32, #tpu.memory_space<any>> -> memref<1x128xf32, #tpu.memory_space<any>>
    %c13_i32_430 = arith.constant 13 : i32
    %c0_i32_431 = arith.constant 0 : i32
    %565 = tpu.memref_slice %arg7[%c13_i32_430, %c0_i32_431] : memref<64x128xf32, #tpu.memory_space<vmem>> -> memref<1x128xf32, #tpu.memory_space<vmem>>
    %566 = tpu.memref_slice %arg8[%c13_i32_428] : memref<64x!tpu.dma_semaphore, #tpu.memory_space<semaphore_mem>> -> memref<1x!tpu.dma_semaphore, #tpu.memory_space<semaphore_mem>>
    %567 = tpu.memref_squeeze %566 : memref<1x!tpu.dma_semaphore, #tpu.memory_space<semaphore_mem>> -> memref<!tpu.dma_semaphore, #tpu.memory_space<semaphore_mem>>
    tpu.wait_dma2 semaphore(%567 : memref<!tpu.dma_semaphore, #tpu.memory_space<semaphore_mem>>) src(%564 : memref<1x128xf32, #tpu.memory_space<any>>) dst(%565 : memref<1x128xf32, #tpu.memory_space<vmem>>)
    %c14_i32_432 = arith.constant 14 : i32
    %c0_i32_433 = arith.constant 0 : i32
    %568 = tpu.memref_slice %arg2[%115, %c0_i32_433] : memref<50x128xf32, #tpu.memory_space<any>> -> memref<1x128xf32, #tpu.memory_space<any>>
    %c14_i32_434 = arith.constant 14 : i32
    %c0_i32_435 = arith.constant 0 : i32
    %569 = tpu.memref_slice %arg7[%c14_i32_434, %c0_i32_435] : memref<64x128xf32, #tpu.memory_space<vmem>> -> memref<1x128xf32, #tpu.memory_space<vmem>>
    %570 = tpu.memref_slice %arg8[%c14_i32_432] : memref<64x!tpu.dma_semaphore, #tpu.memory_space<semaphore_mem>> -> memref<1x!tpu.dma_semaphore, #tpu.memory_space<semaphore_mem>>
    %571 = tpu.memref_squeeze %570 : memref<1x!tpu.dma_semaphore, #tpu.memory_space<semaphore_mem>> -> memref<!tpu.dma_semaphore, #tpu.memory_space<semaphore_mem>>
    tpu.wait_dma2 semaphore(%571 : memref<!tpu.dma_semaphore, #tpu.memory_space<semaphore_mem>>) src(%568 : memref<1x128xf32, #tpu.memory_space<any>>) dst(%569 : memref<1x128xf32, #tpu.memory_space<vmem>>)
    %c15_i32_436 = arith.constant 15 : i32
    %c0_i32_437 = arith.constant 0 : i32
    %572 = tpu.memref_slice %arg2[%123, %c0_i32_437] : memref<50x128xf32, #tpu.memory_space<any>> -> memref<1x128xf32, #tpu.memory_space<any>>
    %c15_i32_438 = arith.constant 15 : i32
    %c0_i32_439 = arith.constant 0 : i32
    %573 = tpu.memref_slice %arg7[%c15_i32_438, %c0_i32_439] : memref<64x128xf32, #tpu.memory_space<vmem>> -> memref<1x128xf32, #tpu.memory_space<vmem>>
    %574 = tpu.memref_slice %arg8[%c15_i32_436] : memref<64x!tpu.dma_semaphore, #tpu.memory_space<semaphore_mem>> -> memref<1x!tpu.dma_semaphore, #tpu.memory_space<semaphore_mem>>
    %575 = tpu.memref_squeeze %574 : memref<1x!tpu.dma_semaphore, #tpu.memory_space<semaphore_mem>> -> memref<!tpu.dma_semaphore, #tpu.memory_space<semaphore_mem>>
    tpu.wait_dma2 semaphore(%575 : memref<!tpu.dma_semaphore, #tpu.memory_space<semaphore_mem>>) src(%572 : memref<1x128xf32, #tpu.memory_space<any>>) dst(%573 : memref<1x128xf32, #tpu.memory_space<vmem>>)
    %c16_i32_440 = arith.constant 16 : i32
    %c0_i32_441 = arith.constant 0 : i32
    %576 = tpu.memref_slice %arg2[%131, %c0_i32_441] : memref<50x128xf32, #tpu.memory_space<any>> -> memref<1x128xf32, #tpu.memory_space<any>>
    %c16_i32_442 = arith.constant 16 : i32
    %c0_i32_443 = arith.constant 0 : i32
    %577 = tpu.memref_slice %arg7[%c16_i32_442, %c0_i32_443] : memref<64x128xf32, #tpu.memory_space<vmem>> -> memref<1x128xf32, #tpu.memory_space<vmem>>
    %578 = tpu.memref_slice %arg8[%c16_i32_440] : memref<64x!tpu.dma_semaphore, #tpu.memory_space<semaphore_mem>> -> memref<1x!tpu.dma_semaphore, #tpu.memory_space<semaphore_mem>>
    %579 = tpu.memref_squeeze %578 : memref<1x!tpu.dma_semaphore, #tpu.memory_space<semaphore_mem>> -> memref<!tpu.dma_semaphore, #tpu.memory_space<semaphore_mem>>
    tpu.wait_dma2 semaphore(%579 : memref<!tpu.dma_semaphore, #tpu.memory_space<semaphore_mem>>) src(%576 : memref<1x128xf32, #tpu.memory_space<any>>) dst(%577 : memref<1x128xf32, #tpu.memory_space<vmem>>)
    %c17_i32_444 = arith.constant 17 : i32
    %c0_i32_445 = arith.constant 0 : i32
    %580 = tpu.memref_slice %arg2[%139, %c0_i32_445] : memref<50x128xf32, #tpu.memory_space<any>> -> memref<1x128xf32, #tpu.memory_space<any>>
    %c17_i32_446 = arith.constant 17 : i32
    %c0_i32_447 = arith.constant 0 : i32
    %581 = tpu.memref_slice %arg7[%c17_i32_446, %c0_i32_447] : memref<64x128xf32, #tpu.memory_space<vmem>> -> memref<1x128xf32, #tpu.memory_space<vmem>>
    %582 = tpu.memref_slice %arg8[%c17_i32_444] : memref<64x!tpu.dma_semaphore, #tpu.memory_space<semaphore_mem>> -> memref<1x!tpu.dma_semaphore, #tpu.memory_space<semaphore_mem>>
    %583 = tpu.memref_squeeze %582 : memref<1x!tpu.dma_semaphore, #tpu.memory_space<semaphore_mem>> -> memref<!tpu.dma_semaphore, #tpu.memory_space<semaphore_mem>>
    tpu.wait_dma2 semaphore(%583 : memref<!tpu.dma_semaphore, #tpu.memory_space<semaphore_mem>>) src(%580 : memref<1x128xf32, #tpu.memory_space<any>>) dst(%581 : memref<1x128xf32, #tpu.memory_space<vmem>>)
    %c18_i32_448 = arith.constant 18 : i32
    %c0_i32_449 = arith.constant 0 : i32
    %584 = tpu.memref_slice %arg2[%147, %c0_i32_449] : memref<50x128xf32, #tpu.memory_space<any>> -> memref<1x128xf32, #tpu.memory_space<any>>
    %c18_i32_450 = arith.constant 18 : i32
    %c0_i32_451 = arith.constant 0 : i32
    %585 = tpu.memref_slice %arg7[%c18_i32_450, %c0_i32_451] : memref<64x128xf32, #tpu.memory_space<vmem>> -> memref<1x128xf32, #tpu.memory_space<vmem>>
    %586 = tpu.memref_slice %arg8[%c18_i32_448] : memref<64x!tpu.dma_semaphore, #tpu.memory_space<semaphore_mem>> -> memref<1x!tpu.dma_semaphore, #tpu.memory_space<semaphore_mem>>
    %587 = tpu.memref_squeeze %586 : memref<1x!tpu.dma_semaphore, #tpu.memory_space<semaphore_mem>> -> memref<!tpu.dma_semaphore, #tpu.memory_space<semaphore_mem>>
    tpu.wait_dma2 semaphore(%587 : memref<!tpu.dma_semaphore, #tpu.memory_space<semaphore_mem>>) src(%584 : memref<1x128xf32, #tpu.memory_space<any>>) dst(%585 : memref<1x128xf32, #tpu.memory_space<vmem>>)
    %c19_i32_452 = arith.constant 19 : i32
    %c0_i32_453 = arith.constant 0 : i32
    %588 = tpu.memref_slice %arg2[%155, %c0_i32_453] : memref<50x128xf32, #tpu.memory_space<any>> -> memref<1x128xf32, #tpu.memory_space<any>>
    %c19_i32_454 = arith.constant 19 : i32
    %c0_i32_455 = arith.constant 0 : i32
    %589 = tpu.memref_slice %arg7[%c19_i32_454, %c0_i32_455] : memref<64x128xf32, #tpu.memory_space<vmem>> -> memref<1x128xf32, #tpu.memory_space<vmem>>
    %590 = tpu.memref_slice %arg8[%c19_i32_452] : memref<64x!tpu.dma_semaphore, #tpu.memory_space<semaphore_mem>> -> memref<1x!tpu.dma_semaphore, #tpu.memory_space<semaphore_mem>>
    %591 = tpu.memref_squeeze %590 : memref<1x!tpu.dma_semaphore, #tpu.memory_space<semaphore_mem>> -> memref<!tpu.dma_semaphore, #tpu.memory_space<semaphore_mem>>
    tpu.wait_dma2 semaphore(%591 : memref<!tpu.dma_semaphore, #tpu.memory_space<semaphore_mem>>) src(%588 : memref<1x128xf32, #tpu.memory_space<any>>) dst(%589 : memref<1x128xf32, #tpu.memory_space<vmem>>)
    %c20_i32_456 = arith.constant 20 : i32
    %c0_i32_457 = arith.constant 0 : i32
    %592 = tpu.memref_slice %arg2[%163, %c0_i32_457] : memref<50x128xf32, #tpu.memory_space<any>> -> memref<1x128xf32, #tpu.memory_space<any>>
    %c20_i32_458 = arith.constant 20 : i32
    %c0_i32_459 = arith.constant 0 : i32
    %593 = tpu.memref_slice %arg7[%c20_i32_458, %c0_i32_459] : memref<64x128xf32, #tpu.memory_space<vmem>> -> memref<1x128xf32, #tpu.memory_space<vmem>>
    %594 = tpu.memref_slice %arg8[%c20_i32_456] : memref<64x!tpu.dma_semaphore, #tpu.memory_space<semaphore_mem>> -> memref<1x!tpu.dma_semaphore, #tpu.memory_space<semaphore_mem>>
    %595 = tpu.memref_squeeze %594 : memref<1x!tpu.dma_semaphore, #tpu.memory_space<semaphore_mem>> -> memref<!tpu.dma_semaphore, #tpu.memory_space<semaphore_mem>>
    tpu.wait_dma2 semaphore(%595 : memref<!tpu.dma_semaphore, #tpu.memory_space<semaphore_mem>>) src(%592 : memref<1x128xf32, #tpu.memory_space<any>>) dst(%593 : memref<1x128xf32, #tpu.memory_space<vmem>>)
    %c21_i32_460 = arith.constant 21 : i32
    %c0_i32_461 = arith.constant 0 : i32
    %596 = tpu.memref_slice %arg2[%171, %c0_i32_461] : memref<50x128xf32, #tpu.memory_space<any>> -> memref<1x128xf32, #tpu.memory_space<any>>
    %c21_i32_462 = arith.constant 21 : i32
    %c0_i32_463 = arith.constant 0 : i32
    %597 = tpu.memref_slice %arg7[%c21_i32_462, %c0_i32_463] : memref<64x128xf32, #tpu.memory_space<vmem>> -> memref<1x128xf32, #tpu.memory_space<vmem>>
    %598 = tpu.memref_slice %arg8[%c21_i32_460] : memref<64x!tpu.dma_semaphore, #tpu.memory_space<semaphore_mem>> -> memref<1x!tpu.dma_semaphore, #tpu.memory_space<semaphore_mem>>
    %599 = tpu.memref_squeeze %598 : memref<1x!tpu.dma_semaphore, #tpu.memory_space<semaphore_mem>> -> memref<!tpu.dma_semaphore, #tpu.memory_space<semaphore_mem>>
    tpu.wait_dma2 semaphore(%599 : memref<!tpu.dma_semaphore, #tpu.memory_space<semaphore_mem>>) src(%596 : memref<1x128xf32, #tpu.memory_space<any>>) dst(%597 : memref<1x128xf32, #tpu.memory_space<vmem>>)
    %c22_i32_464 = arith.constant 22 : i32
    %c0_i32_465 = arith.constant 0 : i32
    %600 = tpu.memref_slice %arg2[%179, %c0_i32_465] : memref<50x128xf32, #tpu.memory_space<any>> -> memref<1x128xf32, #tpu.memory_space<any>>
    %c22_i32_466 = arith.constant 22 : i32
    %c0_i32_467 = arith.constant 0 : i32
    %601 = tpu.memref_slice %arg7[%c22_i32_466, %c0_i32_467] : memref<64x128xf32, #tpu.memory_space<vmem>> -> memref<1x128xf32, #tpu.memory_space<vmem>>
    %602 = tpu.memref_slice %arg8[%c22_i32_464] : memref<64x!tpu.dma_semaphore, #tpu.memory_space<semaphore_mem>> -> memref<1x!tpu.dma_semaphore, #tpu.memory_space<semaphore_mem>>
    %603 = tpu.memref_squeeze %602 : memref<1x!tpu.dma_semaphore, #tpu.memory_space<semaphore_mem>> -> memref<!tpu.dma_semaphore, #tpu.memory_space<semaphore_mem>>
    tpu.wait_dma2 semaphore(%603 : memref<!tpu.dma_semaphore, #tpu.memory_space<semaphore_mem>>) src(%600 : memref<1x128xf32, #tpu.memory_space<any>>) dst(%601 : memref<1x128xf32, #tpu.memory_space<vmem>>)
    %c23_i32_468 = arith.constant 23 : i32
    %c0_i32_469 = arith.constant 0 : i32
    %604 = tpu.memref_slice %arg2[%187, %c0_i32_469] : memref<50x128xf32, #tpu.memory_space<any>> -> memref<1x128xf32, #tpu.memory_space<any>>
    %c23_i32_470 = arith.constant 23 : i32
    %c0_i32_471 = arith.constant 0 : i32
    %605 = tpu.memref_slice %arg7[%c23_i32_470, %c0_i32_471] : memref<64x128xf32, #tpu.memory_space<vmem>> -> memref<1x128xf32, #tpu.memory_space<vmem>>
    %606 = tpu.memref_slice %arg8[%c23_i32_468] : memref<64x!tpu.dma_semaphore, #tpu.memory_space<semaphore_mem>> -> memref<1x!tpu.dma_semaphore, #tpu.memory_space<semaphore_mem>>
    %607 = tpu.memref_squeeze %606 : memref<1x!tpu.dma_semaphore, #tpu.memory_space<semaphore_mem>> -> memref<!tpu.dma_semaphore, #tpu.memory_space<semaphore_mem>>
    tpu.wait_dma2 semaphore(%607 : memref<!tpu.dma_semaphore, #tpu.memory_space<semaphore_mem>>) src(%604 : memref<1x128xf32, #tpu.memory_space<any>>) dst(%605 : memref<1x128xf32, #tpu.memory_space<vmem>>)
    %c24_i32_472 = arith.constant 24 : i32
    %c0_i32_473 = arith.constant 0 : i32
    %608 = tpu.memref_slice %arg2[%195, %c0_i32_473] : memref<50x128xf32, #tpu.memory_space<any>> -> memref<1x128xf32, #tpu.memory_space<any>>
    %c24_i32_474 = arith.constant 24 : i32
    %c0_i32_475 = arith.constant 0 : i32
    %609 = tpu.memref_slice %arg7[%c24_i32_474, %c0_i32_475] : memref<64x128xf32, #tpu.memory_space<vmem>> -> memref<1x128xf32, #tpu.memory_space<vmem>>
    %610 = tpu.memref_slice %arg8[%c24_i32_472] : memref<64x!tpu.dma_semaphore, #tpu.memory_space<semaphore_mem>> -> memref<1x!tpu.dma_semaphore, #tpu.memory_space<semaphore_mem>>
    %611 = tpu.memref_squeeze %610 : memref<1x!tpu.dma_semaphore, #tpu.memory_space<semaphore_mem>> -> memref<!tpu.dma_semaphore, #tpu.memory_space<semaphore_mem>>
    tpu.wait_dma2 semaphore(%611 : memref<!tpu.dma_semaphore, #tpu.memory_space<semaphore_mem>>) src(%608 : memref<1x128xf32, #tpu.memory_space<any>>) dst(%609 : memref<1x128xf32, #tpu.memory_space<vmem>>)
    %c25_i32_476 = arith.constant 25 : i32
    %c0_i32_477 = arith.constant 0 : i32
    %612 = tpu.memref_slice %arg2[%203, %c0_i32_477] : memref<50x128xf32, #tpu.memory_space<any>> -> memref<1x128xf32, #tpu.memory_space<any>>
    %c25_i32_478 = arith.constant 25 : i32
    %c0_i32_479 = arith.constant 0 : i32
    %613 = tpu.memref_slice %arg7[%c25_i32_478, %c0_i32_479] : memref<64x128xf32, #tpu.memory_space<vmem>> -> memref<1x128xf32, #tpu.memory_space<vmem>>
    %614 = tpu.memref_slice %arg8[%c25_i32_476] : memref<64x!tpu.dma_semaphore, #tpu.memory_space<semaphore_mem>> -> memref<1x!tpu.dma_semaphore, #tpu.memory_space<semaphore_mem>>
    %615 = tpu.memref_squeeze %614 : memref<1x!tpu.dma_semaphore, #tpu.memory_space<semaphore_mem>> -> memref<!tpu.dma_semaphore, #tpu.memory_space<semaphore_mem>>
    tpu.wait_dma2 semaphore(%615 : memref<!tpu.dma_semaphore, #tpu.memory_space<semaphore_mem>>) src(%612 : memref<1x128xf32, #tpu.memory_space<any>>) dst(%613 : memref<1x128xf32, #tpu.memory_space<vmem>>)
    %c26_i32_480 = arith.constant 26 : i32
    %c0_i32_481 = arith.constant 0 : i32
    %616 = tpu.memref_slice %arg2[%211, %c0_i32_481] : memref<50x128xf32, #tpu.memory_space<any>> -> memref<1x128xf32, #tpu.memory_space<any>>
    %c26_i32_482 = arith.constant 26 : i32
    %c0_i32_483 = arith.constant 0 : i32
    %617 = tpu.memref_slice %arg7[%c26_i32_482, %c0_i32_483] : memref<64x128xf32, #tpu.memory_space<vmem>> -> memref<1x128xf32, #tpu.memory_space<vmem>>
    %618 = tpu.memref_slice %arg8[%c26_i32_480] : memref<64x!tpu.dma_semaphore, #tpu.memory_space<semaphore_mem>> -> memref<1x!tpu.dma_semaphore, #tpu.memory_space<semaphore_mem>>
    %619 = tpu.memref_squeeze %618 : memref<1x!tpu.dma_semaphore, #tpu.memory_space<semaphore_mem>> -> memref<!tpu.dma_semaphore, #tpu.memory_space<semaphore_mem>>
    tpu.wait_dma2 semaphore(%619 : memref<!tpu.dma_semaphore, #tpu.memory_space<semaphore_mem>>) src(%616 : memref<1x128xf32, #tpu.memory_space<any>>) dst(%617 : memref<1x128xf32, #tpu.memory_space<vmem>>)
    %c27_i32_484 = arith.constant 27 : i32
    %c0_i32_485 = arith.constant 0 : i32
    %620 = tpu.memref_slice %arg2[%219, %c0_i32_485] : memref<50x128xf32, #tpu.memory_space<any>> -> memref<1x128xf32, #tpu.memory_space<any>>
    %c27_i32_486 = arith.constant 27 : i32
    %c0_i32_487 = arith.constant 0 : i32
    %621 = tpu.memref_slice %arg7[%c27_i32_486, %c0_i32_487] : memref<64x128xf32, #tpu.memory_space<vmem>> -> memref<1x128xf32, #tpu.memory_space<vmem>>
    %622 = tpu.memref_slice %arg8[%c27_i32_484] : memref<64x!tpu.dma_semaphore, #tpu.memory_space<semaphore_mem>> -> memref<1x!tpu.dma_semaphore, #tpu.memory_space<semaphore_mem>>
    %623 = tpu.memref_squeeze %622 : memref<1x!tpu.dma_semaphore, #tpu.memory_space<semaphore_mem>> -> memref<!tpu.dma_semaphore, #tpu.memory_space<semaphore_mem>>
    tpu.wait_dma2 semaphore(%623 : memref<!tpu.dma_semaphore, #tpu.memory_space<semaphore_mem>>) src(%620 : memref<1x128xf32, #tpu.memory_space<any>>) dst(%621 : memref<1x128xf32, #tpu.memory_space<vmem>>)
    %c28_i32_488 = arith.constant 28 : i32
    %c0_i32_489 = arith.constant 0 : i32
    %624 = tpu.memref_slice %arg2[%227, %c0_i32_489] : memref<50x128xf32, #tpu.memory_space<any>> -> memref<1x128xf32, #tpu.memory_space<any>>
    %c28_i32_490 = arith.constant 28 : i32
    %c0_i32_491 = arith.constant 0 : i32
    %625 = tpu.memref_slice %arg7[%c28_i32_490, %c0_i32_491] : memref<64x128xf32, #tpu.memory_space<vmem>> -> memref<1x128xf32, #tpu.memory_space<vmem>>
    %626 = tpu.memref_slice %arg8[%c28_i32_488] : memref<64x!tpu.dma_semaphore, #tpu.memory_space<semaphore_mem>> -> memref<1x!tpu.dma_semaphore, #tpu.memory_space<semaphore_mem>>
    %627 = tpu.memref_squeeze %626 : memref<1x!tpu.dma_semaphore, #tpu.memory_space<semaphore_mem>> -> memref<!tpu.dma_semaphore, #tpu.memory_space<semaphore_mem>>
    tpu.wait_dma2 semaphore(%627 : memref<!tpu.dma_semaphore, #tpu.memory_space<semaphore_mem>>) src(%624 : memref<1x128xf32, #tpu.memory_space<any>>) dst(%625 : memref<1x128xf32, #tpu.memory_space<vmem>>)
    %c29_i32_492 = arith.constant 29 : i32
    %c0_i32_493 = arith.constant 0 : i32
    %628 = tpu.memref_slice %arg2[%235, %c0_i32_493] : memref<50x128xf32, #tpu.memory_space<any>> -> memref<1x128xf32, #tpu.memory_space<any>>
    %c29_i32_494 = arith.constant 29 : i32
    %c0_i32_495 = arith.constant 0 : i32
    %629 = tpu.memref_slice %arg7[%c29_i32_494, %c0_i32_495] : memref<64x128xf32, #tpu.memory_space<vmem>> -> memref<1x128xf32, #tpu.memory_space<vmem>>
    %630 = tpu.memref_slice %arg8[%c29_i32_492] : memref<64x!tpu.dma_semaphore, #tpu.memory_space<semaphore_mem>> -> memref<1x!tpu.dma_semaphore, #tpu.memory_space<semaphore_mem>>
    %631 = tpu.memref_squeeze %630 : memref<1x!tpu.dma_semaphore, #tpu.memory_space<semaphore_mem>> -> memref<!tpu.dma_semaphore, #tpu.memory_space<semaphore_mem>>
    tpu.wait_dma2 semaphore(%631 : memref<!tpu.dma_semaphore, #tpu.memory_space<semaphore_mem>>) src(%628 : memref<1x128xf32, #tpu.memory_space<any>>) dst(%629 : memref<1x128xf32, #tpu.memory_space<vmem>>)
    %c30_i32_496 = arith.constant 30 : i32
    %c0_i32_497 = arith.constant 0 : i32
    %632 = tpu.memref_slice %arg2[%243, %c0_i32_497] : memref<50x128xf32, #tpu.memory_space<any>> -> memref<1x128xf32, #tpu.memory_space<any>>
    %c30_i32_498 = arith.constant 30 : i32
    %c0_i32_499 = arith.constant 0 : i32
    %633 = tpu.memref_slice %arg7[%c30_i32_498, %c0_i32_499] : memref<64x128xf32, #tpu.memory_space<vmem>> -> memref<1x128xf32, #tpu.memory_space<vmem>>
    %634 = tpu.memref_slice %arg8[%c30_i32_496] : memref<64x!tpu.dma_semaphore, #tpu.memory_space<semaphore_mem>> -> memref<1x!tpu.dma_semaphore, #tpu.memory_space<semaphore_mem>>
    %635 = tpu.memref_squeeze %634 : memref<1x!tpu.dma_semaphore, #tpu.memory_space<semaphore_mem>> -> memref<!tpu.dma_semaphore, #tpu.memory_space<semaphore_mem>>
    tpu.wait_dma2 semaphore(%635 : memref<!tpu.dma_semaphore, #tpu.memory_space<semaphore_mem>>) src(%632 : memref<1x128xf32, #tpu.memory_space<any>>) dst(%633 : memref<1x128xf32, #tpu.memory_space<vmem>>)
    %c31_i32_500 = arith.constant 31 : i32
    %c0_i32_501 = arith.constant 0 : i32
    %636 = tpu.memref_slice %arg2[%251, %c0_i32_501] : memref<50x128xf32, #tpu.memory_space<any>> -> memref<1x128xf32, #tpu.memory_space<any>>
    %c31_i32_502 = arith.constant 31 : i32
    %c0_i32_503 = arith.constant 0 : i32
    %637 = tpu.memref_slice %arg7[%c31_i32_502, %c0_i32_503] : memref<64x128xf32, #tpu.memory_space<vmem>> -> memref<1x128xf32, #tpu.memory_space<vmem>>
    %638 = tpu.memref_slice %arg8[%c31_i32_500] : memref<64x!tpu.dma_semaphore, #tpu.memory_space<semaphore_mem>> -> memref<1x!tpu.dma_semaphore, #tpu.memory_space<semaphore_mem>>
    %639 = tpu.memref_squeeze %638 : memref<1x!tpu.dma_semaphore, #tpu.memory_space<semaphore_mem>> -> memref<!tpu.dma_semaphore, #tpu.memory_space<semaphore_mem>>
    tpu.wait_dma2 semaphore(%639 : memref<!tpu.dma_semaphore, #tpu.memory_space<semaphore_mem>>) src(%636 : memref<1x128xf32, #tpu.memory_space<any>>) dst(%637 : memref<1x128xf32, #tpu.memory_space<vmem>>)
    %c32_i32_504 = arith.constant 32 : i32
    %c0_i32_505 = arith.constant 0 : i32
    %640 = tpu.memref_slice %arg2[%259, %c0_i32_505] : memref<50x128xf32, #tpu.memory_space<any>> -> memref<1x128xf32, #tpu.memory_space<any>>
    %c32_i32_506 = arith.constant 32 : i32
    %c0_i32_507 = arith.constant 0 : i32
    %641 = tpu.memref_slice %arg7[%c32_i32_506, %c0_i32_507] : memref<64x128xf32, #tpu.memory_space<vmem>> -> memref<1x128xf32, #tpu.memory_space<vmem>>
    %642 = tpu.memref_slice %arg8[%c32_i32_504] : memref<64x!tpu.dma_semaphore, #tpu.memory_space<semaphore_mem>> -> memref<1x!tpu.dma_semaphore, #tpu.memory_space<semaphore_mem>>
    %643 = tpu.memref_squeeze %642 : memref<1x!tpu.dma_semaphore, #tpu.memory_space<semaphore_mem>> -> memref<!tpu.dma_semaphore, #tpu.memory_space<semaphore_mem>>
    tpu.wait_dma2 semaphore(%643 : memref<!tpu.dma_semaphore, #tpu.memory_space<semaphore_mem>>) src(%640 : memref<1x128xf32, #tpu.memory_space<any>>) dst(%641 : memref<1x128xf32, #tpu.memory_space<vmem>>)
    %c33_i32_508 = arith.constant 33 : i32
    %c0_i32_509 = arith.constant 0 : i32
    %644 = tpu.memref_slice %arg2[%267, %c0_i32_509] : memref<50x128xf32, #tpu.memory_space<any>> -> memref<1x128xf32, #tpu.memory_space<any>>
    %c33_i32_510 = arith.constant 33 : i32
    %c0_i32_511 = arith.constant 0 : i32
    %645 = tpu.memref_slice %arg7[%c33_i32_510, %c0_i32_511] : memref<64x128xf32, #tpu.memory_space<vmem>> -> memref<1x128xf32, #tpu.memory_space<vmem>>
    %646 = tpu.memref_slice %arg8[%c33_i32_508] : memref<64x!tpu.dma_semaphore, #tpu.memory_space<semaphore_mem>> -> memref<1x!tpu.dma_semaphore, #tpu.memory_space<semaphore_mem>>
    %647 = tpu.memref_squeeze %646 : memref<1x!tpu.dma_semaphore, #tpu.memory_space<semaphore_mem>> -> memref<!tpu.dma_semaphore, #tpu.memory_space<semaphore_mem>>
    tpu.wait_dma2 semaphore(%647 : memref<!tpu.dma_semaphore, #tpu.memory_space<semaphore_mem>>) src(%644 : memref<1x128xf32, #tpu.memory_space<any>>) dst(%645 : memref<1x128xf32, #tpu.memory_space<vmem>>)
    %c34_i32_512 = arith.constant 34 : i32
    %c0_i32_513 = arith.constant 0 : i32
    %648 = tpu.memref_slice %arg2[%275, %c0_i32_513] : memref<50x128xf32, #tpu.memory_space<any>> -> memref<1x128xf32, #tpu.memory_space<any>>
    %c34_i32_514 = arith.constant 34 : i32
    %c0_i32_515 = arith.constant 0 : i32
    %649 = tpu.memref_slice %arg7[%c34_i32_514, %c0_i32_515] : memref<64x128xf32, #tpu.memory_space<vmem>> -> memref<1x128xf32, #tpu.memory_space<vmem>>
    %650 = tpu.memref_slice %arg8[%c34_i32_512] : memref<64x!tpu.dma_semaphore, #tpu.memory_space<semaphore_mem>> -> memref<1x!tpu.dma_semaphore, #tpu.memory_space<semaphore_mem>>
    %651 = tpu.memref_squeeze %650 : memref<1x!tpu.dma_semaphore, #tpu.memory_space<semaphore_mem>> -> memref<!tpu.dma_semaphore, #tpu.memory_space<semaphore_mem>>
    tpu.wait_dma2 semaphore(%651 : memref<!tpu.dma_semaphore, #tpu.memory_space<semaphore_mem>>) src(%648 : memref<1x128xf32, #tpu.memory_space<any>>) dst(%649 : memref<1x128xf32, #tpu.memory_space<vmem>>)
    %c35_i32_516 = arith.constant 35 : i32
    %c0_i32_517 = arith.constant 0 : i32
    %652 = tpu.memref_slice %arg2[%283, %c0_i32_517] : memref<50x128xf32, #tpu.memory_space<any>> -> memref<1x128xf32, #tpu.memory_space<any>>
    %c35_i32_518 = arith.constant 35 : i32
    %c0_i32_519 = arith.constant 0 : i32
    %653 = tpu.memref_slice %arg7[%c35_i32_518, %c0_i32_519] : memref<64x128xf32, #tpu.memory_space<vmem>> -> memref<1x128xf32, #tpu.memory_space<vmem>>
    %654 = tpu.memref_slice %arg8[%c35_i32_516] : memref<64x!tpu.dma_semaphore, #tpu.memory_space<semaphore_mem>> -> memref<1x!tpu.dma_semaphore, #tpu.memory_space<semaphore_mem>>
    %655 = tpu.memref_squeeze %654 : memref<1x!tpu.dma_semaphore, #tpu.memory_space<semaphore_mem>> -> memref<!tpu.dma_semaphore, #tpu.memory_space<semaphore_mem>>
    tpu.wait_dma2 semaphore(%655 : memref<!tpu.dma_semaphore, #tpu.memory_space<semaphore_mem>>) src(%652 : memref<1x128xf32, #tpu.memory_space<any>>) dst(%653 : memref<1x128xf32, #tpu.memory_space<vmem>>)
    %c36_i32_520 = arith.constant 36 : i32
    %c0_i32_521 = arith.constant 0 : i32
    %656 = tpu.memref_slice %arg2[%291, %c0_i32_521] : memref<50x128xf32, #tpu.memory_space<any>> -> memref<1x128xf32, #tpu.memory_space<any>>
    %c36_i32_522 = arith.constant 36 : i32
    %c0_i32_523 = arith.constant 0 : i32
    %657 = tpu.memref_slice %arg7[%c36_i32_522, %c0_i32_523] : memref<64x128xf32, #tpu.memory_space<vmem>> -> memref<1x128xf32, #tpu.memory_space<vmem>>
    %658 = tpu.memref_slice %arg8[%c36_i32_520] : memref<64x!tpu.dma_semaphore, #tpu.memory_space<semaphore_mem>> -> memref<1x!tpu.dma_semaphore, #tpu.memory_space<semaphore_mem>>
    %659 = tpu.memref_squeeze %658 : memref<1x!tpu.dma_semaphore, #tpu.memory_space<semaphore_mem>> -> memref<!tpu.dma_semaphore, #tpu.memory_space<semaphore_mem>>
    tpu.wait_dma2 semaphore(%659 : memref<!tpu.dma_semaphore, #tpu.memory_space<semaphore_mem>>) src(%656 : memref<1x128xf32, #tpu.memory_space<any>>) dst(%657 : memref<1x128xf32, #tpu.memory_space<vmem>>)
    %c37_i32_524 = arith.constant 37 : i32
    %c0_i32_525 = arith.constant 0 : i32
    %660 = tpu.memref_slice %arg2[%299, %c0_i32_525] : memref<50x128xf32, #tpu.memory_space<any>> -> memref<1x128xf32, #tpu.memory_space<any>>
    %c37_i32_526 = arith.constant 37 : i32
    %c0_i32_527 = arith.constant 0 : i32
    %661 = tpu.memref_slice %arg7[%c37_i32_526, %c0_i32_527] : memref<64x128xf32, #tpu.memory_space<vmem>> -> memref<1x128xf32, #tpu.memory_space<vmem>>
    %662 = tpu.memref_slice %arg8[%c37_i32_524] : memref<64x!tpu.dma_semaphore, #tpu.memory_space<semaphore_mem>> -> memref<1x!tpu.dma_semaphore, #tpu.memory_space<semaphore_mem>>
    %663 = tpu.memref_squeeze %662 : memref<1x!tpu.dma_semaphore, #tpu.memory_space<semaphore_mem>> -> memref<!tpu.dma_semaphore, #tpu.memory_space<semaphore_mem>>
    tpu.wait_dma2 semaphore(%663 : memref<!tpu.dma_semaphore, #tpu.memory_space<semaphore_mem>>) src(%660 : memref<1x128xf32, #tpu.memory_space<any>>) dst(%661 : memref<1x128xf32, #tpu.memory_space<vmem>>)
    %c38_i32_528 = arith.constant 38 : i32
    %c0_i32_529 = arith.constant 0 : i32
    %664 = tpu.memref_slice %arg2[%307, %c0_i32_529] : memref<50x128xf32, #tpu.memory_space<any>> -> memref<1x128xf32, #tpu.memory_space<any>>
    %c38_i32_530 = arith.constant 38 : i32
    %c0_i32_531 = arith.constant 0 : i32
    %665 = tpu.memref_slice %arg7[%c38_i32_530, %c0_i32_531] : memref<64x128xf32, #tpu.memory_space<vmem>> -> memref<1x128xf32, #tpu.memory_space<vmem>>
    %666 = tpu.memref_slice %arg8[%c38_i32_528] : memref<64x!tpu.dma_semaphore, #tpu.memory_space<semaphore_mem>> -> memref<1x!tpu.dma_semaphore, #tpu.memory_space<semaphore_mem>>
    %667 = tpu.memref_squeeze %666 : memref<1x!tpu.dma_semaphore, #tpu.memory_space<semaphore_mem>> -> memref<!tpu.dma_semaphore, #tpu.memory_space<semaphore_mem>>
    tpu.wait_dma2 semaphore(%667 : memref<!tpu.dma_semaphore, #tpu.memory_space<semaphore_mem>>) src(%664 : memref<1x128xf32, #tpu.memory_space<any>>) dst(%665 : memref<1x128xf32, #tpu.memory_space<vmem>>)
    %c39_i32_532 = arith.constant 39 : i32
    %c0_i32_533 = arith.constant 0 : i32
    %668 = tpu.memref_slice %arg2[%315, %c0_i32_533] : memref<50x128xf32, #tpu.memory_space<any>> -> memref<1x128xf32, #tpu.memory_space<any>>
    %c39_i32_534 = arith.constant 39 : i32
    %c0_i32_535 = arith.constant 0 : i32
    %669 = tpu.memref_slice %arg7[%c39_i32_534, %c0_i32_535] : memref<64x128xf32, #tpu.memory_space<vmem>> -> memref<1x128xf32, #tpu.memory_space<vmem>>
    %670 = tpu.memref_slice %arg8[%c39_i32_532] : memref<64x!tpu.dma_semaphore, #tpu.memory_space<semaphore_mem>> -> memref<1x!tpu.dma_semaphore, #tpu.memory_space<semaphore_mem>>
    %671 = tpu.memref_squeeze %670 : memref<1x!tpu.dma_semaphore, #tpu.memory_space<semaphore_mem>> -> memref<!tpu.dma_semaphore, #tpu.memory_space<semaphore_mem>>
    tpu.wait_dma2 semaphore(%671 : memref<!tpu.dma_semaphore, #tpu.memory_space<semaphore_mem>>) src(%668 : memref<1x128xf32, #tpu.memory_space<any>>) dst(%669 : memref<1x128xf32, #tpu.memory_space<vmem>>)
    %c40_i32_536 = arith.constant 40 : i32
    %c0_i32_537 = arith.constant 0 : i32
    %672 = tpu.memref_slice %arg2[%323, %c0_i32_537] : memref<50x128xf32, #tpu.memory_space<any>> -> memref<1x128xf32, #tpu.memory_space<any>>
    %c40_i32_538 = arith.constant 40 : i32
    %c0_i32_539 = arith.constant 0 : i32
    %673 = tpu.memref_slice %arg7[%c40_i32_538, %c0_i32_539] : memref<64x128xf32, #tpu.memory_space<vmem>> -> memref<1x128xf32, #tpu.memory_space<vmem>>
    %674 = tpu.memref_slice %arg8[%c40_i32_536] : memref<64x!tpu.dma_semaphore, #tpu.memory_space<semaphore_mem>> -> memref<1x!tpu.dma_semaphore, #tpu.memory_space<semaphore_mem>>
    %675 = tpu.memref_squeeze %674 : memref<1x!tpu.dma_semaphore, #tpu.memory_space<semaphore_mem>> -> memref<!tpu.dma_semaphore, #tpu.memory_space<semaphore_mem>>
    tpu.wait_dma2 semaphore(%675 : memref<!tpu.dma_semaphore, #tpu.memory_space<semaphore_mem>>) src(%672 : memref<1x128xf32, #tpu.memory_space<any>>) dst(%673 : memref<1x128xf32, #tpu.memory_space<vmem>>)
    %c41_i32_540 = arith.constant 41 : i32
    %c0_i32_541 = arith.constant 0 : i32
    %676 = tpu.memref_slice %arg2[%331, %c0_i32_541] : memref<50x128xf32, #tpu.memory_space<any>> -> memref<1x128xf32, #tpu.memory_space<any>>
    %c41_i32_542 = arith.constant 41 : i32
    %c0_i32_543 = arith.constant 0 : i32
    %677 = tpu.memref_slice %arg7[%c41_i32_542, %c0_i32_543] : memref<64x128xf32, #tpu.memory_space<vmem>> -> memref<1x128xf32, #tpu.memory_space<vmem>>
    %678 = tpu.memref_slice %arg8[%c41_i32_540] : memref<64x!tpu.dma_semaphore, #tpu.memory_space<semaphore_mem>> -> memref<1x!tpu.dma_semaphore, #tpu.memory_space<semaphore_mem>>
    %679 = tpu.memref_squeeze %678 : memref<1x!tpu.dma_semaphore, #tpu.memory_space<semaphore_mem>> -> memref<!tpu.dma_semaphore, #tpu.memory_space<semaphore_mem>>
    tpu.wait_dma2 semaphore(%679 : memref<!tpu.dma_semaphore, #tpu.memory_space<semaphore_mem>>) src(%676 : memref<1x128xf32, #tpu.memory_space<any>>) dst(%677 : memref<1x128xf32, #tpu.memory_space<vmem>>)
    %c42_i32_544 = arith.constant 42 : i32
    %c0_i32_545 = arith.constant 0 : i32
    %680 = tpu.memref_slice %arg2[%339, %c0_i32_545] : memref<50x128xf32, #tpu.memory_space<any>> -> memref<1x128xf32, #tpu.memory_space<any>>
    %c42_i32_546 = arith.constant 42 : i32
    %c0_i32_547 = arith.constant 0 : i32
    %681 = tpu.memref_slice %arg7[%c42_i32_546, %c0_i32_547] : memref<64x128xf32, #tpu.memory_space<vmem>> -> memref<1x128xf32, #tpu.memory_space<vmem>>
    %682 = tpu.memref_slice %arg8[%c42_i32_544] : memref<64x!tpu.dma_semaphore, #tpu.memory_space<semaphore_mem>> -> memref<1x!tpu.dma_semaphore, #tpu.memory_space<semaphore_mem>>
    %683 = tpu.memref_squeeze %682 : memref<1x!tpu.dma_semaphore, #tpu.memory_space<semaphore_mem>> -> memref<!tpu.dma_semaphore, #tpu.memory_space<semaphore_mem>>
    tpu.wait_dma2 semaphore(%683 : memref<!tpu.dma_semaphore, #tpu.memory_space<semaphore_mem>>) src(%680 : memref<1x128xf32, #tpu.memory_space<any>>) dst(%681 : memref<1x128xf32, #tpu.memory_space<vmem>>)
    %c43_i32_548 = arith.constant 43 : i32
    %c0_i32_549 = arith.constant 0 : i32
    %684 = tpu.memref_slice %arg2[%347, %c0_i32_549] : memref<50x128xf32, #tpu.memory_space<any>> -> memref<1x128xf32, #tpu.memory_space<any>>
    %c43_i32_550 = arith.constant 43 : i32
    %c0_i32_551 = arith.constant 0 : i32
    %685 = tpu.memref_slice %arg7[%c43_i32_550, %c0_i32_551] : memref<64x128xf32, #tpu.memory_space<vmem>> -> memref<1x128xf32, #tpu.memory_space<vmem>>
    %686 = tpu.memref_slice %arg8[%c43_i32_548] : memref<64x!tpu.dma_semaphore, #tpu.memory_space<semaphore_mem>> -> memref<1x!tpu.dma_semaphore, #tpu.memory_space<semaphore_mem>>
    %687 = tpu.memref_squeeze %686 : memref<1x!tpu.dma_semaphore, #tpu.memory_space<semaphore_mem>> -> memref<!tpu.dma_semaphore, #tpu.memory_space<semaphore_mem>>
    tpu.wait_dma2 semaphore(%687 : memref<!tpu.dma_semaphore, #tpu.memory_space<semaphore_mem>>) src(%684 : memref<1x128xf32, #tpu.memory_space<any>>) dst(%685 : memref<1x128xf32, #tpu.memory_space<vmem>>)
    %c44_i32_552 = arith.constant 44 : i32
    %c0_i32_553 = arith.constant 0 : i32
    %688 = tpu.memref_slice %arg2[%355, %c0_i32_553] : memref<50x128xf32, #tpu.memory_space<any>> -> memref<1x128xf32, #tpu.memory_space<any>>
    %c44_i32_554 = arith.constant 44 : i32
    %c0_i32_555 = arith.constant 0 : i32
    %689 = tpu.memref_slice %arg7[%c44_i32_554, %c0_i32_555] : memref<64x128xf32, #tpu.memory_space<vmem>> -> memref<1x128xf32, #tpu.memory_space<vmem>>
    %690 = tpu.memref_slice %arg8[%c44_i32_552] : memref<64x!tpu.dma_semaphore, #tpu.memory_space<semaphore_mem>> -> memref<1x!tpu.dma_semaphore, #tpu.memory_space<semaphore_mem>>
    %691 = tpu.memref_squeeze %690 : memref<1x!tpu.dma_semaphore, #tpu.memory_space<semaphore_mem>> -> memref<!tpu.dma_semaphore, #tpu.memory_space<semaphore_mem>>
    tpu.wait_dma2 semaphore(%691 : memref<!tpu.dma_semaphore, #tpu.memory_space<semaphore_mem>>) src(%688 : memref<1x128xf32, #tpu.memory_space<any>>) dst(%689 : memref<1x128xf32, #tpu.memory_space<vmem>>)
    %c45_i32_556 = arith.constant 45 : i32
    %c0_i32_557 = arith.constant 0 : i32
    %692 = tpu.memref_slice %arg2[%363, %c0_i32_557] : memref<50x128xf32, #tpu.memory_space<any>> -> memref<1x128xf32, #tpu.memory_space<any>>
    %c45_i32_558 = arith.constant 45 : i32
    %c0_i32_559 = arith.constant 0 : i32
    %693 = tpu.memref_slice %arg7[%c45_i32_558, %c0_i32_559] : memref<64x128xf32, #tpu.memory_space<vmem>> -> memref<1x128xf32, #tpu.memory_space<vmem>>
    %694 = tpu.memref_slice %arg8[%c45_i32_556] : memref<64x!tpu.dma_semaphore, #tpu.memory_space<semaphore_mem>> -> memref<1x!tpu.dma_semaphore, #tpu.memory_space<semaphore_mem>>
    %695 = tpu.memref_squeeze %694 : memref<1x!tpu.dma_semaphore, #tpu.memory_space<semaphore_mem>> -> memref<!tpu.dma_semaphore, #tpu.memory_space<semaphore_mem>>
    tpu.wait_dma2 semaphore(%695 : memref<!tpu.dma_semaphore, #tpu.memory_space<semaphore_mem>>) src(%692 : memref<1x128xf32, #tpu.memory_space<any>>) dst(%693 : memref<1x128xf32, #tpu.memory_space<vmem>>)
    %c46_i32_560 = arith.constant 46 : i32
    %c0_i32_561 = arith.constant 0 : i32
    %696 = tpu.memref_slice %arg2[%371, %c0_i32_561] : memref<50x128xf32, #tpu.memory_space<any>> -> memref<1x128xf32, #tpu.memory_space<any>>
    %c46_i32_562 = arith.constant 46 : i32
    %c0_i32_563 = arith.constant 0 : i32
    %697 = tpu.memref_slice %arg7[%c46_i32_562, %c0_i32_563] : memref<64x128xf32, #tpu.memory_space<vmem>> -> memref<1x128xf32, #tpu.memory_space<vmem>>
    %698 = tpu.memref_slice %arg8[%c46_i32_560] : memref<64x!tpu.dma_semaphore, #tpu.memory_space<semaphore_mem>> -> memref<1x!tpu.dma_semaphore, #tpu.memory_space<semaphore_mem>>
    %699 = tpu.memref_squeeze %698 : memref<1x!tpu.dma_semaphore, #tpu.memory_space<semaphore_mem>> -> memref<!tpu.dma_semaphore, #tpu.memory_space<semaphore_mem>>
    tpu.wait_dma2 semaphore(%699 : memref<!tpu.dma_semaphore, #tpu.memory_space<semaphore_mem>>) src(%696 : memref<1x128xf32, #tpu.memory_space<any>>) dst(%697 : memref<1x128xf32, #tpu.memory_space<vmem>>)
    %c47_i32_564 = arith.constant 47 : i32
    %c0_i32_565 = arith.constant 0 : i32
    %700 = tpu.memref_slice %arg2[%379, %c0_i32_565] : memref<50x128xf32, #tpu.memory_space<any>> -> memref<1x128xf32, #tpu.memory_space<any>>
    %c47_i32_566 = arith.constant 47 : i32
    %c0_i32_567 = arith.constant 0 : i32
    %701 = tpu.memref_slice %arg7[%c47_i32_566, %c0_i32_567] : memref<64x128xf32, #tpu.memory_space<vmem>> -> memref<1x128xf32, #tpu.memory_space<vmem>>
    %702 = tpu.memref_slice %arg8[%c47_i32_564] : memref<64x!tpu.dma_semaphore, #tpu.memory_space<semaphore_mem>> -> memref<1x!tpu.dma_semaphore, #tpu.memory_space<semaphore_mem>>
    %703 = tpu.memref_squeeze %702 : memref<1x!tpu.dma_semaphore, #tpu.memory_space<semaphore_mem>> -> memref<!tpu.dma_semaphore, #tpu.memory_space<semaphore_mem>>
    tpu.wait_dma2 semaphore(%703 : memref<!tpu.dma_semaphore, #tpu.memory_space<semaphore_mem>>) src(%700 : memref<1x128xf32, #tpu.memory_space<any>>) dst(%701 : memref<1x128xf32, #tpu.memory_space<vmem>>)
    %c48_i32_568 = arith.constant 48 : i32
    %c0_i32_569 = arith.constant 0 : i32
    %704 = tpu.memref_slice %arg2[%387, %c0_i32_569] : memref<50x128xf32, #tpu.memory_space<any>> -> memref<1x128xf32, #tpu.memory_space<any>>
    %c48_i32_570 = arith.constant 48 : i32
    %c0_i32_571 = arith.constant 0 : i32
    %705 = tpu.memref_slice %arg7[%c48_i32_570, %c0_i32_571] : memref<64x128xf32, #tpu.memory_space<vmem>> -> memref<1x128xf32, #tpu.memory_space<vmem>>
    %706 = tpu.memref_slice %arg8[%c48_i32_568] : memref<64x!tpu.dma_semaphore, #tpu.memory_space<semaphore_mem>> -> memref<1x!tpu.dma_semaphore, #tpu.memory_space<semaphore_mem>>
    %707 = tpu.memref_squeeze %706 : memref<1x!tpu.dma_semaphore, #tpu.memory_space<semaphore_mem>> -> memref<!tpu.dma_semaphore, #tpu.memory_space<semaphore_mem>>
    tpu.wait_dma2 semaphore(%707 : memref<!tpu.dma_semaphore, #tpu.memory_space<semaphore_mem>>) src(%704 : memref<1x128xf32, #tpu.memory_space<any>>) dst(%705 : memref<1x128xf32, #tpu.memory_space<vmem>>)
    %c49_i32_572 = arith.constant 49 : i32
    %c0_i32_573 = arith.constant 0 : i32
    %708 = tpu.memref_slice %arg2[%395, %c0_i32_573] : memref<50x128xf32, #tpu.memory_space<any>> -> memref<1x128xf32, #tpu.memory_space<any>>
    %c49_i32_574 = arith.constant 49 : i32
    %c0_i32_575 = arith.constant 0 : i32
    %709 = tpu.memref_slice %arg7[%c49_i32_574, %c0_i32_575] : memref<64x128xf32, #tpu.memory_space<vmem>> -> memref<1x128xf32, #tpu.memory_space<vmem>>
    %710 = tpu.memref_slice %arg8[%c49_i32_572] : memref<64x!tpu.dma_semaphore, #tpu.memory_space<semaphore_mem>> -> memref<1x!tpu.dma_semaphore, #tpu.memory_space<semaphore_mem>>
    %711 = tpu.memref_squeeze %710 : memref<1x!tpu.dma_semaphore, #tpu.memory_space<semaphore_mem>> -> memref<!tpu.dma_semaphore, #tpu.memory_space<semaphore_mem>>
    tpu.wait_dma2 semaphore(%711 : memref<!tpu.dma_semaphore, #tpu.memory_space<semaphore_mem>>) src(%708 : memref<1x128xf32, #tpu.memory_space<any>>) dst(%709 : memref<1x128xf32, #tpu.memory_space<vmem>>)
    %c50_i32_576 = arith.constant 50 : i32
    %c0_i32_577 = arith.constant 0 : i32
    %712 = tpu.memref_slice %arg2[%403, %c0_i32_577] : memref<50x128xf32, #tpu.memory_space<any>> -> memref<1x128xf32, #tpu.memory_space<any>>
    %c50_i32_578 = arith.constant 50 : i32
    %c0_i32_579 = arith.constant 0 : i32
    %713 = tpu.memref_slice %arg7[%c50_i32_578, %c0_i32_579] : memref<64x128xf32, #tpu.memory_space<vmem>> -> memref<1x128xf32, #tpu.memory_space<vmem>>
    %714 = tpu.memref_slice %arg8[%c50_i32_576] : memref<64x!tpu.dma_semaphore, #tpu.memory_space<semaphore_mem>> -> memref<1x!tpu.dma_semaphore, #tpu.memory_space<semaphore_mem>>
    %715 = tpu.memref_squeeze %714 : memref<1x!tpu.dma_semaphore, #tpu.memory_space<semaphore_mem>> -> memref<!tpu.dma_semaphore, #tpu.memory_space<semaphore_mem>>
    tpu.wait_dma2 semaphore(%715 : memref<!tpu.dma_semaphore, #tpu.memory_space<semaphore_mem>>) src(%712 : memref<1x128xf32, #tpu.memory_space<any>>) dst(%713 : memref<1x128xf32, #tpu.memory_space<vmem>>)
    %c51_i32_580 = arith.constant 51 : i32
    %c0_i32_581 = arith.constant 0 : i32
    %716 = tpu.memref_slice %arg2[%411, %c0_i32_581] : memref<50x128xf32, #tpu.memory_space<any>> -> memref<1x128xf32, #tpu.memory_space<any>>
    %c51_i32_582 = arith.constant 51 : i32
    %c0_i32_583 = arith.constant 0 : i32
    %717 = tpu.memref_slice %arg7[%c51_i32_582, %c0_i32_583] : memref<64x128xf32, #tpu.memory_space<vmem>> -> memref<1x128xf32, #tpu.memory_space<vmem>>
    %718 = tpu.memref_slice %arg8[%c51_i32_580] : memref<64x!tpu.dma_semaphore, #tpu.memory_space<semaphore_mem>> -> memref<1x!tpu.dma_semaphore, #tpu.memory_space<semaphore_mem>>
    %719 = tpu.memref_squeeze %718 : memref<1x!tpu.dma_semaphore, #tpu.memory_space<semaphore_mem>> -> memref<!tpu.dma_semaphore, #tpu.memory_space<semaphore_mem>>
    tpu.wait_dma2 semaphore(%719 : memref<!tpu.dma_semaphore, #tpu.memory_space<semaphore_mem>>) src(%716 : memref<1x128xf32, #tpu.memory_space<any>>) dst(%717 : memref<1x128xf32, #tpu.memory_space<vmem>>)
    %c52_i32_584 = arith.constant 52 : i32
    %c0_i32_585 = arith.constant 0 : i32
    %720 = tpu.memref_slice %arg2[%419, %c0_i32_585] : memref<50x128xf32, #tpu.memory_space<any>> -> memref<1x128xf32, #tpu.memory_space<any>>
    %c52_i32_586 = arith.constant 52 : i32
    %c0_i32_587 = arith.constant 0 : i32
    %721 = tpu.memref_slice %arg7[%c52_i32_586, %c0_i32_587] : memref<64x128xf32, #tpu.memory_space<vmem>> -> memref<1x128xf32, #tpu.memory_space<vmem>>
    %722 = tpu.memref_slice %arg8[%c52_i32_584] : memref<64x!tpu.dma_semaphore, #tpu.memory_space<semaphore_mem>> -> memref<1x!tpu.dma_semaphore, #tpu.memory_space<semaphore_mem>>
    %723 = tpu.memref_squeeze %722 : memref<1x!tpu.dma_semaphore, #tpu.memory_space<semaphore_mem>> -> memref<!tpu.dma_semaphore, #tpu.memory_space<semaphore_mem>>
    tpu.wait_dma2 semaphore(%723 : memref<!tpu.dma_semaphore, #tpu.memory_space<semaphore_mem>>) src(%720 : memref<1x128xf32, #tpu.memory_space<any>>) dst(%721 : memref<1x128xf32, #tpu.memory_space<vmem>>)
    %c53_i32_588 = arith.constant 53 : i32
    %c0_i32_589 = arith.constant 0 : i32
    %724 = tpu.memref_slice %arg2[%427, %c0_i32_589] : memref<50x128xf32, #tpu.memory_space<any>> -> memref<1x128xf32, #tpu.memory_space<any>>
    %c53_i32_590 = arith.constant 53 : i32
    %c0_i32_591 = arith.constant 0 : i32
    %725 = tpu.memref_slice %arg7[%c53_i32_590, %c0_i32_591] : memref<64x128xf32, #tpu.memory_space<vmem>> -> memref<1x128xf32, #tpu.memory_space<vmem>>
    %726 = tpu.memref_slice %arg8[%c53_i32_588] : memref<64x!tpu.dma_semaphore, #tpu.memory_space<semaphore_mem>> -> memref<1x!tpu.dma_semaphore, #tpu.memory_space<semaphore_mem>>
    %727 = tpu.memref_squeeze %726 : memref<1x!tpu.dma_semaphore, #tpu.memory_space<semaphore_mem>> -> memref<!tpu.dma_semaphore, #tpu.memory_space<semaphore_mem>>
    tpu.wait_dma2 semaphore(%727 : memref<!tpu.dma_semaphore, #tpu.memory_space<semaphore_mem>>) src(%724 : memref<1x128xf32, #tpu.memory_space<any>>) dst(%725 : memref<1x128xf32, #tpu.memory_space<vmem>>)
    %c54_i32_592 = arith.constant 54 : i32
    %c0_i32_593 = arith.constant 0 : i32
    %728 = tpu.memref_slice %arg2[%435, %c0_i32_593] : memref<50x128xf32, #tpu.memory_space<any>> -> memref<1x128xf32, #tpu.memory_space<any>>
    %c54_i32_594 = arith.constant 54 : i32
    %c0_i32_595 = arith.constant 0 : i32
    %729 = tpu.memref_slice %arg7[%c54_i32_594, %c0_i32_595] : memref<64x128xf32, #tpu.memory_space<vmem>> -> memref<1x128xf32, #tpu.memory_space<vmem>>
    %730 = tpu.memref_slice %arg8[%c54_i32_592] : memref<64x!tpu.dma_semaphore, #tpu.memory_space<semaphore_mem>> -> memref<1x!tpu.dma_semaphore, #tpu.memory_space<semaphore_mem>>
    %731 = tpu.memref_squeeze %730 : memref<1x!tpu.dma_semaphore, #tpu.memory_space<semaphore_mem>> -> memref<!tpu.dma_semaphore, #tpu.memory_space<semaphore_mem>>
    tpu.wait_dma2 semaphore(%731 : memref<!tpu.dma_semaphore, #tpu.memory_space<semaphore_mem>>) src(%728 : memref<1x128xf32, #tpu.memory_space<any>>) dst(%729 : memref<1x128xf32, #tpu.memory_space<vmem>>)
    %c55_i32_596 = arith.constant 55 : i32
    %c0_i32_597 = arith.constant 0 : i32
    %732 = tpu.memref_slice %arg2[%443, %c0_i32_597] : memref<50x128xf32, #tpu.memory_space<any>> -> memref<1x128xf32, #tpu.memory_space<any>>
    %c55_i32_598 = arith.constant 55 : i32
    %c0_i32_599 = arith.constant 0 : i32
    %733 = tpu.memref_slice %arg7[%c55_i32_598, %c0_i32_599] : memref<64x128xf32, #tpu.memory_space<vmem>> -> memref<1x128xf32, #tpu.memory_space<vmem>>
    %734 = tpu.memref_slice %arg8[%c55_i32_596] : memref<64x!tpu.dma_semaphore, #tpu.memory_space<semaphore_mem>> -> memref<1x!tpu.dma_semaphore, #tpu.memory_space<semaphore_mem>>
    %735 = tpu.memref_squeeze %734 : memref<1x!tpu.dma_semaphore, #tpu.memory_space<semaphore_mem>> -> memref<!tpu.dma_semaphore, #tpu.memory_space<semaphore_mem>>
    tpu.wait_dma2 semaphore(%735 : memref<!tpu.dma_semaphore, #tpu.memory_space<semaphore_mem>>) src(%732 : memref<1x128xf32, #tpu.memory_space<any>>) dst(%733 : memref<1x128xf32, #tpu.memory_space<vmem>>)
    %c56_i32_600 = arith.constant 56 : i32
    %c0_i32_601 = arith.constant 0 : i32
    %736 = tpu.memref_slice %arg2[%451, %c0_i32_601] : memref<50x128xf32, #tpu.memory_space<any>> -> memref<1x128xf32, #tpu.memory_space<any>>
    %c56_i32_602 = arith.constant 56 : i32
    %c0_i32_603 = arith.constant 0 : i32
    %737 = tpu.memref_slice %arg7[%c56_i32_602, %c0_i32_603] : memref<64x128xf32, #tpu.memory_space<vmem>> -> memref<1x128xf32, #tpu.memory_space<vmem>>
    %738 = tpu.memref_slice %arg8[%c56_i32_600] : memref<64x!tpu.dma_semaphore, #tpu.memory_space<semaphore_mem>> -> memref<1x!tpu.dma_semaphore, #tpu.memory_space<semaphore_mem>>
    %739 = tpu.memref_squeeze %738 : memref<1x!tpu.dma_semaphore, #tpu.memory_space<semaphore_mem>> -> memref<!tpu.dma_semaphore, #tpu.memory_space<semaphore_mem>>
    tpu.wait_dma2 semaphore(%739 : memref<!tpu.dma_semaphore, #tpu.memory_space<semaphore_mem>>) src(%736 : memref<1x128xf32, #tpu.memory_space<any>>) dst(%737 : memref<1x128xf32, #tpu.memory_space<vmem>>)
    %c57_i32_604 = arith.constant 57 : i32
    %c0_i32_605 = arith.constant 0 : i32
    %740 = tpu.memref_slice %arg2[%459, %c0_i32_605] : memref<50x128xf32, #tpu.memory_space<any>> -> memref<1x128xf32, #tpu.memory_space<any>>
    %c57_i32_606 = arith.constant 57 : i32
    %c0_i32_607 = arith.constant 0 : i32
    %741 = tpu.memref_slice %arg7[%c57_i32_606, %c0_i32_607] : memref<64x128xf32, #tpu.memory_space<vmem>> -> memref<1x128xf32, #tpu.memory_space<vmem>>
    %742 = tpu.memref_slice %arg8[%c57_i32_604] : memref<64x!tpu.dma_semaphore, #tpu.memory_space<semaphore_mem>> -> memref<1x!tpu.dma_semaphore, #tpu.memory_space<semaphore_mem>>
    %743 = tpu.memref_squeeze %742 : memref<1x!tpu.dma_semaphore, #tpu.memory_space<semaphore_mem>> -> memref<!tpu.dma_semaphore, #tpu.memory_space<semaphore_mem>>
    tpu.wait_dma2 semaphore(%743 : memref<!tpu.dma_semaphore, #tpu.memory_space<semaphore_mem>>) src(%740 : memref<1x128xf32, #tpu.memory_space<any>>) dst(%741 : memref<1x128xf32, #tpu.memory_space<vmem>>)
    %c58_i32_608 = arith.constant 58 : i32
    %c0_i32_609 = arith.constant 0 : i32
    %744 = tpu.memref_slice %arg2[%467, %c0_i32_609] : memref<50x128xf32, #tpu.memory_space<any>> -> memref<1x128xf32, #tpu.memory_space<any>>
    %c58_i32_610 = arith.constant 58 : i32
    %c0_i32_611 = arith.constant 0 : i32
    %745 = tpu.memref_slice %arg7[%c58_i32_610, %c0_i32_611] : memref<64x128xf32, #tpu.memory_space<vmem>> -> memref<1x128xf32, #tpu.memory_space<vmem>>
    %746 = tpu.memref_slice %arg8[%c58_i32_608] : memref<64x!tpu.dma_semaphore, #tpu.memory_space<semaphore_mem>> -> memref<1x!tpu.dma_semaphore, #tpu.memory_space<semaphore_mem>>
    %747 = tpu.memref_squeeze %746 : memref<1x!tpu.dma_semaphore, #tpu.memory_space<semaphore_mem>> -> memref<!tpu.dma_semaphore, #tpu.memory_space<semaphore_mem>>
    tpu.wait_dma2 semaphore(%747 : memref<!tpu.dma_semaphore, #tpu.memory_space<semaphore_mem>>) src(%744 : memref<1x128xf32, #tpu.memory_space<any>>) dst(%745 : memref<1x128xf32, #tpu.memory_space<vmem>>)
    %c59_i32_612 = arith.constant 59 : i32
    %c0_i32_613 = arith.constant 0 : i32
    %748 = tpu.memref_slice %arg2[%475, %c0_i32_613] : memref<50x128xf32, #tpu.memory_space<any>> -> memref<1x128xf32, #tpu.memory_space<any>>
    %c59_i32_614 = arith.constant 59 : i32
    %c0_i32_615 = arith.constant 0 : i32
    %749 = tpu.memref_slice %arg7[%c59_i32_614, %c0_i32_615] : memref<64x128xf32, #tpu.memory_space<vmem>> -> memref<1x128xf32, #tpu.memory_space<vmem>>
    %750 = tpu.memref_slice %arg8[%c59_i32_612] : memref<64x!tpu.dma_semaphore, #tpu.memory_space<semaphore_mem>> -> memref<1x!tpu.dma_semaphore, #tpu.memory_space<semaphore_mem>>
    %751 = tpu.memref_squeeze %750 : memref<1x!tpu.dma_semaphore, #tpu.memory_space<semaphore_mem>> -> memref<!tpu.dma_semaphore, #tpu.memory_space<semaphore_mem>>
    tpu.wait_dma2 semaphore(%751 : memref<!tpu.dma_semaphore, #tpu.memory_space<semaphore_mem>>) src(%748 : memref<1x128xf32, #tpu.memory_space<any>>) dst(%749 : memref<1x128xf32, #tpu.memory_space<vmem>>)
    %c60_i32_616 = arith.constant 60 : i32
    %c0_i32_617 = arith.constant 0 : i32
    %752 = tpu.memref_slice %arg2[%483, %c0_i32_617] : memref<50x128xf32, #tpu.memory_space<any>> -> memref<1x128xf32, #tpu.memory_space<any>>
    %c60_i32_618 = arith.constant 60 : i32
    %c0_i32_619 = arith.constant 0 : i32
    %753 = tpu.memref_slice %arg7[%c60_i32_618, %c0_i32_619] : memref<64x128xf32, #tpu.memory_space<vmem>> -> memref<1x128xf32, #tpu.memory_space<vmem>>
    %754 = tpu.memref_slice %arg8[%c60_i32_616] : memref<64x!tpu.dma_semaphore, #tpu.memory_space<semaphore_mem>> -> memref<1x!tpu.dma_semaphore, #tpu.memory_space<semaphore_mem>>
    %755 = tpu.memref_squeeze %754 : memref<1x!tpu.dma_semaphore, #tpu.memory_space<semaphore_mem>> -> memref<!tpu.dma_semaphore, #tpu.memory_space<semaphore_mem>>
    tpu.wait_dma2 semaphore(%755 : memref<!tpu.dma_semaphore, #tpu.memory_space<semaphore_mem>>) src(%752 : memref<1x128xf32, #tpu.memory_space<any>>) dst(%753 : memref<1x128xf32, #tpu.memory_space<vmem>>)
    %c61_i32_620 = arith.constant 61 : i32
    %c0_i32_621 = arith.constant 0 : i32
    %756 = tpu.memref_slice %arg2[%491, %c0_i32_621] : memref<50x128xf32, #tpu.memory_space<any>> -> memref<1x128xf32, #tpu.memory_space<any>>
    %c61_i32_622 = arith.constant 61 : i32
    %c0_i32_623 = arith.constant 0 : i32
    %757 = tpu.memref_slice %arg7[%c61_i32_622, %c0_i32_623] : memref<64x128xf32, #tpu.memory_space<vmem>> -> memref<1x128xf32, #tpu.memory_space<vmem>>
    %758 = tpu.memref_slice %arg8[%c61_i32_620] : memref<64x!tpu.dma_semaphore, #tpu.memory_space<semaphore_mem>> -> memref<1x!tpu.dma_semaphore, #tpu.memory_space<semaphore_mem>>
    %759 = tpu.memref_squeeze %758 : memref<1x!tpu.dma_semaphore, #tpu.memory_space<semaphore_mem>> -> memref<!tpu.dma_semaphore, #tpu.memory_space<semaphore_mem>>
    tpu.wait_dma2 semaphore(%759 : memref<!tpu.dma_semaphore, #tpu.memory_space<semaphore_mem>>) src(%756 : memref<1x128xf32, #tpu.memory_space<any>>) dst(%757 : memref<1x128xf32, #tpu.memory_space<vmem>>)
    %c62_i32_624 = arith.constant 62 : i32
    %c0_i32_625 = arith.constant 0 : i32
    %760 = tpu.memref_slice %arg2[%499, %c0_i32_625] : memref<50x128xf32, #tpu.memory_space<any>> -> memref<1x128xf32, #tpu.memory_space<any>>
    %c62_i32_626 = arith.constant 62 : i32
    %c0_i32_627 = arith.constant 0 : i32
    %761 = tpu.memref_slice %arg7[%c62_i32_626, %c0_i32_627] : memref<64x128xf32, #tpu.memory_space<vmem>> -> memref<1x128xf32, #tpu.memory_space<vmem>>
    %762 = tpu.memref_slice %arg8[%c62_i32_624] : memref<64x!tpu.dma_semaphore, #tpu.memory_space<semaphore_mem>> -> memref<1x!tpu.dma_semaphore, #tpu.memory_space<semaphore_mem>>
    %763 = tpu.memref_squeeze %762 : memref<1x!tpu.dma_semaphore, #tpu.memory_space<semaphore_mem>> -> memref<!tpu.dma_semaphore, #tpu.memory_space<semaphore_mem>>
    tpu.wait_dma2 semaphore(%763 : memref<!tpu.dma_semaphore, #tpu.memory_space<semaphore_mem>>) src(%760 : memref<1x128xf32, #tpu.memory_space<any>>) dst(%761 : memref<1x128xf32, #tpu.memory_space<vmem>>)
    %c63_i32_628 = arith.constant 63 : i32
    %c0_i32_629 = arith.constant 0 : i32
    %764 = tpu.memref_slice %arg2[%507, %c0_i32_629] : memref<50x128xf32, #tpu.memory_space<any>> -> memref<1x128xf32, #tpu.memory_space<any>>
    %c63_i32_630 = arith.constant 63 : i32
    %c0_i32_631 = arith.constant 0 : i32
    %765 = tpu.memref_slice %arg7[%c63_i32_630, %c0_i32_631] : memref<64x128xf32, #tpu.memory_space<vmem>> -> memref<1x128xf32, #tpu.memory_space<vmem>>
    %766 = tpu.memref_slice %arg8[%c63_i32_628] : memref<64x!tpu.dma_semaphore, #tpu.memory_space<semaphore_mem>> -> memref<1x!tpu.dma_semaphore, #tpu.memory_space<semaphore_mem>>
    %767 = tpu.memref_squeeze %766 : memref<1x!tpu.dma_semaphore, #tpu.memory_space<semaphore_mem>> -> memref<!tpu.dma_semaphore, #tpu.memory_space<semaphore_mem>>
    tpu.wait_dma2 semaphore(%767 : memref<!tpu.dma_semaphore, #tpu.memory_space<semaphore_mem>>) src(%764 : memref<1x128xf32, #tpu.memory_space<any>>) dst(%765 : memref<1x128xf32, #tpu.memory_space<vmem>>)
    %c0_632 = arith.constant 0 : index
    %c0_633 = arith.constant 0 : index
    %768 = vector.load %arg7[%c0_632, %c0_633] : memref<64x128xf32, #tpu.memory_space<vmem>>, vector<64x128xf32>
    %769 = vector.shape_cast %768 : vector<64x128xf32> to vector<8x8x128xf32>
    %c0_634 = arith.constant 0 : index
    %c0_635 = arith.constant 0 : index
    %770 = vector.load %arg3[%c0_634, %c0_635] : memref<1x128xf32, #tpu.memory_space<vmem>>, vector<1x128xf32>
    %771 = vector.shape_cast %770 : vector<1x128xf32> to vector<1x1x128xf32>
    %772 = vector.broadcast %771 : vector<1x1x128xf32> to vector<8x8x128xf32>
    %773 = arith.addf %769, %772 : vector<8x8x128xf32>
    %cst = arith.constant 0.000000e+00 : f32
    %774 = vector.broadcast %cst : f32 to vector<8x8x128xf32>
    %775 = arith.maximumf %773, %774 : vector<8x8x128xf32>
    %cst_636 = arith.constant dense<0xFF800000> : vector<8x128xf32>
    %776 = vector.multi_reduction <maximumf>, %775, %cst_636 [1] : vector<8x8x128xf32> to vector<8x128xf32>
    %c0_637 = arith.constant 0 : index
    %c0_638 = arith.constant 0 : index
    %777 = vector.load %arg4[%c0_637, %c0_638] : memref<128x128xf32, #tpu.memory_space<vmem>>, vector<128x128xf32>
    %cst_639 = arith.constant dense<0.000000e+00> : vector<8x128xf32>
    %778 = tpu.matmul %776, %777, %cst_639 {dimension_numbers = #tpu.dot_dimension_numbers<[1], [0], [0], [1], [0, 0, 1, 1], [], []>} : vector<8x128xf32>, vector<128x128xf32>, vector<8x128xf32> -> vector<8x128xf32>
    %c0_640 = arith.constant 0 : index
    %c0_641 = arith.constant 0 : index
    %779 = vector.load %arg5[%c0_640, %c0_641] : memref<1x128xf32, #tpu.memory_space<vmem>>, vector<1x128xf32>
    %780 = vector.broadcast %779 : vector<1x128xf32> to vector<8x128xf32>
    %781 = arith.addf %778, %780 : vector<8x128xf32>
    %c0_642 = arith.constant 0 : index
    %c0_643 = arith.constant 0 : index
    %782 = vector.load %arg6[%c0_642, %c0_643] : memref<8x128xf32, #tpu.memory_space<vmem>>, vector<8x128xf32>
    tpu.vector_store %arg6[%c0_642, %c0_643], %781 {strides = array<i32>} : memref<8x128xf32, #tpu.memory_space<vmem>>, vector<8x128xf32>,
    return
  }
  func.func @transform_1(%arg0: i32, %arg1: memref<8x8xi32, #tpu.memory_space<smem>>) -> (i32, i32) {
    %c0_i32 = arith.constant 0 : i32
    %c0_i32_0 = arith.constant 0 : i32
    %c0_i32_1 = arith.constant 0 : i32
    return %c0_i32, %c0_i32_0 : i32, i32
  }
  func.func @transform_2(%arg0: i32, %arg1: memref<8x8xi32, #tpu.memory_space<smem>>) -> (i32, i32) {
    %c0_i32 = arith.constant 0 : i32
    %c0_i32_0 = arith.constant 0 : i32
    %c0_i32_1 = arith.constant 0 : i32
    return %c0_i32, %c0_i32_0 : i32, i32
  }
  func.func @transform_3(%arg0: i32, %arg1: memref<8x8xi32, #tpu.memory_space<smem>>) -> (i32, i32) {
    %c0_i32 = arith.constant 0 : i32
    %c0_i32_0 = arith.constant 0 : i32
    %c0_i32_1 = arith.constant 0 : i32
    return %c0_i32, %c0_i32_0 : i32, i32
  }
  func.func @transform_4(%arg0: i32, %arg1: memref<8x8xi32, #tpu.memory_space<smem>>) -> (i32, i32) {
    %c0_i32 = arith.constant 0 : i32
    %c0_i32_0 = arith.constant 0 : i32
    return %arg0, %c0_i32 : i32, i32
  }
}

</mosaic_0001>

<llo_original>
// kernel: tpu_custom_call.1
$region0: #{tpu_custom_call.1}
  #allocation0 [shape = 'u32[]', space=smem, size = 0x4, offset = 0x4, fixed_abs, tag = 'smem constant byte address 0x4 - core index']
  #allocation1 [shape = 'u32[144,128]{1,0:T(1,128)}', space=vmem, size = 0x12000, scoped, tag = 'internal scratch']
  #allocation2 [shape = 'f32[64,128]{1,0:T(8,128)}', space=vmem, size = 0x8000, scoped, tag = 'scratch operand']
  #allocation3 [shape = 's32[64]{0}', space=sflag, size = 0x100, scoped, tag = 'scratch operand']
  #allocation4 [shape = 's32[1]{0}', space=sflag, size = 0x4, scoped, tag = 'scoped memory for tpu_custom_call.1']
  #allocation5 [shape = 'u8[4096]{0}', space=smem, size = 0x1000, scoped, tag = 'prefetched SMEM operand 0']
  #allocation10 [shape = 's32[]', space=sflag, size = 0x4, offset = 0, fixed_abs, tag = 'sflag constant byte address 0x0 - dummy sync flag']
  #allocation11 [shape = 's32[]', space=sflag, size = 0x4, offset = 0, fixed_abs, tag = 'sflag constant byte address 0x0 - dummy sync flag']
  #allocation12 [shape = 'u32[]', space=smem, size = 0x4, offset = 0x44, fixed_abs, tag = 'smem constant byte address 0x44 - assertion arg 0']
  #allocation13 [shape = 'u32[]', space=smem, size = 0x4, offset = 0x48, fixed_abs, tag = 'smem constant byte address 0x48 - assertion arg 1']
  #allocation14 [shape = 's32[]', space=sflag, size = 0x4, offset = 0, fixed_abs, tag = 'sflag constant byte address 0x0 - dummy sync flag']
  #allocation15 [shape = 's32[]', space=sflag, size = 0x4, offset = 0, fixed_abs, tag = 'sflag constant byte address 0x0 - dummy sync flag']
  #allocation16 [shape = 's32[]', space=sflag, size = 0x4, offset = 0, fixed_abs, tag = 'sflag constant byte address 0x0 - dummy sync flag']
  #allocation17 [shape = 's32[]', space=sflag, size = 0x4, offset = 0, fixed_abs, tag = 'sflag constant byte address 0x0 - dummy sync flag']
  #allocation18 [shape = 's32[]', space=sflag, size = 0x4, offset = 0, fixed_abs, tag = 'sflag constant byte address 0x0 - dummy sync flag']
  #allocation19 [shape = 's32[]', space=sflag, size = 0x4, offset = 0, fixed_abs, tag = 'sflag constant byte address 0x0 - dummy sync flag']
  #allocation20 [shape = 's32[]', space=sflag, size = 0x4, offset = 0, fixed_abs, tag = 'sflag constant byte address 0x0 - dummy sync flag']
  #allocation21 [shape = 's32[]', space=sflag, size = 0x4, offset = 0, fixed_abs, tag = 'sflag constant byte address 0x0 - dummy sync flag']
  #allocation22 [shape = 's32[]', space=sflag, size = 0x4, offset = 0, fixed_abs, tag = 'sflag constant byte address 0x0 - dummy sync flag']
  #allocation23 [shape = 's32[]', space=sflag, size = 0x4, offset = 0, fixed_abs, tag = 'sflag constant byte address 0x0 - dummy sync flag']
  #allocation24 [shape = 's32[]', space=sflag, size = 0x4, offset = 0, fixed_abs, tag = 'sflag constant byte address 0x0 - dummy sync flag']
  #allocation25 [shape = 's32[]', space=sflag, size = 0x4, offset = 0, fixed_abs, tag = 'sflag constant byte address 0x0 - dummy sync flag']
  #allocation26 [shape = 's32[]', space=sflag, size = 0x4, offset = 0, fixed_abs, tag = 'sflag constant byte address 0x0 - dummy sync flag']
  #allocation27 [shape = 's32[]', space=sflag, size = 0x4, offset = 0, fixed_abs, tag = 'sflag constant byte address 0x0 - dummy sync flag']
  #allocation28 [shape = 's32[]', space=sflag, size = 0x4, offset = 0, fixed_abs, tag = 'sflag constant byte address 0x0 - dummy sync flag']
  #allocation29 [shape = 's32[]', space=sflag, size = 0x4, offset = 0, fixed_abs, tag = 'sflag constant byte address 0x0 - dummy sync flag']
  #allocation30 [shape = 's32[]', space=sflag, size = 0x4, offset = 0, fixed_abs, tag = 'sflag constant byte address 0x0 - dummy sync flag']
  #allocation31 [shape = 's32[]', space=sflag, size = 0x4, offset = 0, fixed_abs, tag = 'sflag constant byte address 0x0 - dummy sync flag']
  #allocation32 [shape = 's32[]', space=sflag, size = 0x4, offset = 0, fixed_abs, tag = 'sflag constant byte address 0x0 - dummy sync flag']
  #allocation33 [shape = 's32[]', space=sflag, size = 0x4, offset = 0, fixed_abs, tag = 'sflag constant byte address 0x0 - dummy sync flag']
  #allocation34 [shape = 's32[]', space=sflag, size = 0x4, offset = 0, fixed_abs, tag = 'sflag constant byte address 0x0 - dummy sync flag']
  #allocation35 [shape = 's32[]', space=sflag, size = 0x4, offset = 0, fixed_abs, tag = 'sflag constant byte address 0x0 - dummy sync flag']
  #allocation36 [shape = 's32[]', space=sflag, size = 0x4, offset = 0, fixed_abs, tag = 'sflag constant byte address 0x0 - dummy sync flag']
  #allocation37 [shape = 's32[]', space=sflag, size = 0x4, offset = 0, fixed_abs, tag = 'sflag constant byte address 0x0 - dummy sync flag']
  #allocation38 [shape = 's32[]', space=sflag, size = 0x4, offset = 0, fixed_abs, tag = 'sflag constant byte address 0x0 - dummy sync flag']
  #allocation39 [shape = 's32[]', space=sflag, size = 0x4, offset = 0, fixed_abs, tag = 'sflag constant byte address 0x0 - dummy sync flag']
  #allocation40 [shape = 's32[]', space=sflag, size = 0x4, offset = 0, fixed_abs, tag = 'sflag constant byte address 0x0 - dummy sync flag']
  #allocation41 [shape = 's32[]', space=sflag, size = 0x4, offset = 0, fixed_abs, tag = 'sflag constant byte address 0x0 - dummy sync flag']
  #allocation42 [shape = 's32[]', space=sflag, size = 0x4, offset = 0, fixed_abs, tag = 'sflag constant byte address 0x0 - dummy sync flag']
  #allocation43 [shape = 's32[]', space=sflag, size = 0x4, offset = 0, fixed_abs, tag = 'sflag constant byte address 0x0 - dummy sync flag']
  #allocation44 [shape = 's32[]', space=sflag, size = 0x4, offset = 0, fixed_abs, tag = 'sflag constant byte address 0x0 - dummy sync flag']
  #allocation45 [shape = 's32[]', space=sflag, size = 0x4, offset = 0, fixed_abs, tag = 'sflag constant byte address 0x0 - dummy sync flag']
  #allocation46 [shape = 's32[]', space=sflag, size = 0x4, offset = 0, fixed_abs, tag = 'sflag constant byte address 0x0 - dummy sync flag']
  #allocation47 [shape = 's32[]', space=sflag, size = 0x4, offset = 0, fixed_abs, tag = 'sflag constant byte address 0x0 - dummy sync flag']
  #allocation48 [shape = 's32[]', space=sflag, size = 0x4, offset = 0, fixed_abs, tag = 'sflag constant byte address 0x0 - dummy sync flag']
  #allocation49 [shape = 's32[]', space=sflag, size = 0x4, offset = 0, fixed_abs, tag = 'sflag constant byte address 0x0 - dummy sync flag']
  #allocation50 [shape = 's32[]', space=sflag, size = 0x4, offset = 0, fixed_abs, tag = 'sflag constant byte address 0x0 - dummy sync flag']
  #allocation51 [shape = 's32[]', space=sflag, size = 0x4, offset = 0, fixed_abs, tag = 'sflag constant byte address 0x0 - dummy sync flag']
  #allocation52 [shape = 's32[]', space=sflag, size = 0x4, offset = 0, fixed_abs, tag = 'sflag constant byte address 0x0 - dummy sync flag']
  #allocation53 [shape = 's32[]', space=sflag, size = 0x4, offset = 0, fixed_abs, tag = 'sflag constant byte address 0x0 - dummy sync flag']
  #allocation54 [shape = 's32[]', space=sflag, size = 0x4, offset = 0, fixed_abs, tag = 'sflag constant byte address 0x0 - dummy sync flag']
  #allocation55 [shape = 's32[]', space=sflag, size = 0x4, offset = 0, fixed_abs, tag = 'sflag constant byte address 0x0 - dummy sync flag']
  #allocation56 [shape = 's32[]', space=sflag, size = 0x4, offset = 0, fixed_abs, tag = 'sflag constant byte address 0x0 - dummy sync flag']
  #allocation57 [shape = 's32[]', space=sflag, size = 0x4, offset = 0, fixed_abs, tag = 'sflag constant byte address 0x0 - dummy sync flag']
  #allocation58 [shape = 's32[]', space=sflag, size = 0x4, offset = 0, fixed_abs, tag = 'sflag constant byte address 0x0 - dummy sync flag']
  #allocation59 [shape = 's32[]', space=sflag, size = 0x4, offset = 0, fixed_abs, tag = 'sflag constant byte address 0x0 - dummy sync flag']
  #allocation60 [shape = 's32[]', space=sflag, size = 0x4, offset = 0, fixed_abs, tag = 'sflag constant byte address 0x0 - dummy sync flag']
  #allocation61 [shape = 's32[]', space=sflag, size = 0x4, offset = 0, fixed_abs, tag = 'sflag constant byte address 0x0 - dummy sync flag']
  #allocation62 [shape = 's32[]', space=sflag, size = 0x4, offset = 0, fixed_abs, tag = 'sflag constant byte address 0x0 - dummy sync flag']
  #allocation63 [shape = 's32[]', space=sflag, size = 0x4, offset = 0, fixed_abs, tag = 'sflag constant byte address 0x0 - dummy sync flag']
  #allocation64 [shape = 's32[]', space=sflag, size = 0x4, offset = 0, fixed_abs, tag = 'sflag constant byte address 0x0 - dummy sync flag']
  #allocation65 [shape = 's32[]', space=sflag, size = 0x4, offset = 0, fixed_abs, tag = 'sflag constant byte address 0x0 - dummy sync flag']
  #allocation66 [shape = 's32[]', space=sflag, size = 0x4, offset = 0, fixed_abs, tag = 'sflag constant byte address 0x0 - dummy sync flag']
  #allocation67 [shape = 's32[]', space=sflag, size = 0x4, offset = 0, fixed_abs, tag = 'sflag constant byte address 0x0 - dummy sync flag']
  #allocation68 [shape = 's32[]', space=sflag, size = 0x4, offset = 0, fixed_abs, tag = 'sflag constant byte address 0x0 - dummy sync flag']
  #allocation69 [shape = 's32[]', space=sflag, size = 0x4, offset = 0, fixed_abs, tag = 'sflag constant byte address 0x0 - dummy sync flag']
  #allocation70 [shape = 's32[]', space=sflag, size = 0x4, offset = 0, fixed_abs, tag = 'sflag constant byte address 0x0 - dummy sync flag']
  #allocation71 [shape = 's32[]', space=sflag, size = 0x4, offset = 0, fixed_abs, tag = 'sflag constant byte address 0x0 - dummy sync flag']
  #allocation72 [shape = 's32[]', space=sflag, size = 0x4, offset = 0, fixed_abs, tag = 'sflag constant byte address 0x0 - dummy sync flag']
  #allocation73 [shape = 's32[]', space=sflag, size = 0x4, offset = 0, fixed_abs, tag = 'sflag constant byte address 0x0 - dummy sync flag']
  #allocation74 [shape = 's32[]', space=sflag, size = 0x4, offset = 0, fixed_abs, tag = 'sflag constant byte address 0x0 - dummy sync flag']
  #allocation75 [shape = 's32[]', space=sflag, size = 0x4, offset = 0, fixed_abs, tag = 'sflag constant byte address 0x0 - dummy sync flag']
  #allocation76 [shape = 's32[]', space=sflag, size = 0x4, offset = 0, fixed_abs, tag = 'sflag constant byte address 0x0 - dummy sync flag']
  #allocation77 [shape = 's32[]', space=sflag, size = 0x4, offset = 0, fixed_abs, tag = 'sflag constant byte address 0x0 - dummy sync flag']
  #allocation78 [shape = 's32[]', space=sflag, size = 0x4, offset = 0, fixed_abs, tag = 'sflag constant byte address 0x0 - dummy sync flag']
  #allocation79 [shape = 's32[]', space=sflag, size = 0x4, offset = 0, fixed_abs, tag = 'sflag constant byte address 0x0 - dummy sync flag']
  #allocation80 [shape = 's32[]', space=sflag, size = 0x4, offset = 0, fixed_abs, tag = 'sflag constant byte address 0x0 - dummy sync flag']
  #allocation81 [shape = 's32[]', space=sflag, size = 0x4, offset = 0, fixed_abs, tag = 'sflag constant byte address 0x0 - dummy sync flag']
  #allocation82 [shape = 's32[]', space=sflag, size = 0x4, offset = 0, fixed_abs, tag = 'sflag constant byte address 0x0 - dummy sync flag']
  #allocation83 [shape = 's32[]', space=sflag, size = 0x4, offset = 0, fixed_abs, tag = 'sflag constant byte address 0x0 - dummy sync flag']
  #allocation84 [shape = 's32[]', space=sflag, size = 0x4, offset = 0, fixed_abs, tag = 'sflag constant byte address 0x0 - dummy sync flag']
  #allocation85 [shape = 's32[]', space=sflag, size = 0x4, offset = 0, fixed_abs, tag = 'sflag constant byte address 0x0 - dummy sync flag']
  #allocation86 [shape = 's32[]', space=sflag, size = 0x4, offset = 0, fixed_abs, tag = 'sflag constant byte address 0x0 - dummy sync flag']
  #allocation87 [shape = 's32[]', space=sflag, size = 0x4, offset = 0, fixed_abs, tag = 'sflag constant byte address 0x0 - dummy sync flag']
  #allocation88 [shape = 's32[]', space=sflag, size = 0x4, offset = 0, fixed_abs, tag = 'sflag constant byte address 0x0 - dummy sync flag']
  #allocation89 [shape = 's32[]', space=sflag, size = 0x4, offset = 0, fixed_abs, tag = 'sflag constant byte address 0x0 - dummy sync flag']
  #allocation90 [shape = 's32[]', space=sflag, size = 0x4, offset = 0, fixed_abs, tag = 'sflag constant byte address 0x0 - dummy sync flag']
  #allocation91 [shape = 's32[]', space=sflag, size = 0x4, offset = 0, fixed_abs, tag = 'sflag constant byte address 0x0 - dummy sync flag']
  #allocation92 [shape = 's32[]', space=sflag, size = 0x4, offset = 0, fixed_abs, tag = 'sflag constant byte address 0x0 - dummy sync flag']
  #allocation93 [shape = 's32[]', space=sflag, size = 0x4, offset = 0, fixed_abs, tag = 'sflag constant byte address 0x0 - dummy sync flag']
  #allocation94 [shape = 's32[]', space=sflag, size = 0x4, offset = 0, fixed_abs, tag = 'sflag constant byte address 0x0 - dummy sync flag']
  #allocation95 [shape = 's32[]', space=sflag, size = 0x4, offset = 0, fixed_abs, tag = 'sflag constant byte address 0x0 - dummy sync flag']
  #allocation96 [shape = 's32[]', space=sflag, size = 0x4, offset = 0, fixed_abs, tag = 'sflag constant byte address 0x0 - dummy sync flag']
  #allocation97 [shape = 's32[]', space=sflag, size = 0x4, offset = 0, fixed_abs, tag = 'sflag constant byte address 0x0 - dummy sync flag']
  #allocation98 [shape = 's32[]', space=sflag, size = 0x4, offset = 0, fixed_abs, tag = 'sflag constant byte address 0x0 - dummy sync flag']
  #allocation99 [shape = 's32[]', space=sflag, size = 0x4, offset = 0, fixed_abs, tag = 'sflag constant byte address 0x0 - dummy sync flag']
  #allocation100 [shape = 's32[]', space=sflag, size = 0x4, offset = 0, fixed_abs, tag = 'sflag constant byte address 0x0 - dummy sync flag']
  #allocation101 [shape = 's32[]', space=sflag, size = 0x4, offset = 0, fixed_abs, tag = 'sflag constant byte address 0x0 - dummy sync flag']
  #allocation102 [shape = 's32[]', space=sflag, size = 0x4, offset = 0, fixed_abs, tag = 'sflag constant byte address 0x0 - dummy sync flag']
  #allocation103 [shape = 's32[]', space=sflag, size = 0x4, offset = 0, fixed_abs, tag = 'sflag constant byte address 0x0 - dummy sync flag']
  #allocation104 [shape = 's32[]', space=sflag, size = 0x4, offset = 0, fixed_abs, tag = 'sflag constant byte address 0x0 - dummy sync flag']
  #allocation105 [shape = 's32[]', space=sflag, size = 0x4, offset = 0, fixed_abs, tag = 'sflag constant byte address 0x0 - dummy sync flag']
  #allocation106 [shape = 's32[]', space=sflag, size = 0x4, offset = 0, fixed_abs, tag = 'sflag constant byte address 0x0 - dummy sync flag']
  #allocation107 [shape = 's32[]', space=sflag, size = 0x4, offset = 0, fixed_abs, tag = 'sflag constant byte address 0x0 - dummy sync flag']
  #allocation108 [shape = 's32[]', space=sflag, size = 0x4, offset = 0, fixed_abs, tag = 'sflag constant byte address 0x0 - dummy sync flag']
  #allocation109 [shape = 's32[]', space=sflag, size = 0x4, offset = 0, fixed_abs, tag = 'sflag constant byte address 0x0 - dummy sync flag']
  #allocation110 [shape = 's32[]', space=sflag, size = 0x4, offset = 0, fixed_abs, tag = 'sflag constant byte address 0x0 - dummy sync flag']
  #allocation111 [shape = 's32[]', space=sflag, size = 0x4, offset = 0, fixed_abs, tag = 'sflag constant byte address 0x0 - dummy sync flag']
  #allocation112 [shape = 's32[]', space=sflag, size = 0x4, offset = 0, fixed_abs, tag = 'sflag constant byte address 0x0 - dummy sync flag']
  #allocation113 [shape = 's32[]', space=sflag, size = 0x4, offset = 0, fixed_abs, tag = 'sflag constant byte address 0x0 - dummy sync flag']
  #allocation114 [shape = 's32[]', space=sflag, size = 0x4, offset = 0, fixed_abs, tag = 'sflag constant byte address 0x0 - dummy sync flag']
  #allocation115 [shape = 's32[]', space=sflag, size = 0x4, offset = 0, fixed_abs, tag = 'sflag constant byte address 0x0 - dummy sync flag']
  #allocation116 [shape = 's32[]', space=sflag, size = 0x4, offset = 0, fixed_abs, tag = 'sflag constant byte address 0x0 - dummy sync flag']
  #allocation117 [shape = 's32[]', space=sflag, size = 0x4, offset = 0, fixed_abs, tag = 'sflag constant byte address 0x0 - dummy sync flag']
  #allocation118 [shape = 's32[]', space=sflag, size = 0x4, offset = 0, fixed_abs, tag = 'sflag constant byte address 0x0 - dummy sync flag']
  #allocation119 [shape = 's32[]', space=sflag, size = 0x4, offset = 0, fixed_abs, tag = 'sflag constant byte address 0x0 - dummy sync flag']
  #allocation120 [shape = 's32[]', space=sflag, size = 0x4, offset = 0, fixed_abs, tag = 'sflag constant byte address 0x0 - dummy sync flag']
  #allocation121 [shape = 's32[]', space=sflag, size = 0x4, offset = 0, fixed_abs, tag = 'sflag constant byte address 0x0 - dummy sync flag']
  #allocation122 [shape = 's32[]', space=sflag, size = 0x4, offset = 0, fixed_abs, tag = 'sflag constant byte address 0x0 - dummy sync flag']
  #allocation123 [shape = 's32[]', space=sflag, size = 0x4, offset = 0, fixed_abs, tag = 'sflag constant byte address 0x0 - dummy sync flag']
  #allocation124 [shape = 's32[]', space=sflag, size = 0x4, offset = 0, fixed_abs, tag = 'sflag constant byte address 0x0 - dummy sync flag']
  #allocation125 [shape = 's32[]', space=sflag, size = 0x4, offset = 0, fixed_abs, tag = 'sflag constant byte address 0x0 - dummy sync flag']
  #allocation126 [shape = 's32[]', space=sflag, size = 0x4, offset = 0, fixed_abs, tag = 'sflag constant byte address 0x0 - dummy sync flag']
  #allocation127 [shape = 's32[]', space=sflag, size = 0x4, offset = 0, fixed_abs, tag = 'sflag constant byte address 0x0 - dummy sync flag']
  #allocation128 [shape = 's32[]', space=sflag, size = 0x4, offset = 0, fixed_abs, tag = 'sflag constant byte address 0x0 - dummy sync flag']
  #allocation129 [shape = 's32[]', space=sflag, size = 0x4, offset = 0, fixed_abs, tag = 'sflag constant byte address 0x0 - dummy sync flag']
  #allocation130 [shape = 's32[]', space=sflag, size = 0x4, offset = 0, fixed_abs, tag = 'sflag constant byte address 0x0 - dummy sync flag']
  #allocation131 [shape = 's32[]', space=sflag, size = 0x4, offset = 0, fixed_abs, tag = 'sflag constant byte address 0x0 - dummy sync flag']
  #allocation132 [shape = 's32[]', space=sflag, size = 0x4, offset = 0, fixed_abs, tag = 'sflag constant byte address 0x0 - dummy sync flag']
  #allocation133 [shape = 's32[]', space=sflag, size = 0x4, offset = 0, fixed_abs, tag = 'sflag constant byte address 0x0 - dummy sync flag']
  #allocation134 [shape = 's32[]', space=sflag, size = 0x4, offset = 0, fixed_abs, tag = 'sflag constant byte address 0x0 - dummy sync flag']
  #allocation135 [shape = 's32[]', space=sflag, size = 0x4, offset = 0, fixed_abs, tag = 'sflag constant byte address 0x0 - dummy sync flag']
  #allocation136 [shape = 's32[]', space=sflag, size = 0x4, offset = 0, fixed_abs, tag = 'sflag constant byte address 0x0 - dummy sync flag']
  #allocation137 [shape = 's32[]', space=sflag, size = 0x4, offset = 0, fixed_abs, tag = 'sflag constant byte address 0x0 - dummy sync flag']
  #allocation138 [shape = 's32[]', space=sflag, size = 0x4, offset = 0, fixed_abs, tag = 'sflag constant byte address 0x0 - dummy sync flag']
  #allocation139 [shape = 's32[]', space=sflag, size = 0x4, offset = 0, fixed_abs, tag = 'sflag constant byte address 0x0 - dummy sync flag']
  %s0 = inlined_call_operand.hbm [shape: s32[8,8], index: 0, kind: input, shape index: {}]
  %s1 = inlined_call_operand.hbm [shape: f32[50,128], index: 1, kind: input, shape index: {}]
  %s2 = inlined_call_operand.vmem [shape: f32[1,128], index: 2, kind: input, shape index: {}]
  %s3 = inlined_call_operand.hbm [shape: f32[128,128], index: 3, kind: input, shape index: {}]
  %s4 = inlined_call_operand.vmem [shape: f32[1,128], index: 4, kind: input, shape index: {}]
  %s5 = inlined_call_operand.hbm [shape: f32[8,128], index: 5, kind: output, shape index: {}]
  %s6 = sld [smem:[#allocation0]]
  $region282: #{tpu_custom_call.1} parent=0
    _
  %s8 = ssub.s32 1, %s6
  %s9 = scalar_select 0, %s8, %s6
  %11 = dma.hbm_to_smem %s0, 128, [#allocation5], [#allocation4]
  %12 = dma.done [#allocation4], 128
  %13 = sfence
  $region1: #{tpu_custom_call.1} parent=0
    #allocation6 [shape = 'u8[65536]{0}', space=vmem, size = 0x10000, scoped, tag = 'input window, operand 3, single buffered']
    #allocation7 [shape = 's32[1]{0}', space=sflag, size = 0x4, scoped, tag = 'scoped memory for tpu_custom_call.1']
    #allocation8 [shape = 's32[1]{0}', space=sflag, size = 0x4, scoped, tag = 'scoped memory for tpu_custom_call.1']
    #allocation9 [shape = 'u8[4096]{0}', space=vmem, size = 0x1000, scoped, tag = 'output window, operand 0, single buffered']
    %14 = vsyncpa [#allocation7], 0
    %15 = vsyncpa [#allocation8], 0
    // Predicated region
    $region2: #{tpu_custom_call.1} parent=1 // pred_check
      _
    $region3: #{tpu_custom_call.1} parent=1 // pred_check_branch
      %17 = sbr.rel (0) target = $region5
    $region4: #{tpu_custom_call.1} parent=1 // pred_region
      _
    $region5: #{tpu_custom_call.1} parent=1 // pred_fallthru
      _
    // Predicated region
    $region6: #{tpu_custom_call.1} parent=1 // pred_check
      _
    $region7: #{tpu_custom_call.1} parent=1 // pred_check_branch
      %19 = sbr.rel (0) target = $region9
    $region8: #{tpu_custom_call.1} parent=1 // pred_region
      %s21 = ssub.s32 2048, 2048
      %22 = vsyncadd [#allocation7], %s21
      %s23 = sshll.u32 [#allocation6], 4
      %s24 = int_to_ptr.vmem [resolvable:$true] %s23
      %29 = dma.hbm_to_vmem [thread:$0]  %s3, 2048, %s24, [#allocation7], 128, 128, 8
    $region9: #{tpu_custom_call.1} parent=1 // pred_fallthru
      _
    // Predicated region
    $region10: #{tpu_custom_call.1} parent=1 // pred_check
      _
    $region11: #{tpu_custom_call.1} parent=1 // pred_check_branch
      %31 = sbr.rel (0) target = $region13
    $region12: #{tpu_custom_call.1} parent=1 // pred_region
      _
    $region13: #{tpu_custom_call.1} parent=1 // pred_fallthru
      _
    // Predicated region
    $region14: #{tpu_custom_call.1} parent=1 // pred_check
      _
    $region15: #{tpu_custom_call.1} parent=1 // pred_check_branch
      %33 = sbr.rel (0) target = $region17
    $region16: #{tpu_custom_call.1} parent=1 // pred_region
      %34 = dma.done [#allocation7], 2048
    $region17: #{tpu_custom_call.1} parent=1 // pred_fallthru
      _
    %s35 = smul.u32 0, 8
    %s36 = smul.u32 %s35, 128
    %s37 = sld [smem:[#allocation5 + %s36]]
    %s38 = smul.addr %s37, 16
    %s39 = scalar_lea.hbm %s1, %s38
    // Predicated region
    $region18: #{tpu_custom_call.1} parent=1 // pred_check
      _
    $region19: #{tpu_custom_call.1} parent=1 // pred_check_branch
      %41 = sbr.rel target = $region21
    $region20: #{tpu_custom_call.1} parent=1 // pred_region
      %42 = sst [smem:[#allocation12]] [#allocation11]
      %43 = sst [smem:[#allocation13]] [#allocation10]
    $region21: #{tpu_custom_call.1} parent=1 // pred_fallthru
      _
    %45 = shalt.err (0)
    %s47 = sshll.u32 [#allocation2], 4
    %s48 = int_to_ptr.vmem [resolvable:$true] %s47
    %50 = dma.hbm_to_vmem [thread:$0]  %s39, 16, %s48, [#allocation3]
    %s51 = sadd.s32 %s36, 1
    %s52 = sld [smem:[#allocation5 + %s51]]
    %s53 = smul.addr %s52, 16
    %s54 = scalar_lea.hbm %s1, %s53
    %s55 = scalar_lea.vmem [#allocation2], 1
    %s56 = scalar_lea.sflag [#allocation3], 1
    // Predicated region
    $region22: #{tpu_custom_call.1} parent=1 // pred_check
      _
    $region23: #{tpu_custom_call.1} parent=1 // pred_check_branch
      %58 = sbr.rel target = $region25
    $region24: #{tpu_custom_call.1} parent=1 // pred_region
      %59 = sst [smem:[#allocation12]] [#allocation15]
      %60 = sst [smem:[#allocation13]] [#allocation14]
    $region25: #{tpu_custom_call.1} parent=1 // pred_fallthru
      _
    %62 = shalt.err (0)
    %s64 = sshll.u32 %s55, 4
    %s65 = int_to_ptr.vmem [resolvable:$true] %s64
    %67 = dma.hbm_to_vmem [thread:$0]  %s54, 16, %s65, %s56
    %s68 = sadd.s32 %s36, 2
    %s69 = sld [smem:[#allocation5 + %s68]]
    %s70 = smul.addr %s69, 16
    %s71 = scalar_lea.hbm %s1, %s70
    %s72 = scalar_lea.vmem [#allocation2], 2
    %s73 = scalar_lea.sflag [#allocation3], 2
    // Predicated region
    $region26: #{tpu_custom_call.1} parent=1 // pred_check
      _
    $region27: #{tpu_custom_call.1} parent=1 // pred_check_branch
      %75 = sbr.rel target = $region29
    $region28: #{tpu_custom_call.1} parent=1 // pred_region
      %76 = sst [smem:[#allocation12]] [#allocation17]
      %77 = sst [smem:[#allocation13]] [#allocation16]
    $region29: #{tpu_custom_call.1} parent=1 // pred_fallthru
      _
    %79 = shalt.err (0)
    %s81 = sshll.u32 %s72, 4
    %s82 = int_to_ptr.vmem [resolvable:$true] %s81
    %84 = dma.hbm_to_vmem [thread:$0]  %s71, 16, %s82, %s73
    %s85 = sadd.s32 %s36, 3
    %s86 = sld [smem:[#allocation5 + %s85]]
    %s87 = smul.addr %s86, 16
    %s88 = scalar_lea.hbm %s1, %s87
    %s89 = scalar_lea.vmem [#allocation2], 3
    %s90 = scalar_lea.sflag [#allocation3], 3
    // Predicated region
    $region30: #{tpu_custom_call.1} parent=1 // pred_check
      _
    $region31: #{tpu_custom_call.1} parent=1 // pred_check_branch
      %92 = sbr.rel target = $region33
    $region32: #{tpu_custom_call.1} parent=1 // pred_region
      %93 = sst [smem:[#allocation12]] [#allocation19]
      %94 = sst [smem:[#allocation13]] [#allocation18]
    $region33: #{tpu_custom_call.1} parent=1 // pred_fallthru
      _
    %96 = shalt.err (0)
    %s98 = sshll.u32 %s89, 4
    %s99 = int_to_ptr.vmem [resolvable:$true] %s98
    %101 = dma.hbm_to_vmem [thread:$0]  %s88, 16, %s99, %s90
    %s102 = sadd.s32 %s36, 4
    %s103 = sld [smem:[#allocation5 + %s102]]
    %s104 = smul.addr %s103, 16
    %s105 = scalar_lea.hbm %s1, %s104
    %s106 = scalar_lea.vmem [#allocation2], 4
    %s107 = scalar_lea.sflag [#allocation3], 4
    // Predicated region
    $region34: #{tpu_custom_call.1} parent=1 // pred_check
      _
    $region35: #{tpu_custom_call.1} parent=1 // pred_check_branch
      %109 = sbr.rel target = $region37
    $region36: #{tpu_custom_call.1} parent=1 // pred_region
      %110 = sst [smem:[#allocation12]] [#allocation21]
      %111 = sst [smem:[#allocation13]] [#allocation20]
    $region37: #{tpu_custom_call.1} parent=1 // pred_fallthru
      _
    %113 = shalt.err (0)
    %s115 = sshll.u32 %s106, 4
    %s116 = int_to_ptr.vmem [resolvable:$true] %s115
    %118 = dma.hbm_to_vmem [thread:$0]  %s105, 16, %s116, %s107
    %s119 = sadd.s32 %s36, 5
    %s120 = sld [smem:[#allocation5 + %s119]]
    %s121 = smul.addr %s120, 16
    %s122 = scalar_lea.hbm %s1, %s121
    %s123 = scalar_lea.vmem [#allocation2], 5
    %s124 = scalar_lea.sflag [#allocation3], 5
    // Predicated region
    $region38: #{tpu_custom_call.1} parent=1 // pred_check
      _
    $region39: #{tpu_custom_call.1} parent=1 // pred_check_branch
      %126 = sbr.rel target = $region41
    $region40: #{tpu_custom_call.1} parent=1 // pred_region
      %127 = sst [smem:[#allocation12]] [#allocation23]
      %128 = sst [smem:[#allocation13]] [#allocation22]
    $region41: #{tpu_custom_call.1} parent=1 // pred_fallthru
      _
    %130 = shalt.err (0)
    %s132 = sshll.u32 %s123, 4
    %s133 = int_to_ptr.vmem [resolvable:$true] %s132
    %135 = dma.hbm_to_vmem [thread:$0]  %s122, 16, %s133, %s124
    %s136 = sadd.s32 %s36, 6
    %s137 = sld [smem:[#allocation5 + %s136]]
    %s138 = smul.addr %s137, 16
    %s139 = scalar_lea.hbm %s1, %s138
    %s140 = scalar_lea.vmem [#allocation2], 6
    %s141 = scalar_lea.sflag [#allocation3], 6
    // Predicated region
    $region42: #{tpu_custom_call.1} parent=1 // pred_check
      _
    $region43: #{tpu_custom_call.1} parent=1 // pred_check_branch
      %143 = sbr.rel target = $region45
    $region44: #{tpu_custom_call.1} parent=1 // pred_region
      %144 = sst [smem:[#allocation12]] [#allocation25]
      %145 = sst [smem:[#allocation13]] [#allocation24]
    $region45: #{tpu_custom_call.1} parent=1 // pred_fallthru
      _
    %147 = shalt.err (0)
    %s149 = sshll.u32 %s140, 4
    %s150 = int_to_ptr.vmem [resolvable:$true] %s149
    %152 = dma.hbm_to_vmem [thread:$0]  %s139, 16, %s150, %s141
    %s153 = sadd.s32 %s36, 7
    %s154 = sld [smem:[#allocation5 + %s153]]
    %s155 = smul.addr %s154, 16
    %s156 = scalar_lea.hbm %s1, %s155
    %s157 = scalar_lea.vmem [#allocation2], 7
    %s158 = scalar_lea.sflag [#allocation3], 7
    // Predicated region
    $region46: #{tpu_custom_call.1} parent=1 // pred_check
      _
    $region47: #{tpu_custom_call.1} parent=1 // pred_check_branch
      %160 = sbr.rel target = $region49
    $region48: #{tpu_custom_call.1} parent=1 // pred_region
      %161 = sst [smem:[#allocation12]] [#allocation27]
      %162 = sst [smem:[#allocation13]] [#allocation26]
    $region49: #{tpu_custom_call.1} parent=1 // pred_fallthru
      _
    %164 = shalt.err (0)
    %s166 = sshll.u32 %s157, 4
    %s167 = int_to_ptr.vmem [resolvable:$true] %s166
    %169 = dma.hbm_to_vmem [thread:$0]  %s156, 16, %s167, %s158
    %s170 = sadd.s32 %s35, 1
    %s171 = smul.u32 %s170, 128
    %s172 = sld [smem:[#allocation5 + %s171]]
    %s173 = smul.addr %s172, 16
    %s174 = scalar_lea.hbm %s1, %s173
    %s175 = scalar_lea.vmem [#allocation2], 8
    %s176 = scalar_lea.sflag [#allocation3], 8
    // Predicated region
    $region50: #{tpu_custom_call.1} parent=1 // pred_check
      _
    $region51: #{tpu_custom_call.1} parent=1 // pred_check_branch
      %178 = sbr.rel target = $region53
    $region52: #{tpu_custom_call.1} parent=1 // pred_region
      %179 = sst [smem:[#allocation12]] [#allocation29]
      %180 = sst [smem:[#allocation13]] [#allocation28]
    $region53: #{tpu_custom_call.1} parent=1 // pred_fallthru
      _
    %182 = shalt.err (0)
    %s184 = sshll.u32 %s175, 4
    %s185 = int_to_ptr.vmem [resolvable:$true] %s184
    %187 = dma.hbm_to_vmem [thread:$0]  %s174, 16, %s185, %s176
    %s188 = sadd.s32 %s171, 1
    %s189 = sld [smem:[#allocation5 + %s188]]
    %s190 = smul.addr %s189, 16
    %s191 = scalar_lea.hbm %s1, %s190
    %s192 = scalar_lea.vmem [#allocation2], 9
    %s193 = scalar_lea.sflag [#allocation3], 9
    // Predicated region
    $region54: #{tpu_custom_call.1} parent=1 // pred_check
      _
    $region55: #{tpu_custom_call.1} parent=1 // pred_check_branch
      %195 = sbr.rel target = $region57
    $region56: #{tpu_custom_call.1} parent=1 // pred_region
      %196 = sst [smem:[#allocation12]] [#allocation31]
      %197 = sst [smem:[#allocation13]] [#allocation30]
    $region57: #{tpu_custom_call.1} parent=1 // pred_fallthru
      _
    %199 = shalt.err (0)
    %s201 = sshll.u32 %s192, 4
    %s202 = int_to_ptr.vmem [resolvable:$true] %s201
    %204 = dma.hbm_to_vmem [thread:$0]  %s191, 16, %s202, %s193
    %s205 = sadd.s32 %s171, 2
    %s206 = sld [smem:[#allocation5 + %s205]]
    %s207 = smul.addr %s206, 16
    %s208 = scalar_lea.hbm %s1, %s207
    %s209 = scalar_lea.vmem [#allocation2], 10
    %s210 = scalar_lea.sflag [#allocation3], 10
    // Predicated region
    $region58: #{tpu_custom_call.1} parent=1 // pred_check
      _
    $region59: #{tpu_custom_call.1} parent=1 // pred_check_branch
      %212 = sbr.rel target = $region61
    $region60: #{tpu_custom_call.1} parent=1 // pred_region
      %213 = sst [smem:[#allocation12]] [#allocation33]
      %214 = sst [smem:[#allocation13]] [#allocation32]
    $region61: #{tpu_custom_call.1} parent=1 // pred_fallthru
      _
    %216 = shalt.err (0)
    %s218 = sshll.u32 %s209, 4
    %s219 = int_to_ptr.vmem [resolvable:$true] %s218
    %221 = dma.hbm_to_vmem [thread:$0]  %s208, 16, %s219, %s210
    %s222 = sadd.s32 %s171, 3
    %s223 = sld [smem:[#allocation5 + %s222]]
    %s224 = smul.addr %s223, 16
    %s225 = scalar_lea.hbm %s1, %s224
    %s226 = scalar_lea.vmem [#allocation2], 11
    %s227 = scalar_lea.sflag [#allocation3], 11
    // Predicated region
    $region62: #{tpu_custom_call.1} parent=1 // pred_check
      _
    $region63: #{tpu_custom_call.1} parent=1 // pred_check_branch
      %229 = sbr.rel target = $region65
    $region64: #{tpu_custom_call.1} parent=1 // pred_region
      %230 = sst [smem:[#allocation12]] [#allocation35]
      %231 = sst [smem:[#allocation13]] [#allocation34]
    $region65: #{tpu_custom_call.1} parent=1 // pred_fallthru
      _
    %233 = shalt.err (0)
    %s235 = sshll.u32 %s226, 4
    %s236 = int_to_ptr.vmem [resolvable:$true] %s235
    %238 = dma.hbm_to_vmem [thread:$0]  %s225, 16, %s236, %s227
    %s239 = sadd.s32 %s171, 4
    %s240 = sld [smem:[#allocation5 + %s239]]
    %s241 = smul.addr %s240, 16
    %s242 = scalar_lea.hbm %s1, %s241
    %s243 = scalar_lea.vmem [#allocation2], 12
    %s244 = scalar_lea.sflag [#allocation3], 12
    // Predicated region
    $region66: #{tpu_custom_call.1} parent=1 // pred_check
      _
    $region67: #{tpu_custom_call.1} parent=1 // pred_check_branch
      %246 = sbr.rel target = $region69
    $region68: #{tpu_custom_call.1} parent=1 // pred_region
      %247 = sst [smem:[#allocation12]] [#allocation37]
      %248 = sst [smem:[#allocation13]] [#allocation36]
    $region69: #{tpu_custom_call.1} parent=1 // pred_fallthru
      _
    %250 = shalt.err (0)
    %s252 = sshll.u32 %s243, 4
    %s253 = int_to_ptr.vmem [resolvable:$true] %s252
    %255 = dma.hbm_to_vmem [thread:$0]  %s242, 16, %s253, %s244
    %s256 = sadd.s32 %s171, 5
    %s257 = sld [smem:[#allocation5 + %s256]]
    %s258 = smul.addr %s257, 16
    %s259 = scalar_lea.hbm %s1, %s258
    %s260 = scalar_lea.vmem [#allocation2], 13
    %s261 = scalar_lea.sflag [#allocation3], 13
    // Predicated region
    $region70: #{tpu_custom_call.1} parent=1 // pred_check
      _
    $region71: #{tpu_custom_call.1} parent=1 // pred_check_branch
      %263 = sbr.rel target = $region73
    $region72: #{tpu_custom_call.1} parent=1 // pred_region
      %264 = sst [smem:[#allocation12]] [#allocation39]
      %265 = sst [smem:[#allocation13]] [#allocation38]
    $region73: #{tpu_custom_call.1} parent=1 // pred_fallthru
      _
    %267 = shalt.err (0)
    %s269 = sshll.u32 %s260, 4
    %s270 = int_to_ptr.vmem [resolvable:$true] %s269
    %272 = dma.hbm_to_vmem [thread:$0]  %s259, 16, %s270, %s261
    %s273 = sadd.s32 %s171, 6
    %s274 = sld [smem:[#allocation5 + %s273]]
    %s275 = smul.addr %s274, 16
    %s276 = scalar_lea.hbm %s1, %s275
    %s277 = scalar_lea.vmem [#allocation2], 14
    %s278 = scalar_lea.sflag [#allocation3], 14
    // Predicated region
    $region74: #{tpu_custom_call.1} parent=1 // pred_check
      _
    $region75: #{tpu_custom_call.1} parent=1 // pred_check_branch
      %280 = sbr.rel target = $region77
    $region76: #{tpu_custom_call.1} parent=1 // pred_region
      %281 = sst [smem:[#allocation12]] [#allocation41]
      %282 = sst [smem:[#allocation13]] [#allocation40]
    $region77: #{tpu_custom_call.1} parent=1 // pred_fallthru
      _
    %284 = shalt.err (0)
    %s286 = sshll.u32 %s277, 4
    %s287 = int_to_ptr.vmem [resolvable:$true] %s286
    %289 = dma.hbm_to_vmem [thread:$0]  %s276, 16, %s287, %s278
    %s290 = sadd.s32 %s171, 7
    %s291 = sld [smem:[#allocation5 + %s290]]
    %s292 = smul.addr %s291, 16
    %s293 = scalar_lea.hbm %s1, %s292
    %s294 = scalar_lea.vmem [#allocation2], 15
    %s295 = scalar_lea.sflag [#allocation3], 15
    // Predicated region
    $region78: #{tpu_custom_call.1} parent=1 // pred_check
      _
    $region79: #{tpu_custom_call.1} parent=1 // pred_check_branch
      %297 = sbr.rel target = $region81
    $region80: #{tpu_custom_call.1} parent=1 // pred_region
      %298 = sst [smem:[#allocation12]] [#allocation43]
      %299 = sst [smem:[#allocation13]] [#allocation42]
    $region81: #{tpu_custom_call.1} parent=1 // pred_fallthru
      _
    %301 = shalt.err (0)
    %s303 = sshll.u32 %s294, 4
    %s304 = int_to_ptr.vmem [resolvable:$true] %s303
    %306 = dma.hbm_to_vmem [thread:$0]  %s293, 16, %s304, %s295
    %s307 = sadd.s32 %s35, 2
    %s308 = smul.u32 %s307, 128
    %s309 = sld [smem:[#allocation5 + %s308]]
    %s310 = smul.addr %s309, 16
    %s311 = scalar_lea.hbm %s1, %s310
    %s312 = scalar_lea.vmem [#allocation2], 16
    %s313 = scalar_lea.sflag [#allocation3], 16
    // Predicated region
    $region82: #{tpu_custom_call.1} parent=1 // pred_check
      _
    $region83: #{tpu_custom_call.1} parent=1 // pred_check_branch
      %315 = sbr.rel target = $region85
    $region84: #{tpu_custom_call.1} parent=1 // pred_region
      %316 = sst [smem:[#allocation12]] [#allocation45]
      %317 = sst [smem:[#allocation13]] [#allocation44]
    $region85: #{tpu_custom_call.1} parent=1 // pred_fallthru
      _
    %319 = shalt.err (0)
    %s321 = sshll.u32 %s312, 4
    %s322 = int_to_ptr.vmem [resolvable:$true] %s321
    %324 = dma.hbm_to_vmem [thread:$0]  %s311, 16, %s322, %s313
    %s325 = sadd.s32 %s308, 1
    %s326 = sld [smem:[#allocation5 + %s325]]
    %s327 = smul.addr %s326, 16
    %s328 = scalar_lea.hbm %s1, %s327
    %s329 = scalar_lea.vmem [#allocation2], 17
    %s330 = scalar_lea.sflag [#allocation3], 17
    // Predicated region
    $region86: #{tpu_custom_call.1} parent=1 // pred_check
      _
    $region87: #{tpu_custom_call.1} parent=1 // pred_check_branch
      %332 = sbr.rel target = $region89
    $region88: #{tpu_custom_call.1} parent=1 // pred_region
      %333 = sst [smem:[#allocation12]] [#allocation47]
      %334 = sst [smem:[#allocation13]] [#allocation46]
    $region89: #{tpu_custom_call.1} parent=1 // pred_fallthru
      _
    %336 = shalt.err (0)
    %s338 = sshll.u32 %s329, 4
    %s339 = int_to_ptr.vmem [resolvable:$true] %s338
    %341 = dma.hbm_to_vmem [thread:$0]  %s328, 16, %s339, %s330
    %s342 = sadd.s32 %s308, 2
    %s343 = sld [smem:[#allocation5 + %s342]]
    %s344 = smul.addr %s343, 16
    %s345 = scalar_lea.hbm %s1, %s344
    %s346 = scalar_lea.vmem [#allocation2], 18
    %s347 = scalar_lea.sflag [#allocation3], 18
    // Predicated region
    $region90: #{tpu_custom_call.1} parent=1 // pred_check
      _
    $region91: #{tpu_custom_call.1} parent=1 // pred_check_branch
      %349 = sbr.rel target = $region93
    $region92: #{tpu_custom_call.1} parent=1 // pred_region
      %350 = sst [smem:[#allocation12]] [#allocation49]
      %351 = sst [smem:[#allocation13]] [#allocation48]
    $region93: #{tpu_custom_call.1} parent=1 // pred_fallthru
      _
    %353 = shalt.err (0)
    %s355 = sshll.u32 %s346, 4
    %s356 = int_to_ptr.vmem [resolvable:$true] %s355
    %358 = dma.hbm_to_vmem [thread:$0]  %s345, 16, %s356, %s347
    %s359 = sadd.s32 %s308, 3
    %s360 = sld [smem:[#allocation5 + %s359]]
    %s361 = smul.addr %s360, 16
    %s362 = scalar_lea.hbm %s1, %s361
    %s363 = scalar_lea.vmem [#allocation2], 19
    %s364 = scalar_lea.sflag [#allocation3], 19
    // Predicated region
    $region94: #{tpu_custom_call.1} parent=1 // pred_check
      _
    $region95: #{tpu_custom_call.1} parent=1 // pred_check_branch
      %366 = sbr.rel target = $region97
    $region96: #{tpu_custom_call.1} parent=1 // pred_region
      %367 = sst [smem:[#allocation12]] [#allocation51]
      %368 = sst [smem:[#allocation13]] [#allocation50]
    $region97: #{tpu_custom_call.1} parent=1 // pred_fallthru
      _
    %370 = shalt.err (0)
    %s372 = sshll.u32 %s363, 4
    %s373 = int_to_ptr.vmem [resolvable:$true] %s372
    %375 = dma.hbm_to_vmem [thread:$0]  %s362, 16, %s373, %s364
    %s376 = sadd.s32 %s308, 4
    %s377 = sld [smem:[#allocation5 + %s376]]
    %s378 = smul.addr %s377, 16
    %s379 = scalar_lea.hbm %s1, %s378
    %s380 = scalar_lea.vmem [#allocation2], 20
    %s381 = scalar_lea.sflag [#allocation3], 20
    // Predicated region
    $region98: #{tpu_custom_call.1} parent=1 // pred_check
      _
    $region99: #{tpu_custom_call.1} parent=1 // pred_check_branch
      %383 = sbr.rel target = $region101
    $region100: #{tpu_custom_call.1} parent=1 // pred_region
      %384 = sst [smem:[#allocation12]] [#allocation53]
      %385 = sst [smem:[#allocation13]] [#allocation52]
    $region101: #{tpu_custom_call.1} parent=1 // pred_fallthru
      _
    %387 = shalt.err (0)
    %s389 = sshll.u32 %s380, 4
    %s390 = int_to_ptr.vmem [resolvable:$true] %s389
    %392 = dma.hbm_to_vmem [thread:$0]  %s379, 16, %s390, %s381
    %s393 = sadd.s32 %s308, 5
    %s394 = sld [smem:[#allocation5 + %s393]]
    %s395 = smul.addr %s394, 16
    %s396 = scalar_lea.hbm %s1, %s395
    %s397 = scalar_lea.vmem [#allocation2], 21
    %s398 = scalar_lea.sflag [#allocation3], 21
    // Predicated region
    $region102: #{tpu_custom_call.1} parent=1 // pred_check
      _
    $region103: #{tpu_custom_call.1} parent=1 // pred_check_branch
      %400 = sbr.rel target = $region105
    $region104: #{tpu_custom_call.1} parent=1 // pred_region
      %401 = sst [smem:[#allocation12]] [#allocation55]
      %402 = sst [smem:[#allocation13]] [#allocation54]
    $region105: #{tpu_custom_call.1} parent=1 // pred_fallthru
      _
    %404 = shalt.err (0)
    %s406 = sshll.u32 %s397, 4
    %s407 = int_to_ptr.vmem [resolvable:$true] %s406
    %409 = dma.hbm_to_vmem [thread:$0]  %s396, 16, %s407, %s398
    %s410 = sadd.s32 %s308, 6
    %s411 = sld [smem:[#allocation5 + %s410]]
    %s412 = smul.addr %s411, 16
    %s413 = scalar_lea.hbm %s1, %s412
    %s414 = scalar_lea.vmem [#allocation2], 22
    %s415 = scalar_lea.sflag [#allocation3], 22
    // Predicated region
    $region106: #{tpu_custom_call.1} parent=1 // pred_check
      _
    $region107: #{tpu_custom_call.1} parent=1 // pred_check_branch
      %417 = sbr.rel target = $region109
    $region108: #{tpu_custom_call.1} parent=1 // pred_region
      %418 = sst [smem:[#allocation12]] [#allocation57]
      %419 = sst [smem:[#allocation13]] [#allocation56]
    $region109: #{tpu_custom_call.1} parent=1 // pred_fallthru
      _
    %421 = shalt.err (0)
    %s423 = sshll.u32 %s414, 4
    %s424 = int_to_ptr.vmem [resolvable:$true] %s423
    %426 = dma.hbm_to_vmem [thread:$0]  %s413, 16, %s424, %s415
    %s427 = sadd.s32 %s308, 7
    %s428 = sld [smem:[#allocation5 + %s427]]
    %s429 = smul.addr %s428, 16
    %s430 = scalar_lea.hbm %s1, %s429
    %s431 = scalar_lea.vmem [#allocation2], 23
    %s432 = scalar_lea.sflag [#allocation3], 23
    // Predicated region
    $region110: #{tpu_custom_call.1} parent=1 // pred_check
      _
    $region111: #{tpu_custom_call.1} parent=1 // pred_check_branch
      %434 = sbr.rel target = $region113
    $region112: #{tpu_custom_call.1} parent=1 // pred_region
      %435 = sst [smem:[#allocation12]] [#allocation59]
      %436 = sst [smem:[#allocation13]] [#allocation58]
    $region113: #{tpu_custom_call.1} parent=1 // pred_fallthru
      _
    %438 = shalt.err (0)
    %s440 = sshll.u32 %s431, 4
    %s441 = int_to_ptr.vmem [resolvable:$true] %s440
    %443 = dma.hbm_to_vmem [thread:$0]  %s430, 16, %s441, %s432
    %s444 = sadd.s32 %s35, 3
    %s445 = smul.u32 %s444, 128
    %s446 = sld [smem:[#allocation5 + %s445]]
    %s447 = smul.addr %s446, 16
    %s448 = scalar_lea.hbm %s1, %s447
    %s449 = scalar_lea.vmem [#allocation2], 24
    %s450 = scalar_lea.sflag [#allocation3], 24
    // Predicated region
    $region114: #{tpu_custom_call.1} parent=1 // pred_check
      _
    $region115: #{tpu_custom_call.1} parent=1 // pred_check_branch
      %452 = sbr.rel target = $region117
    $region116: #{tpu_custom_call.1} parent=1 // pred_region
      %453 = sst [smem:[#allocation12]] [#allocation61]
      %454 = sst [smem:[#allocation13]] [#allocation60]
    $region117: #{tpu_custom_call.1} parent=1 // pred_fallthru
      _
    %456 = shalt.err (0)
    %s458 = sshll.u32 %s449, 4
    %s459 = int_to_ptr.vmem [resolvable:$true] %s458
    %461 = dma.hbm_to_vmem [thread:$0]  %s448, 16, %s459, %s450
    %s462 = sadd.s32 %s445, 1
    %s463 = sld [smem:[#allocation5 + %s462]]
    %s464 = smul.addr %s463, 16
    %s465 = scalar_lea.hbm %s1, %s464
    %s466 = scalar_lea.vmem [#allocation2], 25
    %s467 = scalar_lea.sflag [#allocation3], 25
    // Predicated region
    $region118: #{tpu_custom_call.1} parent=1 // pred_check
      _
    $region119: #{tpu_custom_call.1} parent=1 // pred_check_branch
      %469 = sbr.rel target = $region121
    $region120: #{tpu_custom_call.1} parent=1 // pred_region
      %470 = sst [smem:[#allocation12]] [#allocation63]
      %471 = sst [smem:[#allocation13]] [#allocation62]
    $region121: #{tpu_custom_call.1} parent=1 // pred_fallthru
      _
    %473 = shalt.err (0)
    %s475 = sshll.u32 %s466, 4
    %s476 = int_to_ptr.vmem [resolvable:$true] %s475
    %478 = dma.hbm_to_vmem [thread:$0]  %s465, 16, %s476, %s467
    %s479 = sadd.s32 %s445, 2
    %s480 = sld [smem:[#allocation5 + %s479]]
    %s481 = smul.addr %s480, 16
    %s482 = scalar_lea.hbm %s1, %s481
    %s483 = scalar_lea.vmem [#allocation2], 26
    %s484 = scalar_lea.sflag [#allocation3], 26
    // Predicated region
    $region122: #{tpu_custom_call.1} parent=1 // pred_check
      _
    $region123: #{tpu_custom_call.1} parent=1 // pred_check_branch
      %486 = sbr.rel target = $region125
    $region124: #{tpu_custom_call.1} parent=1 // pred_region
      %487 = sst [smem:[#allocation12]] [#allocation65]
      %488 = sst [smem:[#allocation13]] [#allocation64]
    $region125: #{tpu_custom_call.1} parent=1 // pred_fallthru
      _
    %490 = shalt.err (0)
    %s492 = sshll.u32 %s483, 4
    %s493 = int_to_ptr.vmem [resolvable:$true] %s492
    %495 = dma.hbm_to_vmem [thread:$0]  %s482, 16, %s493, %s484
    %s496 = sadd.s32 %s445, 3
    %s497 = sld [smem:[#allocation5 + %s496]]
    %s498 = smul.addr %s497, 16
    %s499 = scalar_lea.hbm %s1, %s498
    %s500 = scalar_lea.vmem [#allocation2], 27
    %s501 = scalar_lea.sflag [#allocation3], 27
    // Predicated region
    $region126: #{tpu_custom_call.1} parent=1 // pred_check
      _
    $region127: #{tpu_custom_call.1} parent=1 // pred_check_branch
      %503 = sbr.rel target = $region129
    $region128: #{tpu_custom_call.1} parent=1 // pred_region
      %504 = sst [smem:[#allocation12]] [#allocation67]
      %505 = sst [smem:[#allocation13]] [#allocation66]
    $region129: #{tpu_custom_call.1} parent=1 // pred_fallthru
      _
    %507 = shalt.err (0)
    %s509 = sshll.u32 %s500, 4
    %s510 = int_to_ptr.vmem [resolvable:$true] %s509
    %512 = dma.hbm_to_vmem [thread:$0]  %s499, 16, %s510, %s501
    %s513 = sadd.s32 %s445, 4
    %s514 = sld [smem:[#allocation5 + %s513]]
    %s515 = smul.addr %s514, 16
    %s516 = scalar_lea.hbm %s1, %s515
    %s517 = scalar_lea.vmem [#allocation2], 28
    %s518 = scalar_lea.sflag [#allocation3], 28
    // Predicated region
    $region130: #{tpu_custom_call.1} parent=1 // pred_check
      _
    $region131: #{tpu_custom_call.1} parent=1 // pred_check_branch
      %520 = sbr.rel target = $region133
    $region132: #{tpu_custom_call.1} parent=1 // pred_region
      %521 = sst [smem:[#allocation12]] [#allocation69]
      %522 = sst [smem:[#allocation13]] [#allocation68]
    $region133: #{tpu_custom_call.1} parent=1 // pred_fallthru
      _
    %524 = shalt.err (0)
    %s526 = sshll.u32 %s517, 4
    %s527 = int_to_ptr.vmem [resolvable:$true] %s526
    %529 = dma.hbm_to_vmem [thread:$0]  %s516, 16, %s527, %s518
    %s530 = sadd.s32 %s445, 5
    %s531 = sld [smem:[#allocation5 + %s530]]
    %s532 = smul.addr %s531, 16
    %s533 = scalar_lea.hbm %s1, %s532
    %s534 = scalar_lea.vmem [#allocation2], 29
    %s535 = scalar_lea.sflag [#allocation3], 29
    // Predicated region
    $region134: #{tpu_custom_call.1} parent=1 // pred_check
      _
    $region135: #{tpu_custom_call.1} parent=1 // pred_check_branch
      %537 = sbr.rel target = $region137
    $region136: #{tpu_custom_call.1} parent=1 // pred_region
      %538 = sst [smem:[#allocation12]] [#allocation71]
      %539 = sst [smem:[#allocation13]] [#allocation70]
    $region137: #{tpu_custom_call.1} parent=1 // pred_fallthru
      _
    %541 = shalt.err (0)
    %s543 = sshll.u32 %s534, 4
    %s544 = int_to_ptr.vmem [resolvable:$true] %s543
    %546 = dma.hbm_to_vmem [thread:$0]  %s533, 16, %s544, %s535
    %s547 = sadd.s32 %s445, 6
    %s548 = sld [smem:[#allocation5 + %s547]]
    %s549 = smul.addr %s548, 16
    %s550 = scalar_lea.hbm %s1, %s549
    %s551 = scalar_lea.vmem [#allocation2], 30
    %s552 = scalar_lea.sflag [#allocation3], 30
    // Predicated region
    $region138: #{tpu_custom_call.1} parent=1 // pred_check
      _
    $region139: #{tpu_custom_call.1} parent=1 // pred_check_branch
      %554 = sbr.rel target = $region141
    $region140: #{tpu_custom_call.1} parent=1 // pred_region
      %555 = sst [smem:[#allocation12]] [#allocation73]
      %556 = sst [smem:[#allocation13]] [#allocation72]
    $region141: #{tpu_custom_call.1} parent=1 // pred_fallthru
      _
    %558 = shalt.err (0)
    %s560 = sshll.u32 %s551, 4
    %s561 = int_to_ptr.vmem [resolvable:$true] %s560
    %563 = dma.hbm_to_vmem [thread:$0]  %s550, 16, %s561, %s552
    %s564 = sadd.s32 %s445, 7
    %s565 = sld [smem:[#allocation5 + %s564]]
    %s566 = smul.addr %s565, 16
    %s567 = scalar_lea.hbm %s1, %s566
    %s568 = scalar_lea.vmem [#allocation2], 31
    %s569 = scalar_lea.sflag [#allocation3], 31
    // Predicated region
    $region142: #{tpu_custom_call.1} parent=1 // pred_check
      _
    $region143: #{tpu_custom_call.1} parent=1 // pred_check_branch
      %571 = sbr.rel target = $region145
    $region144: #{tpu_custom_call.1} parent=1 // pred_region
      %572 = sst [smem:[#allocation12]] [#allocation75]
      %573 = sst [smem:[#allocation13]] [#allocation74]
    $region145: #{tpu_custom_call.1} parent=1 // pred_fallthru
      _
    %575 = shalt.err (0)
    %s577 = sshll.u32 %s568, 4
    %s578 = int_to_ptr.vmem [resolvable:$true] %s577
    %580 = dma.hbm_to_vmem [thread:$0]  %s567, 16, %s578, %s569
    %s581 = sadd.s32 %s35, 4
    %s582 = smul.u32 %s581, 128
    %s583 = sld [smem:[#allocation5 + %s582]]
    %s584 = smul.addr %s583, 16
    %s585 = scalar_lea.hbm %s1, %s584
    %s586 = scalar_lea.vmem [#allocation2], 32
    %s587 = scalar_lea.sflag [#allocation3], 32
    // Predicated region
    $region146: #{tpu_custom_call.1} parent=1 // pred_check
      _
    $region147: #{tpu_custom_call.1} parent=1 // pred_check_branch
      %589 = sbr.rel target = $region149
    $region148: #{tpu_custom_call.1} parent=1 // pred_region
      %590 = sst [smem:[#allocation12]] [#allocation77]
      %591 = sst [smem:[#allocation13]] [#allocation76]
    $region149: #{tpu_custom_call.1} parent=1 // pred_fallthru
      _
    %593 = shalt.err (0)
    %s595 = sshll.u32 %s586, 4
    %s596 = int_to_ptr.vmem [resolvable:$true] %s595
    %598 = dma.hbm_to_vmem [thread:$0]  %s585, 16, %s596, %s587
    %s599 = sadd.s32 %s582, 1
    %s600 = sld [smem:[#allocation5 + %s599]]
    %s601 = smul.addr %s600, 16
    %s602 = scalar_lea.hbm %s1, %s601
    %s603 = scalar_lea.vmem [#allocation2], 33
    %s604 = scalar_lea.sflag [#allocation3], 33
    // Predicated region
    $region150: #{tpu_custom_call.1} parent=1 // pred_check
      _
    $region151: #{tpu_custom_call.1} parent=1 // pred_check_branch
      %606 = sbr.rel target = $region153
    $region152: #{tpu_custom_call.1} parent=1 // pred_region
      %607 = sst [smem:[#allocation12]] [#allocation79]
      %608 = sst [smem:[#allocation13]] [#allocation78]
    $region153: #{tpu_custom_call.1} parent=1 // pred_fallthru
      _
    %610 = shalt.err (0)
    %s612 = sshll.u32 %s603, 4
    %s613 = int_to_ptr.vmem [resolvable:$true] %s612
    %615 = dma.hbm_to_vmem [thread:$0]  %s602, 16, %s613, %s604
    %s616 = sadd.s32 %s582, 2
    %s617 = sld [smem:[#allocation5 + %s616]]
    %s618 = smul.addr %s617, 16
    %s619 = scalar_lea.hbm %s1, %s618
    %s620 = scalar_lea.vmem [#allocation2], 34
    %s621 = scalar_lea.sflag [#allocation3], 34
    // Predicated region
    $region154: #{tpu_custom_call.1} parent=1 // pred_check
      _
    $region155: #{tpu_custom_call.1} parent=1 // pred_check_branch
      %623 = sbr.rel target = $region157
    $region156: #{tpu_custom_call.1} parent=1 // pred_region
      %624 = sst [smem:[#allocation12]] [#allocation81]
      %625 = sst [smem:[#allocation13]] [#allocation80]
    $region157: #{tpu_custom_call.1} parent=1 // pred_fallthru
      _
    %627 = shalt.err (0)
    %s629 = sshll.u32 %s620, 4
    %s630 = int_to_ptr.vmem [resolvable:$true] %s629
    %632 = dma.hbm_to_vmem [thread:$0]  %s619, 16, %s630, %s621
    %s633 = sadd.s32 %s582, 3
    %s634 = sld [smem:[#allocation5 + %s633]]
    %s635 = smul.addr %s634, 16
    %s636 = scalar_lea.hbm %s1, %s635
    %s637 = scalar_lea.vmem [#allocation2], 35
    %s638 = scalar_lea.sflag [#allocation3], 35
    // Predicated region
    $region158: #{tpu_custom_call.1} parent=1 // pred_check
      _
    $region159: #{tpu_custom_call.1} parent=1 // pred_check_branch
      %640 = sbr.rel target = $region161
    $region160: #{tpu_custom_call.1} parent=1 // pred_region
      %641 = sst [smem:[#allocation12]] [#allocation83]
      %642 = sst [smem:[#allocation13]] [#allocation82]
    $region161: #{tpu_custom_call.1} parent=1 // pred_fallthru
      _
    %644 = shalt.err (0)
    %s646 = sshll.u32 %s637, 4
    %s647 = int_to_ptr.vmem [resolvable:$true] %s646
    %649 = dma.hbm_to_vmem [thread:$0]  %s636, 16, %s647, %s638
    %s650 = sadd.s32 %s582, 4
    %s651 = sld [smem:[#allocation5 + %s650]]
    %s652 = smul.addr %s651, 16
    %s653 = scalar_lea.hbm %s1, %s652
    %s654 = scalar_lea.vmem [#allocation2], 36
    %s655 = scalar_lea.sflag [#allocation3], 36
    // Predicated region
    $region162: #{tpu_custom_call.1} parent=1 // pred_check
      _
    $region163: #{tpu_custom_call.1} parent=1 // pred_check_branch
      %657 = sbr.rel target = $region165
    $region164: #{tpu_custom_call.1} parent=1 // pred_region
      %658 = sst [smem:[#allocation12]] [#allocation85]
      %659 = sst [smem:[#allocation13]] [#allocation84]
    $region165: #{tpu_custom_call.1} parent=1 // pred_fallthru
      _
    %661 = shalt.err (0)
    %s663 = sshll.u32 %s654, 4
    %s664 = int_to_ptr.vmem [resolvable:$true] %s663
    %666 = dma.hbm_to_vmem [thread:$0]  %s653, 16, %s664, %s655
    %s667 = sadd.s32 %s582, 5
    %s668 = sld [smem:[#allocation5 + %s667]]
    %s669 = smul.addr %s668, 16
    %s670 = scalar_lea.hbm %s1, %s669
    %s671 = scalar_lea.vmem [#allocation2], 37
    %s672 = scalar_lea.sflag [#allocation3], 37
    // Predicated region
    $region166: #{tpu_custom_call.1} parent=1 // pred_check
      _
    $region167: #{tpu_custom_call.1} parent=1 // pred_check_branch
      %674 = sbr.rel target = $region169
    $region168: #{tpu_custom_call.1} parent=1 // pred_region
      %675 = sst [smem:[#allocation12]] [#allocation87]
      %676 = sst [smem:[#allocation13]] [#allocation86]
    $region169: #{tpu_custom_call.1} parent=1 // pred_fallthru
      _
    %678 = shalt.err (0)
    %s680 = sshll.u32 %s671, 4
    %s681 = int_to_ptr.vmem [resolvable:$true] %s680
    %683 = dma.hbm_to_vmem [thread:$0]  %s670, 16, %s681, %s672
    %s684 = sadd.s32 %s582, 6
    %s685 = sld [smem:[#allocation5 + %s684]]
    %s686 = smul.addr %s685, 16
    %s687 = scalar_lea.hbm %s1, %s686
    %s688 = scalar_lea.vmem [#allocation2], 38
    %s689 = scalar_lea.sflag [#allocation3], 38
    // Predicated region
    $region170: #{tpu_custom_call.1} parent=1 // pred_check
      _
    $region171: #{tpu_custom_call.1} parent=1 // pred_check_branch
      %691 = sbr.rel target = $region173
    $region172: #{tpu_custom_call.1} parent=1 // pred_region
      %692 = sst [smem:[#allocation12]] [#allocation89]
      %693 = sst [smem:[#allocation13]] [#allocation88]
    $region173: #{tpu_custom_call.1} parent=1 // pred_fallthru
      _
    %695 = shalt.err (0)
    %s697 = sshll.u32 %s688, 4
    %s698 = int_to_ptr.vmem [resolvable:$true] %s697
    %700 = dma.hbm_to_vmem [thread:$0]  %s687, 16, %s698, %s689
    %s701 = sadd.s32 %s582, 7
    %s702 = sld [smem:[#allocation5 + %s701]]
    %s703 = smul.addr %s702, 16
    %s704 = scalar_lea.hbm %s1, %s703
    %s705 = scalar_lea.vmem [#allocation2], 39
    %s706 = scalar_lea.sflag [#allocation3], 39
    // Predicated region
    $region174: #{tpu_custom_call.1} parent=1 // pred_check
      _
    $region175: #{tpu_custom_call.1} parent=1 // pred_check_branch
      %708 = sbr.rel target = $region177
    $region176: #{tpu_custom_call.1} parent=1 // pred_region
      %709 = sst [smem:[#allocation12]] [#allocation91]
      %710 = sst [smem:[#allocation13]] [#allocation90]
    $region177: #{tpu_custom_call.1} parent=1 // pred_fallthru
      _
    %712 = shalt.err (0)
    %s714 = sshll.u32 %s705, 4
    %s715 = int_to_ptr.vmem [resolvable:$true] %s714
    %717 = dma.hbm_to_vmem [thread:$0]  %s704, 16, %s715, %s706
    %s718 = sadd.s32 %s35, 5
    %s719 = smul.u32 %s718, 128
    %s720 = sld [smem:[#allocation5 + %s719]]
    %s721 = smul.addr %s720, 16
    %s722 = scalar_lea.hbm %s1, %s721
    %s723 = scalar_lea.vmem [#allocation2], 40
    %s724 = scalar_lea.sflag [#allocation3], 40
    // Predicated region
    $region178: #{tpu_custom_call.1} parent=1 // pred_check
      _
    $region179: #{tpu_custom_call.1} parent=1 // pred_check_branch
      %726 = sbr.rel target = $region181
    $region180: #{tpu_custom_call.1} parent=1 // pred_region
      %727 = sst [smem:[#allocation12]] [#allocation93]
      %728 = sst [smem:[#allocation13]] [#allocation92]
    $region181: #{tpu_custom_call.1} parent=1 // pred_fallthru
      _
    %730 = shalt.err (0)
    %s732 = sshll.u32 %s723, 4
    %s733 = int_to_ptr.vmem [resolvable:$true] %s732
    %735 = dma.hbm_to_vmem [thread:$0]  %s722, 16, %s733, %s724
    %s736 = sadd.s32 %s719, 1
    %s737 = sld [smem:[#allocation5 + %s736]]
    %s738 = smul.addr %s737, 16
    %s739 = scalar_lea.hbm %s1, %s738
    %s740 = scalar_lea.vmem [#allocation2], 41
    %s741 = scalar_lea.sflag [#allocation3], 41
    // Predicated region
    $region182: #{tpu_custom_call.1} parent=1 // pred_check
      _
    $region183: #{tpu_custom_call.1} parent=1 // pred_check_branch
      %743 = sbr.rel target = $region185
    $region184: #{tpu_custom_call.1} parent=1 // pred_region
      %744 = sst [smem:[#allocation12]] [#allocation95]
      %745 = sst [smem:[#allocation13]] [#allocation94]
    $region185: #{tpu_custom_call.1} parent=1 // pred_fallthru
      _
    %747 = shalt.err (0)
    %s749 = sshll.u32 %s740, 4
    %s750 = int_to_ptr.vmem [resolvable:$true] %s749
    %752 = dma.hbm_to_vmem [thread:$0]  %s739, 16, %s750, %s741
    %s753 = sadd.s32 %s719, 2
    %s754 = sld [smem:[#allocation5 + %s753]]
    %s755 = smul.addr %s754, 16
    %s756 = scalar_lea.hbm %s1, %s755
    %s757 = scalar_lea.vmem [#allocation2], 42
    %s758 = scalar_lea.sflag [#allocation3], 42
    // Predicated region
    $region186: #{tpu_custom_call.1} parent=1 // pred_check
      _
    $region187: #{tpu_custom_call.1} parent=1 // pred_check_branch
      %760 = sbr.rel target = $region189
    $region188: #{tpu_custom_call.1} parent=1 // pred_region
      %761 = sst [smem:[#allocation12]] [#allocation97]
      %762 = sst [smem:[#allocation13]] [#allocation96]
    $region189: #{tpu_custom_call.1} parent=1 // pred_fallthru
      _
    %764 = shalt.err (0)
    %s766 = sshll.u32 %s757, 4
    %s767 = int_to_ptr.vmem [resolvable:$true] %s766
    %769 = dma.hbm_to_vmem [thread:$0]  %s756, 16, %s767, %s758
    %s770 = sadd.s32 %s719, 3
    %s771 = sld [smem:[#allocation5 + %s770]]
    %s772 = smul.addr %s771, 16
    %s773 = scalar_lea.hbm %s1, %s772
    %s774 = scalar_lea.vmem [#allocation2], 43
    %s775 = scalar_lea.sflag [#allocation3], 43
    // Predicated region
    $region190: #{tpu_custom_call.1} parent=1 // pred_check
      _
    $region191: #{tpu_custom_call.1} parent=1 // pred_check_branch
      %777 = sbr.rel target = $region193
    $region192: #{tpu_custom_call.1} parent=1 // pred_region
      %778 = sst [smem:[#allocation12]] [#allocation99]
      %779 = sst [smem:[#allocation13]] [#allocation98]
    $region193: #{tpu_custom_call.1} parent=1 // pred_fallthru
      _
    %781 = shalt.err (0)
    %s783 = sshll.u32 %s774, 4
    %s784 = int_to_ptr.vmem [resolvable:$true] %s783
    %786 = dma.hbm_to_vmem [thread:$0]  %s773, 16, %s784, %s775
    %s787 = sadd.s32 %s719, 4
    %s788 = sld [smem:[#allocation5 + %s787]]
    %s789 = smul.addr %s788, 16
    %s790 = scalar_lea.hbm %s1, %s789
    %s791 = scalar_lea.vmem [#allocation2], 44
    %s792 = scalar_lea.sflag [#allocation3], 44
    // Predicated region
    $region194: #{tpu_custom_call.1} parent=1 // pred_check
      _
    $region195: #{tpu_custom_call.1} parent=1 // pred_check_branch
      %794 = sbr.rel target = $region197
    $region196: #{tpu_custom_call.1} parent=1 // pred_region
      %795 = sst [smem:[#allocation12]] [#allocation101]
      %796 = sst [smem:[#allocation13]] [#allocation100]
    $region197: #{tpu_custom_call.1} parent=1 // pred_fallthru
      _
    %798 = shalt.err (0)
    %s800 = sshll.u32 %s791, 4
    %s801 = int_to_ptr.vmem [resolvable:$true] %s800
    %803 = dma.hbm_to_vmem [thread:$0]  %s790, 16, %s801, %s792
    %s804 = sadd.s32 %s719, 5
    %s805 = sld [smem:[#allocation5 + %s804]]
    %s806 = smul.addr %s805, 16
    %s807 = scalar_lea.hbm %s1, %s806
    %s808 = scalar_lea.vmem [#allocation2], 45
    %s809 = scalar_lea.sflag [#allocation3], 45
    // Predicated region
    $region198: #{tpu_custom_call.1} parent=1 // pred_check
      _
    $region199: #{tpu_custom_call.1} parent=1 // pred_check_branch
      %811 = sbr.rel target = $region201
    $region200: #{tpu_custom_call.1} parent=1 // pred_region
      %812 = sst [smem:[#allocation12]] [#allocation103]
      %813 = sst [smem:[#allocation13]] [#allocation102]
    $region201: #{tpu_custom_call.1} parent=1 // pred_fallthru
      _
    %815 = shalt.err (0)
    %s817 = sshll.u32 %s808, 4
    %s818 = int_to_ptr.vmem [resolvable:$true] %s817
    %820 = dma.hbm_to_vmem [thread:$0]  %s807, 16, %s818, %s809
    %s821 = sadd.s32 %s719, 6
    %s822 = sld [smem:[#allocation5 + %s821]]
    %s823 = smul.addr %s822, 16
    %s824 = scalar_lea.hbm %s1, %s823
    %s825 = scalar_lea.vmem [#allocation2], 46
    %s826 = scalar_lea.sflag [#allocation3], 46
    // Predicated region
    $region202: #{tpu_custom_call.1} parent=1 // pred_check
      _
    $region203: #{tpu_custom_call.1} parent=1 // pred_check_branch
      %828 = sbr.rel target = $region205
    $region204: #{tpu_custom_call.1} parent=1 // pred_region
      %829 = sst [smem:[#allocation12]] [#allocation105]
      %830 = sst [smem:[#allocation13]] [#allocation104]
    $region205: #{tpu_custom_call.1} parent=1 // pred_fallthru
      _
    %832 = shalt.err (0)
    %s834 = sshll.u32 %s825, 4
    %s835 = int_to_ptr.vmem [resolvable:$true] %s834
    %837 = dma.hbm_to_vmem [thread:$0]  %s824, 16, %s835, %s826
    %s838 = sadd.s32 %s719, 7
    %s839 = sld [smem:[#allocation5 + %s838]]
    %s840 = smul.addr %s839, 16
    %s841 = scalar_lea.hbm %s1, %s840
    %s842 = scalar_lea.vmem [#allocation2], 47
    %s843 = scalar_lea.sflag [#allocation3], 47
    // Predicated region
    $region206: #{tpu_custom_call.1} parent=1 // pred_check
      _
    $region207: #{tpu_custom_call.1} parent=1 // pred_check_branch
      %845 = sbr.rel target = $region209
    $region208: #{tpu_custom_call.1} parent=1 // pred_region
      %846 = sst [smem:[#allocation12]] [#allocation107]
      %847 = sst [smem:[#allocation13]] [#allocation106]
    $region209: #{tpu_custom_call.1} parent=1 // pred_fallthru
      _
    %849 = shalt.err (0)
    %s851 = sshll.u32 %s842, 4
    %s852 = int_to_ptr.vmem [resolvable:$true] %s851
    %854 = dma.hbm_to_vmem [thread:$0]  %s841, 16, %s852, %s843
    %s855 = sadd.s32 %s35, 6
    %s856 = smul.u32 %s855, 128
    %s857 = sld [smem:[#allocation5 + %s856]]
    %s858 = smul.addr %s857, 16
    %s859 = scalar_lea.hbm %s1, %s858
    %s860 = scalar_lea.vmem [#allocation2], 48
    %s861 = scalar_lea.sflag [#allocation3], 48
    // Predicated region
    $region210: #{tpu_custom_call.1} parent=1 // pred_check
      _
    $region211: #{tpu_custom_call.1} parent=1 // pred_check_branch
      %863 = sbr.rel target = $region213
    $region212: #{tpu_custom_call.1} parent=1 // pred_region
      %864 = sst [smem:[#allocation12]] [#allocation109]
      %865 = sst [smem:[#allocation13]] [#allocation108]
    $region213: #{tpu_custom_call.1} parent=1 // pred_fallthru
      _
    %867 = shalt.err (0)
    %s869 = sshll.u32 %s860, 4
    %s870 = int_to_ptr.vmem [resolvable:$true] %s869
    %872 = dma.hbm_to_vmem [thread:$0]  %s859, 16, %s870, %s861
    %s873 = sadd.s32 %s856, 1
    %s874 = sld [smem:[#allocation5 + %s873]]
    %s875 = smul.addr %s874, 16
    %s876 = scalar_lea.hbm %s1, %s875
    %s877 = scalar_lea.vmem [#allocation2], 49
    %s878 = scalar_lea.sflag [#allocation3], 49
    // Predicated region
    $region214: #{tpu_custom_call.1} parent=1 // pred_check
      _
    $region215: #{tpu_custom_call.1} parent=1 // pred_check_branch
      %880 = sbr.rel target = $region217
    $region216: #{tpu_custom_call.1} parent=1 // pred_region
      %881 = sst [smem:[#allocation12]] [#allocation111]
      %882 = sst [smem:[#allocation13]] [#allocation110]
    $region217: #{tpu_custom_call.1} parent=1 // pred_fallthru
      _
    %884 = shalt.err (0)
    %s886 = sshll.u32 %s877, 4
    %s887 = int_to_ptr.vmem [resolvable:$true] %s886
    %889 = dma.hbm_to_vmem [thread:$0]  %s876, 16, %s887, %s878
    %s890 = sadd.s32 %s856, 2
    %s891 = sld [smem:[#allocation5 + %s890]]
    %s892 = smul.addr %s891, 16
    %s893 = scalar_lea.hbm %s1, %s892
    %s894 = scalar_lea.vmem [#allocation2], 50
    %s895 = scalar_lea.sflag [#allocation3], 50
    // Predicated region
    $region218: #{tpu_custom_call.1} parent=1 // pred_check
      _
    $region219: #{tpu_custom_call.1} parent=1 // pred_check_branch
      %897 = sbr.rel target = $region221
    $region220: #{tpu_custom_call.1} parent=1 // pred_region
      %898 = sst [smem:[#allocation12]] [#allocation113]
      %899 = sst [smem:[#allocation13]] [#allocation112]
    $region221: #{tpu_custom_call.1} parent=1 // pred_fallthru
      _
    %901 = shalt.err (0)
    %s903 = sshll.u32 %s894, 4
    %s904 = int_to_ptr.vmem [resolvable:$true] %s903
    %906 = dma.hbm_to_vmem [thread:$0]  %s893, 16, %s904, %s895
    %s907 = sadd.s32 %s856, 3
    %s908 = sld [smem:[#allocation5 + %s907]]
    %s909 = smul.addr %s908, 16
    %s910 = scalar_lea.hbm %s1, %s909
    %s911 = scalar_lea.vmem [#allocation2], 51
    %s912 = scalar_lea.sflag [#allocation3], 51
    // Predicated region
    $region222: #{tpu_custom_call.1} parent=1 // pred_check
      _
    $region223: #{tpu_custom_call.1} parent=1 // pred_check_branch
      %914 = sbr.rel target = $region225
    $region224: #{tpu_custom_call.1} parent=1 // pred_region
      %915 = sst [smem:[#allocation12]] [#allocation115]
      %916 = sst [smem:[#allocation13]] [#allocation114]
    $region225: #{tpu_custom_call.1} parent=1 // pred_fallthru
      _
    %918 = shalt.err (0)
    %s920 = sshll.u32 %s911, 4
    %s921 = int_to_ptr.vmem [resolvable:$true] %s920
    %923 = dma.hbm_to_vmem [thread:$0]  %s910, 16, %s921, %s912
    %s924 = sadd.s32 %s856, 4
    %s925 = sld [smem:[#allocation5 + %s924]]
    %s926 = smul.addr %s925, 16
    %s927 = scalar_lea.hbm %s1, %s926
    %s928 = scalar_lea.vmem [#allocation2], 52
    %s929 = scalar_lea.sflag [#allocation3], 52
    // Predicated region
    $region226: #{tpu_custom_call.1} parent=1 // pred_check
      _
    $region227: #{tpu_custom_call.1} parent=1 // pred_check_branch
      %931 = sbr.rel target = $region229
    $region228: #{tpu_custom_call.1} parent=1 // pred_region
      %932 = sst [smem:[#allocation12]] [#allocation117]
      %933 = sst [smem:[#allocation13]] [#allocation116]
    $region229: #{tpu_custom_call.1} parent=1 // pred_fallthru
      _
    %935 = shalt.err (0)
    %s937 = sshll.u32 %s928, 4
    %s938 = int_to_ptr.vmem [resolvable:$true] %s937
    %940 = dma.hbm_to_vmem [thread:$0]  %s927, 16, %s938, %s929
    %s941 = sadd.s32 %s856, 5
    %s942 = sld [smem:[#allocation5 + %s941]]
    %s943 = smul.addr %s942, 16
    %s944 = scalar_lea.hbm %s1, %s943
    %s945 = scalar_lea.vmem [#allocation2], 53
    %s946 = scalar_lea.sflag [#allocation3], 53
    // Predicated region
    $region230: #{tpu_custom_call.1} parent=1 // pred_check
      _
    $region231: #{tpu_custom_call.1} parent=1 // pred_check_branch
      %948 = sbr.rel target = $region233
    $region232: #{tpu_custom_call.1} parent=1 // pred_region
      %949 = sst [smem:[#allocation12]] [#allocation119]
      %950 = sst [smem:[#allocation13]] [#allocation118]
    $region233: #{tpu_custom_call.1} parent=1 // pred_fallthru
      _
    %952 = shalt.err (0)
    %s954 = sshll.u32 %s945, 4
    %s955 = int_to_ptr.vmem [resolvable:$true] %s954
    %957 = dma.hbm_to_vmem [thread:$0]  %s944, 16, %s955, %s946
    %s958 = sadd.s32 %s856, 6
    %s959 = sld [smem:[#allocation5 + %s958]]
    %s960 = smul.addr %s959, 16
    %s961 = scalar_lea.hbm %s1, %s960
    %s962 = scalar_lea.vmem [#allocation2], 54
    %s963 = scalar_lea.sflag [#allocation3], 54
    // Predicated region
    $region234: #{tpu_custom_call.1} parent=1 // pred_check
      _
    $region235: #{tpu_custom_call.1} parent=1 // pred_check_branch
      %965 = sbr.rel target = $region237
    $region236: #{tpu_custom_call.1} parent=1 // pred_region
      %966 = sst [smem:[#allocation12]] [#allocation121]
      %967 = sst [smem:[#allocation13]] [#allocation120]
    $region237: #{tpu_custom_call.1} parent=1 // pred_fallthru
      _
    %969 = shalt.err (0)
    %s971 = sshll.u32 %s962, 4
    %s972 = int_to_ptr.vmem [resolvable:$true] %s971
    %974 = dma.hbm_to_vmem [thread:$0]  %s961, 16, %s972, %s963
    %s975 = sadd.s32 %s856, 7
    %s976 = sld [smem:[#allocation5 + %s975]]
    %s977 = smul.addr %s976, 16
    %s978 = scalar_lea.hbm %s1, %s977
    %s979 = scalar_lea.vmem [#allocation2], 55
    %s980 = scalar_lea.sflag [#allocation3], 55
    // Predicated region
    $region238: #{tpu_custom_call.1} parent=1 // pred_check
      _
    $region239: #{tpu_custom_call.1} parent=1 // pred_check_branch
      %982 = sbr.rel target = $region241
    $region240: #{tpu_custom_call.1} parent=1 // pred_region
      %983 = sst [smem:[#allocation12]] [#allocation123]
      %984 = sst [smem:[#allocation13]] [#allocation122]
    $region241: #{tpu_custom_call.1} parent=1 // pred_fallthru
      _
    %986 = shalt.err (0)
    %s988 = sshll.u32 %s979, 4
    %s989 = int_to_ptr.vmem [resolvable:$true] %s988
    %991 = dma.hbm_to_vmem [thread:$0]  %s978, 16, %s989, %s980
    %s992 = sadd.s32 %s35, 7
    %s993 = smul.u32 %s992, 128
    %s994 = sld [smem:[#allocation5 + %s993]]
    %s995 = smul.addr %s994, 16
    %s996 = scalar_lea.hbm %s1, %s995
    %s997 = scalar_lea.vmem [#allocation2], 56
    %s998 = scalar_lea.sflag [#allocation3], 56
    // Predicated region
    $region242: #{tpu_custom_call.1} parent=1 // pred_check
      _
    $region243: #{tpu_custom_call.1} parent=1 // pred_check_branch
      %1000 = sbr.rel target = $region245
    $region244: #{tpu_custom_call.1} parent=1 // pred_region
      %1001 = sst [smem:[#allocation12]] [#allocation125]
      %1002 = sst [smem:[#allocation13]] [#allocation124]
    $region245: #{tpu_custom_call.1} parent=1 // pred_fallthru
      _
    %1004 = shalt.err (0)
    %s1006 = sshll.u32 %s997, 4
    %s1007 = int_to_ptr.vmem [resolvable:$true] %s1006
    %1009 = dma.hbm_to_vmem [thread:$0]  %s996, 16, %s1007, %s998
    %s1010 = sadd.s32 %s993, 1
    %s1011 = sld [smem:[#allocation5 + %s1010]]
    %s1012 = smul.addr %s1011, 16
    %s1013 = scalar_lea.hbm %s1, %s1012
    %s1014 = scalar_lea.vmem [#allocation2], 57
    %s1015 = scalar_lea.sflag [#allocation3], 57
    // Predicated region
    $region246: #{tpu_custom_call.1} parent=1 // pred_check
      _
    $region247: #{tpu_custom_call.1} parent=1 // pred_check_branch
      %1017 = sbr.rel target = $region249
    $region248: #{tpu_custom_call.1} parent=1 // pred_region
      %1018 = sst [smem:[#allocation12]] [#allocation127]
      %1019 = sst [smem:[#allocation13]] [#allocation126]
    $region249: #{tpu_custom_call.1} parent=1 // pred_fallthru
      _
    %1021 = shalt.err (0)
    %s1023 = sshll.u32 %s1014, 4
    %s1024 = int_to_ptr.vmem [resolvable:$true] %s1023
    %1026 = dma.hbm_to_vmem [thread:$0]  %s1013, 16, %s1024, %s1015
    %s1027 = sadd.s32 %s993, 2
    %s1028 = sld [smem:[#allocation5 + %s1027]]
    %s1029 = smul.addr %s1028, 16
    %s1030 = scalar_lea.hbm %s1, %s1029
    %s1031 = scalar_lea.vmem [#allocation2], 58
    %s1032 = scalar_lea.sflag [#allocation3], 58
    // Predicated region
    $region250: #{tpu_custom_call.1} parent=1 // pred_check
      _
    $region251: #{tpu_custom_call.1} parent=1 // pred_check_branch
      %1034 = sbr.rel target = $region253
    $region252: #{tpu_custom_call.1} parent=1 // pred_region
      %1035 = sst [smem:[#allocation12]] [#allocation129]
      %1036 = sst [smem:[#allocation13]] [#allocation128]
    $region253: #{tpu_custom_call.1} parent=1 // pred_fallthru
      _
    %1038 = shalt.err (0)
    %s1040 = sshll.u32 %s1031, 4
    %s1041 = int_to_ptr.vmem [resolvable:$true] %s1040
    %1043 = dma.hbm_to_vmem [thread:$0]  %s1030, 16, %s1041, %s1032
    %s1044 = sadd.s32 %s993, 3
    %s1045 = sld [smem:[#allocation5 + %s1044]]
    %s1046 = smul.addr %s1045, 16
    %s1047 = scalar_lea.hbm %s1, %s1046
    %s1048 = scalar_lea.vmem [#allocation2], 59
    %s1049 = scalar_lea.sflag [#allocation3], 59
    // Predicated region
    $region254: #{tpu_custom_call.1} parent=1 // pred_check
      _
    $region255: #{tpu_custom_call.1} parent=1 // pred_check_branch
      %1051 = sbr.rel target = $region257
    $region256: #{tpu_custom_call.1} parent=1 // pred_region
      %1052 = sst [smem:[#allocation12]] [#allocation131]
      %1053 = sst [smem:[#allocation13]] [#allocation130]
    $region257: #{tpu_custom_call.1} parent=1 // pred_fallthru
      _
    %1055 = shalt.err (0)
    %s1057 = sshll.u32 %s1048, 4
    %s1058 = int_to_ptr.vmem [resolvable:$true] %s1057
    %1060 = dma.hbm_to_vmem [thread:$0]  %s1047, 16, %s1058, %s1049
    %s1061 = sadd.s32 %s993, 4
    %s1062 = sld [smem:[#allocation5 + %s1061]]
    %s1063 = smul.addr %s1062, 16
    %s1064 = scalar_lea.hbm %s1, %s1063
    %s1065 = scalar_lea.vmem [#allocation2], 60
    %s1066 = scalar_lea.sflag [#allocation3], 60
    // Predicated region
    $region258: #{tpu_custom_call.1} parent=1 // pred_check
      _
    $region259: #{tpu_custom_call.1} parent=1 // pred_check_branch
      %1068 = sbr.rel target = $region261
    $region260: #{tpu_custom_call.1} parent=1 // pred_region
      %1069 = sst [smem:[#allocation12]] [#allocation133]
      %1070 = sst [smem:[#allocation13]] [#allocation132]
    $region261: #{tpu_custom_call.1} parent=1 // pred_fallthru
      _
    %1072 = shalt.err (0)
    %s1074 = sshll.u32 %s1065, 4
    %s1075 = int_to_ptr.vmem [resolvable:$true] %s1074
    %1077 = dma.hbm_to_vmem [thread:$0]  %s1064, 16, %s1075, %s1066
    %s1078 = sadd.s32 %s993, 5
    %s1079 = sld [smem:[#allocation5 + %s1078]]
    %s1080 = smul.addr %s1079, 16
    %s1081 = scalar_lea.hbm %s1, %s1080
    %s1082 = scalar_lea.vmem [#allocation2], 61
    %s1083 = scalar_lea.sflag [#allocation3], 61
    // Predicated region
    $region262: #{tpu_custom_call.1} parent=1 // pred_check
      _
    $region263: #{tpu_custom_call.1} parent=1 // pred_check_branch
      %1085 = sbr.rel target = $region265
    $region264: #{tpu_custom_call.1} parent=1 // pred_region
      %1086 = sst [smem:[#allocation12]] [#allocation135]
      %1087 = sst [smem:[#allocation13]] [#allocation134]
    $region265: #{tpu_custom_call.1} parent=1 // pred_fallthru
      _
    %1089 = shalt.err (0)
    %s1091 = sshll.u32 %s1082, 4
    %s1092 = int_to_ptr.vmem [resolvable:$true] %s1091
    %1094 = dma.hbm_to_vmem [thread:$0]  %s1081, 16, %s1092, %s1083
    %s1095 = sadd.s32 %s993, 6
    %s1096 = sld [smem:[#allocation5 + %s1095]]
    %s1097 = smul.addr %s1096, 16
    %s1098 = scalar_lea.hbm %s1, %s1097
    %s1099 = scalar_lea.vmem [#allocation2], 62
    %s1100 = scalar_lea.sflag [#allocation3], 62
    // Predicated region
    $region266: #{tpu_custom_call.1} parent=1 // pred_check
      _
    $region267: #{tpu_custom_call.1} parent=1 // pred_check_branch
      %1102 = sbr.rel target = $region269
    $region268: #{tpu_custom_call.1} parent=1 // pred_region
      %1103 = sst [smem:[#allocation12]] [#allocation137]
      %1104 = sst [smem:[#allocation13]] [#allocation136]
    $region269: #{tpu_custom_call.1} parent=1 // pred_fallthru
      _
    %1106 = shalt.err (0)
    %s1108 = sshll.u32 %s1099, 4
    %s1109 = int_to_ptr.vmem [resolvable:$true] %s1108
    %1111 = dma.hbm_to_vmem [thread:$0]  %s1098, 16, %s1109, %s1100
    %s1112 = sadd.s32 %s993, 7
    %s1113 = sld [smem:[#allocation5 + %s1112]]
    %s1114 = smul.addr %s1113, 16
    %s1115 = scalar_lea.hbm %s1, %s1114
    %s1116 = scalar_lea.vmem [#allocation2], 63
    %s1117 = scalar_lea.sflag [#allocation3], 63
    // Predicated region
    $region270: #{tpu_custom_call.1} parent=1 // pred_check
      _
    $region271: #{tpu_custom_call.1} parent=1 // pred_check_branch
      %1119 = sbr.rel target = $region273
    $region272: #{tpu_custom_call.1} parent=1 // pred_region
      %1120 = sst [smem:[#allocation12]] [#allocation139]
      %1121 = sst [smem:[#allocation13]] [#allocation138]
    $region273: #{tpu_custom_call.1} parent=1 // pred_fallthru
      _
    %1123 = shalt.err (0)
    %s1125 = sshll.u32 %s1116, 4
    %s1126 = int_to_ptr.vmem [resolvable:$true] %s1125
    %1128 = dma.hbm_to_vmem [thread:$0]  %s1115, 16, %s1126, %s1117
    %s1129 = smul.u32 1, 1
    %s1130 = sshll.u32 %s1129, 4
    %1131 = dma.done [#allocation3], %s1130
    %s1132 = sshll.u32 %s1129, 4
    %1133 = dma.done %s56, %s1132
    %s1134 = sshll.u32 %s1129, 4
    %1135 = dma.done %s73, %s1134
    %s1136 = sshll.u32 %s1129, 4
    %1137 = dma.done %s90, %s1136
    %s1138 = sshll.u32 %s1129, 4
    %1139 = dma.done %s107, %s1138
    %s1140 = sshll.u32 %s1129, 4
    %1141 = dma.done %s124, %s1140
    %s1142 = sshll.u32 %s1129, 4
    %1143 = dma.done %s141, %s1142
    %s1144 = sshll.u32 %s1129, 4
    %1145 = dma.done %s158, %s1144
    %s1146 = sshll.u32 %s1129, 4
    %1147 = dma.done %s176, %s1146
    %s1148 = sshll.u32 %s1129, 4
    %1149 = dma.done %s193, %s1148
    %s1150 = sshll.u32 %s1129, 4
    %1151 = dma.done %s210, %s1150
    %s1152 = sshll.u32 %s1129, 4
    %1153 = dma.done %s227, %s1152
    %s1154 = sshll.u32 %s1129, 4
    %1155 = dma.done %s244, %s1154
    %s1156 = sshll.u32 %s1129, 4
    %1157 = dma.done %s261, %s1156
    %s1158 = sshll.u32 %s1129, 4
    %1159 = dma.done %s278, %s1158
    %s1160 = sshll.u32 %s1129, 4
    %1161 = dma.done %s295, %s1160
    %s1162 = sshll.u32 %s1129, 4
    %1163 = dma.done %s313, %s1162
    %s1164 = sshll.u32 %s1129, 4
    %1165 = dma.done %s330, %s1164
    %s1166 = sshll.u32 %s1129, 4
    %1167 = dma.done %s347, %s1166
    %s1168 = sshll.u32 %s1129, 4
    %1169 = dma.done %s364, %s1168
    %s1170 = sshll.u32 %s1129, 4
    %1171 = dma.done %s381, %s1170
    %s1172 = sshll.u32 %s1129, 4
    %1173 = dma.done %s398, %s1172
    %s1174 = sshll.u32 %s1129, 4
    %1175 = dma.done %s415, %s1174
    %s1176 = sshll.u32 %s1129, 4
    %1177 = dma.done %s432, %s1176
    %s1178 = sshll.u32 %s1129, 4
    %1179 = dma.done %s450, %s1178
    %s1180 = sshll.u32 %s1129, 4
    %1181 = dma.done %s467, %s1180
    %s1182 = sshll.u32 %s1129, 4
    %1183 = dma.done %s484, %s1182
    %s1184 = sshll.u32 %s1129, 4
    %1185 = dma.done %s501, %s1184
    %s1186 = sshll.u32 %s1129, 4
    %1187 = dma.done %s518, %s1186
    %s1188 = sshll.u32 %s1129, 4
    %1189 = dma.done %s535, %s1188
    %s1190 = sshll.u32 %s1129, 4
    %1191 = dma.done %s552, %s1190
    %s1192 = sshll.u32 %s1129, 4
    %1193 = dma.done %s569, %s1192
    %s1194 = sshll.u32 %s1129, 4
    %1195 = dma.done %s587, %s1194
    %s1196 = sshll.u32 %s1129, 4
    %1197 = dma.done %s604, %s1196
    %s1198 = sshll.u32 %s1129, 4
    %1199 = dma.done %s621, %s1198
    %s1200 = sshll.u32 %s1129, 4
    %1201 = dma.done %s638, %s1200
    %s1202 = sshll.u32 %s1129, 4
    %1203 = dma.done %s655, %s1202
    %s1204 = sshll.u32 %s1129, 4
    %1205 = dma.done %s672, %s1204
    %s1206 = sshll.u32 %s1129, 4
    %1207 = dma.done %s689, %s1206
    %s1208 = sshll.u32 %s1129, 4
    %1209 = dma.done %s706, %s1208
    %s1210 = sshll.u32 %s1129, 4
    %1211 = dma.done %s724, %s1210
    %s1212 = sshll.u32 %s1129, 4
    %1213 = dma.done %s741, %s1212
    %s1214 = sshll.u32 %s1129, 4
    %1215 = dma.done %s758, %s1214
    %s1216 = sshll.u32 %s1129, 4
    %1217 = dma.done %s775, %s1216
    %s1218 = sshll.u32 %s1129, 4
    %1219 = dma.done %s792, %s1218
    %s1220 = sshll.u32 %s1129, 4
    %1221 = dma.done %s809, %s1220
    %s1222 = sshll.u32 %s1129, 4
    %1223 = dma.done %s826, %s1222
    %s1224 = sshll.u32 %s1129, 4
    %1225 = dma.done %s843, %s1224
    %s1226 = sshll.u32 %s1129, 4
    %1227 = dma.done %s861, %s1226
    %s1228 = sshll.u32 %s1129, 4
    %1229 = dma.done %s878, %s1228
    %s1230 = sshll.u32 %s1129, 4
    %1231 = dma.done %s895, %s1230
    %s1232 = sshll.u32 %s1129, 4
    %1233 = dma.done %s912, %s1232
    %s1234 = sshll.u32 %s1129, 4
    %1235 = dma.done %s929, %s1234
    %s1236 = sshll.u32 %s1129, 4
    %1237 = dma.done %s946, %s1236
    %s1238 = sshll.u32 %s1129, 4
    %1239 = dma.done %s963, %s1238
    %s1240 = sshll.u32 %s1129, 4
    %1241 = dma.done %s980, %s1240
    %s1242 = sshll.u32 %s1129, 4
    %1243 = dma.done %s998, %s1242
    %s1244 = sshll.u32 %s1129, 4
    %1245 = dma.done %s1015, %s1244
    %s1246 = sshll.u32 %s1129, 4
    %1247 = dma.done %s1032, %s1246
    %s1248 = sshll.u32 %s1129, 4
    %1249 = dma.done %s1049, %s1248
    %s1250 = sshll.u32 %s1129, 4
    %1251 = dma.done %s1066, %s1250
    %s1252 = sshll.u32 %s1129, 4
    %1253 = dma.done %s1083, %s1252
    %s1254 = sshll.u32 %s1129, 4
    %1255 = dma.done %s1100, %s1254
    %s1256 = sshll.u32 %s1129, 4
    %1257 = dma.done %s1117, %s1256
    %v1258 = vld [vmem:[#allocation2] sm:$0xff]
    %v1259 = vld [vmem:[#allocation2 + $0x8] sm:$0xff]
    %v1260 = vld [vmem:[#allocation2 + $0x10] sm:$0xff]
    %v1261 = vld [vmem:[#allocation2 + $0x18] sm:$0xff]
    %v1262 = vld [vmem:[#allocation2 + $0x20] sm:$0xff]
    %v1263 = vld [vmem:[#allocation2 + $0x28] sm:$0xff]
    %v1264 = vld [vmem:[#allocation2 + $0x30] sm:$0xff]
    %v1265 = vld [vmem:[#allocation2 + $0x38] sm:$0xff]
    %v1266 = vld [vmem:[%s2] sm:$0x1]
    %v1268 = vlaneseq
    %v1269 = vshrl.u32 %v1268, 7
    %v1270 = vsub.s32 0, %v1269
    %v1271 = vrot.slane %v1266, %v1270
    %v1273 = vadd.f32 %v1258, %v1271
    %v1274 = vadd.f32 %v1259, %v1271
    %v1275 = vadd.f32 %v1260, %v1271
    %v1276 = vadd.f32 %v1261, %v1271
    %v1277 = vadd.f32 %v1262, %v1271
    %v1278 = vadd.f32 %v1263, %v1271
    %v1279 = vadd.f32 %v1264, %v1271
    %v1280 = vadd.f32 %v1265, %v1271
    %v1281 = vmax.f32 %v1273, 0.0
    %v1282 = vmax.f32 %v1274, 0.0
    %v1283 = vmax.f32 %v1275, 0.0
    %v1284 = vmax.f32 %v1276, 0.0
    %v1285 = vmax.f32 %v1277, 0.0
    %v1286 = vmax.f32 %v1278, 0.0
    %v1287 = vmax.f32 %v1279, 0.0
    %v1288 = vmax.f32 %v1280, 0.0
    %v1289 = vrot.slane %v1281, 4
    %v1290 = vmax.f32 %v1281, %v1289
    %v1291 = vrot.slane %v1290, 2
    %v1292 = vmax.f32 %v1290, %v1291
    %v1293 = vrot.slane %v1292, 1
    %v1294 = vmax.f32 %v1292, %v1293
    %v1295 = vrot.slane %v1282, 4
    %v1296 = vmax.f32 %v1282, %v1295
    %v1297 = vrot.slane %v1296, 2
    %v1298 = vmax.f32 %v1296, %v1297
    %v1299 = vrot.slane %v1298, 1
    %v1300 = vmax.f32 %v1298, %v1299
    %v1301 = vrot.slane %v1283, 4
    %v1302 = vmax.f32 %v1283, %v1301
    %v1303 = vrot.slane %v1302, 2
    %v1304 = vmax.f32 %v1302, %v1303
    %v1305 = vrot.slane %v1304, 1
    %v1306 = vmax.f32 %v1304, %v1305
    %v1307 = vrot.slane %v1284, 4
    %v1308 = vmax.f32 %v1284, %v1307
    %v1309 = vrot.slane %v1308, 2
    %v1310 = vmax.f32 %v1308, %v1309
    %v1311 = vrot.slane %v1310, 1
    %v1312 = vmax.f32 %v1310, %v1311
    %v1313 = vrot.slane %v1285, 4
    %v1314 = vmax.f32 %v1285, %v1313
    %v1315 = vrot.slane %v1314, 2
    %v1316 = vmax.f32 %v1314, %v1315
    %v1317 = vrot.slane %v1316, 1
    %v1318 = vmax.f32 %v1316, %v1317
    %v1319 = vrot.slane %v1286, 4
    %v1320 = vmax.f32 %v1286, %v1319
    %v1321 = vrot.slane %v1320, 2
    %v1322 = vmax.f32 %v1320, %v1321
    %v1323 = vrot.slane %v1322, 1
    %v1324 = vmax.f32 %v1322, %v1323
    %v1325 = vrot.slane %v1287, 4
    %v1326 = vmax.f32 %v1287, %v1325
    %v1327 = vrot.slane %v1326, 2
    %v1328 = vmax.f32 %v1326, %v1327
    %v1329 = vrot.slane %v1328, 1
    %v1330 = vmax.f32 %v1328, %v1329
    %v1331 = vrot.slane %v1288, 4
    %v1332 = vmax.f32 %v1288, %v1331
    %v1333 = vrot.slane %v1332, 2
    %v1334 = vmax.f32 %v1332, %v1333
    %v1335 = vrot.slane %v1334, 1
    %v1336 = vmax.f32 %v1334, %v1335
    %v1337 = vld [vmem:[#allocation6] sm:$0xff]
    %v1338 = vld [vmem:[#allocation6 + $0x8] sm:$0xff]
    %v1339 = vld [vmem:[#allocation6 + $0x10] sm:$0xff]
    %v1340 = vld [vmem:[#allocation6 + $0x18] sm:$0xff]
    %v1341 = vld [vmem:[#allocation6 + $0x20] sm:$0xff]
    %v1342 = vld [vmem:[#allocation6 + $0x28] sm:$0xff]
    %v1343 = vld [vmem:[#allocation6 + $0x30] sm:$0xff]
    %v1344 = vld [vmem:[#allocation6 + $0x38] sm:$0xff]
    %v1345 = vld [vmem:[#allocation6 + $0x40] sm:$0xff]
    %v1346 = vld [vmem:[#allocation6 + $0x48] sm:$0xff]
    %v1347 = vld [vmem:[#allocation6 + $0x50] sm:$0xff]
    %v1348 = vld [vmem:[#allocation6 + $0x58] sm:$0xff]
    %v1349 = vld [vmem:[#allocation6 + $0x60] sm:$0xff]
    %v1350 = vld [vmem:[#allocation6 + $0x68] sm:$0xff]
    %v1351 = vld [vmem:[#allocation6 + $0x70] sm:$0xff]
    %v1352 = vld [vmem:[#allocation6 + $0x78] sm:$0xff]
    %v1353 = vld [vmem:[%s4] sm:$0x1]
    %v1355 = vlaneseq
    %v1356 = vshrl.u32 %v1355, 7
    %v1357 = vsub.s32 0, %v1356
    %v1358 = vrot.slane %v1353, %v1357
    %vm1368 = vcmask 1041409
    %v1369 = vsel %vm1368, %v1300, %v1294
    %vm1370 = vcmask 1042434
    %v1371 = vsel %vm1370, %v1306, %v1369
    %vm1372 = vcmask 1043459
    %v1373 = vsel %vm1372, %v1312, %v1371
    %vm1374 = vcmask 1044484
    %v1375 = vsel %vm1374, %v1318, %v1373
    %vm1376 = vcmask 1045509
    %v1377 = vsel %vm1376, %v1324, %v1375
    %vm1378 = vcmask 1046534
    %v1379 = vsel %vm1378, %v1330, %v1377
    %vm1380 = vcmask 1047559
    %v1381 = vsel %vm1380, %v1336, %v1379
    %1383 = vmatprep.subr.mxu0 0.0
    %1384 = vmatpush1.msra.mxu0 %v1337
    %1385 = vmatprep.subr.mxu0 0.0
    %1386 = vmatpush1.msra.mxu0 %v1338
    %1387 = vmatprep.subr.mxu0 0.0
    %1388 = vmatpush1.msra.mxu0 %v1339
    %1389 = vmatprep.subr.mxu0 0.0
    %1390 = vmatpush1.msra.mxu0 %v1340
    %1391 = vmatprep.subr.mxu0 0.0
    %1392 = vmatpush1.msra.mxu0 %v1341
    %1393 = vmatprep.subr.mxu0 0.0
    %1394 = vmatpush1.msra.mxu0 %v1342
    %1395 = vmatprep.subr.mxu0 0.0
    %1396 = vmatpush1.msra.mxu0 %v1343
    %1397 = vmatprep.subr.mxu0 0.0
    %1398 = vmatpush1.msra.mxu0 %v1344
    %1399 = vmatprep.subr.mxu0 0.0
    %1400 = vmatpush1.msra.mxu0 %v1345
    %1401 = vmatprep.subr.mxu0 0.0
    %1402 = vmatpush1.msra.mxu0 %v1346
    %1403 = vmatprep.subr.mxu0 0.0
    %1404 = vmatpush1.msra.mxu0 %v1347
    %1405 = vmatprep.subr.mxu0 0.0
    %1406 = vmatpush1.msra.mxu0 %v1348
    %1407 = vmatprep.subr.mxu0 0.0
    %1408 = vmatpush1.msra.mxu0 %v1349
    %1409 = vmatprep.subr.mxu0 0.0
    %1410 = vmatpush1.msra.mxu0 %v1350
    %1411 = vmatprep.subr.mxu0 0.0
    %1412 = vmatpush1.msra.mxu0 %v1351
    %1413 = vmatprep.subr.mxu0 0.0
    %1414 = vmatpush1.msra.mxu0 %v1352
    %1415 = vmatprep.subr.mxu0 0.0
    %1416 = vmatpush1.msra.mxu0 0.0
    %1417 = vmatprep.subr.mxu0 0.0
    %1418 = vmatpush1.msra.mxu0 0.0
    %1419 = vmatprep.subr.mxu0 0.0
    %1420 = vmatpush1.msra.mxu0 0.0
    %1421 = vmatprep.subr.mxu0 0.0
    %1422 = vmatpush1.msra.mxu0 0.0
    %1423 = vmatprep.subr.mxu0 0.0
    %1424 = vmatpush1.msra.mxu0 0.0
    %1425 = vmatprep.subr.mxu0 0.0
    %1426 = vmatpush1.msra.mxu0 0.0
    %1427 = vmatprep.subr.mxu0 0.0
    %1428 = vmatpush1.msra.mxu0 0.0
    %1429 = vmatprep.subr.mxu0 0.0
    %1430 = vmatpush1.msra.mxu0 0.0
    %1431 = vmatprep.subr.mxu0 0.0
    %1432 = vmatpush1.msra.mxu0 0.0
    %1433 = vmatprep.subr.mxu0 0.0
    %1434 = vmatpush1.msra.mxu0 0.0
    %1435 = vmatprep.subr.mxu0 0.0
    %1436 = vmatpush1.msra.mxu0 0.0
    %1437 = vmatprep.subr.mxu0 0.0
    %1438 = vmatpush1.msra.mxu0 0.0
    %1439 = vmatprep.subr.mxu0 0.0
    %1440 = vmatpush1.msra.mxu0 0.0
    %1441 = vmatprep.subr.mxu0 0.0
    %1442 = vmatpush1.msra.mxu0 0.0
    %1443 = vmatprep.subr.mxu0 0.0
    %1444 = vmatpush1.msra.mxu0 0.0
    %1445 = vmatprep.subr.mxu0 0.0
    %1446 = vmatpush1.msra.mxu0 0.0
    %1447 = vmatprep.mubr.f32.mxu0 0.0
    %1448 = vmatmul.mubr.f32.gmra.mrb[0].mxu0 %v1381
    %v1449 = vpop.f32.mrb[0].mxu0
    %v1450 = vadd.f32 %v1358, %v1449
    %v1451 = vpop.f32.mrb[0].mxu0
    %1452 = vdwg.mxu0
    %1453 = vst [vmem:[#allocation9] sm:$0xff] %v1450
    // Predicated region
    $region274: #{tpu_custom_call.1} parent=1 // pred_check
      _
    $region275: #{tpu_custom_call.1} parent=1 // pred_check_branch
      %1455 = sbr.rel (0) target = $region277
    $region276: #{tpu_custom_call.1} parent=1 // pred_region
      %s1457 = ssub.s32 128, 128
      %1458 = vsyncadd [#allocation8], %s1457
      %s1460 = sshll.u32 [#allocation9], 4
      %s1461 = int_to_ptr.vmem [resolvable:$true] %s1460
      %1463 = dma.vmem_to_hbm [thread:$0]  %s1461, 128, %s5, [#allocation8]
    $region277: #{tpu_custom_call.1} parent=1 // pred_fallthru
      _
    // Predicated region
    $region278: #{tpu_custom_call.1} parent=1 // pred_check
      _
    $region279: #{tpu_custom_call.1} parent=1 // pred_check_branch
      %1465 = sbr.rel (0) target = $region281
    $region280: #{tpu_custom_call.1} parent=1 // pred_region
      %1466 = dma.done [#allocation8], 128
    $region281: #{tpu_custom_call.1} parent=1 // pred_fallthru
      _
    %1467 = vsyncpa [#allocation7], 1
    %1468 = vsyncpa [#allocation8], 1
  %1469 = vsyncmov [#allocation3]
  %s1470 = vpop.sfrf %1469
  %p1471 = scmp.eq.s32.totalorder %s1470, 0
  %p1472 = pneg %p1471
  %1474 = shalt.err (%p1472)
  %s1475 = scalar_lea.sflag [#allocation3], 1
  %1476 = vsyncmov %s1475
  %s1477 = vpop.sfrf %1476
  %p1478 = scmp.eq.s32.totalorder %s1477, 0
  %p1479 = pneg %p1478
  %1481 = shalt.err (%p1479)
  %s1482 = scalar_lea.sflag [#allocation3], 2
  %1483 = vsyncmov %s1482
  %s1484 = vpop.sfrf %1483
  %p1485 = scmp.eq.s32.totalorder %s1484, 0
  %p1486 = pneg %p1485
  %1488 = shalt.err (%p1486)
  %s1489 = scalar_lea.sflag [#allocation3], 3
  %1490 = vsyncmov %s1489
  %s1491 = vpop.sfrf %1490
  %p1492 = scmp.eq.s32.totalorder %s1491, 0
  %p1493 = pneg %p1492
  %1495 = shalt.err (%p1493)
  %s1496 = scalar_lea.sflag [#allocation3], 4
  %1497 = vsyncmov %s1496
  %s1498 = vpop.sfrf %1497
  %p1499 = scmp.eq.s32.totalorder %s1498, 0
  %p1500 = pneg %p1499
  %1502 = shalt.err (%p1500)
  %s1503 = scalar_lea.sflag [#allocation3], 5
  %1504 = vsyncmov %s1503
  %s1505 = vpop.sfrf %1504
  %p1506 = scmp.eq.s32.totalorder %s1505, 0
  %p1507 = pneg %p1506
  %1509 = shalt.err (%p1507)
  %s1510 = scalar_lea.sflag [#allocation3], 6
  %1511 = vsyncmov %s1510
  %s1512 = vpop.sfrf %1511
  %p1513 = scmp.eq.s32.totalorder %s1512, 0
  %p1514 = pneg %p1513
  %1516 = shalt.err (%p1514)
  %s1517 = scalar_lea.sflag [#allocation3], 7
  %1518 = vsyncmov %s1517
  %s1519 = vpop.sfrf %1518
  %p1520 = scmp.eq.s32.totalorder %s1519, 0
  %p1521 = pneg %p1520
  %1523 = shalt.err (%p1521)
  %s1524 = scalar_lea.sflag [#allocation3], 8
  %1525 = vsyncmov %s1524
  %s1526 = vpop.sfrf %1525
  %p1527 = scmp.eq.s32.totalorder %s1526, 0
  %p1528 = pneg %p1527
  %1530 = shalt.err (%p1528)
  %s1531 = scalar_lea.sflag [#allocation3], 9
  %1532 = vsyncmov %s1531
  %s1533 = vpop.sfrf %1532
  %p1534 = scmp.eq.s32.totalorder %s1533, 0
  %p1535 = pneg %p1534
  %1537 = shalt.err (%p1535)
  %s1538 = scalar_lea.sflag [#allocation3], 10
  %1539 = vsyncmov %s1538
  %s1540 = vpop.sfrf %1539
  %p1541 = scmp.eq.s32.totalorder %s1540, 0
  %p1542 = pneg %p1541
  %1544 = shalt.err (%p1542)
  %s1545 = scalar_lea.sflag [#allocation3], 11
  %1546 = vsyncmov %s1545
  %s1547 = vpop.sfrf %1546
  %p1548 = scmp.eq.s32.totalorder %s1547, 0
  %p1549 = pneg %p1548
  %1551 = shalt.err (%p1549)
  %s1552 = scalar_lea.sflag [#allocation3], 12
  %1553 = vsyncmov %s1552
  %s1554 = vpop.sfrf %1553
  %p1555 = scmp.eq.s32.totalorder %s1554, 0
  %p1556 = pneg %p1555
  %1558 = shalt.err (%p1556)
  %s1559 = scalar_lea.sflag [#allocation3], 13
  %1560 = vsyncmov %s1559
  %s1561 = vpop.sfrf %1560
  %p1562 = scmp.eq.s32.totalorder %s1561, 0
  %p1563 = pneg %p1562
  %1565 = shalt.err (%p1563)
  %s1566 = scalar_lea.sflag [#allocation3], 14
  %1567 = vsyncmov %s1566
  %s1568 = vpop.sfrf %1567
  %p1569 = scmp.eq.s32.totalorder %s1568, 0
  %p1570 = pneg %p1569
  %1572 = shalt.err (%p1570)
  %s1573 = scalar_lea.sflag [#allocation3], 15
  %1574 = vsyncmov %s1573
  %s1575 = vpop.sfrf %1574
  %p1576 = scmp.eq.s32.totalorder %s1575, 0
  %p1577 = pneg %p1576
  %1579 = shalt.err (%p1577)
  %s1580 = scalar_lea.sflag [#allocation3], 16
  %1581 = vsyncmov %s1580
  %s1582 = vpop.sfrf %1581
  %p1583 = scmp.eq.s32.totalorder %s1582, 0
  %p1584 = pneg %p1583
  %1586 = shalt.err (%p1584)
  %s1587 = scalar_lea.sflag [#allocation3], 17
  %1588 = vsyncmov %s1587
  %s1589 = vpop.sfrf %1588
  %p1590 = scmp.eq.s32.totalorder %s1589, 0
  %p1591 = pneg %p1590
  %1593 = shalt.err (%p1591)
  %s1594 = scalar_lea.sflag [#allocation3], 18
  %1595 = vsyncmov %s1594
  %s1596 = vpop.sfrf %1595
  %p1597 = scmp.eq.s32.totalorder %s1596, 0
  %p1598 = pneg %p1597
  %1600 = shalt.err (%p1598)
  %s1601 = scalar_lea.sflag [#allocation3], 19
  %1602 = vsyncmov %s1601
  %s1603 = vpop.sfrf %1602
  %p1604 = scmp.eq.s32.totalorder %s1603, 0
  %p1605 = pneg %p1604
  %1607 = shalt.err (%p1605)
  %s1608 = scalar_lea.sflag [#allocation3], 20
  %1609 = vsyncmov %s1608
  %s1610 = vpop.sfrf %1609
  %p1611 = scmp.eq.s32.totalorder %s1610, 0
  %p1612 = pneg %p1611
  %1614 = shalt.err (%p1612)
  %s1615 = scalar_lea.sflag [#allocation3], 21
  %1616 = vsyncmov %s1615
  %s1617 = vpop.sfrf %1616
  %p1618 = scmp.eq.s32.totalorder %s1617, 0
  %p1619 = pneg %p1618
  %1621 = shalt.err (%p1619)
  %s1622 = scalar_lea.sflag [#allocation3], 22
  %1623 = vsyncmov %s1622
  %s1624 = vpop.sfrf %1623
  %p1625 = scmp.eq.s32.totalorder %s1624, 0
  %p1626 = pneg %p1625
  %1628 = shalt.err (%p1626)
  %s1629 = scalar_lea.sflag [#allocation3], 23
  %1630 = vsyncmov %s1629
  %s1631 = vpop.sfrf %1630
  %p1632 = scmp.eq.s32.totalorder %s1631, 0
  %p1633 = pneg %p1632
  %1635 = shalt.err (%p1633)
  %s1636 = scalar_lea.sflag [#allocation3], 24
  %1637 = vsyncmov %s1636
  %s1638 = vpop.sfrf %1637
  %p1639 = scmp.eq.s32.totalorder %s1638, 0
  %p1640 = pneg %p1639
  %1642 = shalt.err (%p1640)
  %s1643 = scalar_lea.sflag [#allocation3], 25
  %1644 = vsyncmov %s1643
  %s1645 = vpop.sfrf %1644
  %p1646 = scmp.eq.s32.totalorder %s1645, 0
  %p1647 = pneg %p1646
  %1649 = shalt.err (%p1647)
  %s1650 = scalar_lea.sflag [#allocation3], 26
  %1651 = vsyncmov %s1650
  %s1652 = vpop.sfrf %1651
  %p1653 = scmp.eq.s32.totalorder %s1652, 0
  %p1654 = pneg %p1653
  %1656 = shalt.err (%p1654)
  %s1657 = scalar_lea.sflag [#allocation3], 27
  %1658 = vsyncmov %s1657
  %s1659 = vpop.sfrf %1658
  %p1660 = scmp.eq.s32.totalorder %s1659, 0
  %p1661 = pneg %p1660
  %1663 = shalt.err (%p1661)
  %s1664 = scalar_lea.sflag [#allocation3], 28
  %1665 = vsyncmov %s1664
  %s1666 = vpop.sfrf %1665
  %p1667 = scmp.eq.s32.totalorder %s1666, 0
  %p1668 = pneg %p1667
  %1670 = shalt.err (%p1668)
  %s1671 = scalar_lea.sflag [#allocation3], 29
  %1672 = vsyncmov %s1671
  %s1673 = vpop.sfrf %1672
  %p1674 = scmp.eq.s32.totalorder %s1673, 0
  %p1675 = pneg %p1674
  %1677 = shalt.err (%p1675)
  %s1678 = scalar_lea.sflag [#allocation3], 30
  %1679 = vsyncmov %s1678
  %s1680 = vpop.sfrf %1679
  %p1681 = scmp.eq.s32.totalorder %s1680, 0
  %p1682 = pneg %p1681
  %1684 = shalt.err (%p1682)
  %s1685 = scalar_lea.sflag [#allocation3], 31
  %1686 = vsyncmov %s1685
  %s1687 = vpop.sfrf %1686
  %p1688 = scmp.eq.s32.totalorder %s1687, 0
  %p1689 = pneg %p1688
  %1691 = shalt.err (%p1689)
  %s1692 = scalar_lea.sflag [#allocation3], 32
  %1693 = vsyncmov %s1692
  %s1694 = vpop.sfrf %1693
  %p1695 = scmp.eq.s32.totalorder %s1694, 0
  %p1696 = pneg %p1695
  %1698 = shalt.err (%p1696)
  %s1699 = scalar_lea.sflag [#allocation3], 33
  %1700 = vsyncmov %s1699
  %s1701 = vpop.sfrf %1700
  %p1702 = scmp.eq.s32.totalorder %s1701, 0
  %p1703 = pneg %p1702
  %1705 = shalt.err (%p1703)
  %s1706 = scalar_lea.sflag [#allocation3], 34
  %1707 = vsyncmov %s1706
  %s1708 = vpop.sfrf %1707
  %p1709 = scmp.eq.s32.totalorder %s1708, 0
  %p1710 = pneg %p1709
  %1712 = shalt.err (%p1710)
  %s1713 = scalar_lea.sflag [#allocation3], 35
  %1714 = vsyncmov %s1713
  %s1715 = vpop.sfrf %1714
  %p1716 = scmp.eq.s32.totalorder %s1715, 0
  %p1717 = pneg %p1716
  %1719 = shalt.err (%p1717)
  %s1720 = scalar_lea.sflag [#allocation3], 36
  %1721 = vsyncmov %s1720
  %s1722 = vpop.sfrf %1721
  %p1723 = scmp.eq.s32.totalorder %s1722, 0
  %p1724 = pneg %p1723
  %1726 = shalt.err (%p1724)
  %s1727 = scalar_lea.sflag [#allocation3], 37
  %1728 = vsyncmov %s1727
  %s1729 = vpop.sfrf %1728
  %p1730 = scmp.eq.s32.totalorder %s1729, 0
  %p1731 = pneg %p1730
  %1733 = shalt.err (%p1731)
  %s1734 = scalar_lea.sflag [#allocation3], 38
  %1735 = vsyncmov %s1734
  %s1736 = vpop.sfrf %1735
  %p1737 = scmp.eq.s32.totalorder %s1736, 0
  %p1738 = pneg %p1737
  %1740 = shalt.err (%p1738)
  %s1741 = scalar_lea.sflag [#allocation3], 39
  %1742 = vsyncmov %s1741
  %s1743 = vpop.sfrf %1742
  %p1744 = scmp.eq.s32.totalorder %s1743, 0
  %p1745 = pneg %p1744
  %1747 = shalt.err (%p1745)
  %s1748 = scalar_lea.sflag [#allocation3], 40
  %1749 = vsyncmov %s1748
  %s1750 = vpop.sfrf %1749
  %p1751 = scmp.eq.s32.totalorder %s1750, 0
  %p1752 = pneg %p1751
  %1754 = shalt.err (%p1752)
  %s1755 = scalar_lea.sflag [#allocation3], 41
  %1756 = vsyncmov %s1755
  %s1757 = vpop.sfrf %1756
  %p1758 = scmp.eq.s32.totalorder %s1757, 0
  %p1759 = pneg %p1758
  %1761 = shalt.err (%p1759)
  %s1762 = scalar_lea.sflag [#allocation3], 42
  %1763 = vsyncmov %s1762
  %s1764 = vpop.sfrf %1763
  %p1765 = scmp.eq.s32.totalorder %s1764, 0
  %p1766 = pneg %p1765
  %1768 = shalt.err (%p1766)
  %s1769 = scalar_lea.sflag [#allocation3], 43
  %1770 = vsyncmov %s1769
  %s1771 = vpop.sfrf %1770
  %p1772 = scmp.eq.s32.totalorder %s1771, 0
  %p1773 = pneg %p1772
  %1775 = shalt.err (%p1773)
  %s1776 = scalar_lea.sflag [#allocation3], 44
  %1777 = vsyncmov %s1776
  %s1778 = vpop.sfrf %1777
  %p1779 = scmp.eq.s32.totalorder %s1778, 0
  %p1780 = pneg %p1779
  %1782 = shalt.err (%p1780)
  %s1783 = scalar_lea.sflag [#allocation3], 45
  %1784 = vsyncmov %s1783
  %s1785 = vpop.sfrf %1784
  %p1786 = scmp.eq.s32.totalorder %s1785, 0
  %p1787 = pneg %p1786
  %1789 = shalt.err (%p1787)
  %s1790 = scalar_lea.sflag [#allocation3], 46
  %1791 = vsyncmov %s1790
  %s1792 = vpop.sfrf %1791
  %p1793 = scmp.eq.s32.totalorder %s1792, 0
  %p1794 = pneg %p1793
  %1796 = shalt.err (%p1794)
  %s1797 = scalar_lea.sflag [#allocation3], 47
  %1798 = vsyncmov %s1797
  %s1799 = vpop.sfrf %1798
  %p1800 = scmp.eq.s32.totalorder %s1799, 0
  %p1801 = pneg %p1800
  %1803 = shalt.err (%p1801)
  %s1804 = scalar_lea.sflag [#allocation3], 48
  %1805 = vsyncmov %s1804
  %s1806 = vpop.sfrf %1805
  %p1807 = scmp.eq.s32.totalorder %s1806, 0
  %p1808 = pneg %p1807
  %1810 = shalt.err (%p1808)
  %s1811 = scalar_lea.sflag [#allocation3], 49
  %1812 = vsyncmov %s1811
  %s1813 = vpop.sfrf %1812
  %p1814 = scmp.eq.s32.totalorder %s1813, 0
  %p1815 = pneg %p1814
  %1817 = shalt.err (%p1815)
  %s1818 = scalar_lea.sflag [#allocation3], 50
  %1819 = vsyncmov %s1818
  %s1820 = vpop.sfrf %1819
  %p1821 = scmp.eq.s32.totalorder %s1820, 0
  %p1822 = pneg %p1821
  %1824 = shalt.err (%p1822)
  %s1825 = scalar_lea.sflag [#allocation3], 51
  %1826 = vsyncmov %s1825
  %s1827 = vpop.sfrf %1826
  %p1828 = scmp.eq.s32.totalorder %s1827, 0
  %p1829 = pneg %p1828
  %1831 = shalt.err (%p1829)
  %s1832 = scalar_lea.sflag [#allocation3], 52
  %1833 = vsyncmov %s1832
  %s1834 = vpop.sfrf %1833
  %p1835 = scmp.eq.s32.totalorder %s1834, 0
  %p1836 = pneg %p1835
  %1838 = shalt.err (%p1836)
  %s1839 = scalar_lea.sflag [#allocation3], 53
  %1840 = vsyncmov %s1839
  %s1841 = vpop.sfrf %1840
  %p1842 = scmp.eq.s32.totalorder %s1841, 0
  %p1843 = pneg %p1842
  %1845 = shalt.err (%p1843)
  %s1846 = scalar_lea.sflag [#allocation3], 54
  %1847 = vsyncmov %s1846
  %s1848 = vpop.sfrf %1847
  %p1849 = scmp.eq.s32.totalorder %s1848, 0
  %p1850 = pneg %p1849
  %1852 = shalt.err (%p1850)
  %s1853 = scalar_lea.sflag [#allocation3], 55
  %1854 = vsyncmov %s1853
  %s1855 = vpop.sfrf %1854
  %p1856 = scmp.eq.s32.totalorder %s1855, 0
  %p1857 = pneg %p1856
  %1859 = shalt.err (%p1857)
  %s1860 = scalar_lea.sflag [#allocation3], 56
  %1861 = vsyncmov %s1860
  %s1862 = vpop.sfrf %1861
  %p1863 = scmp.eq.s32.totalorder %s1862, 0
  %p1864 = pneg %p1863
  %1866 = shalt.err (%p1864)
  %s1867 = scalar_lea.sflag [#allocation3], 57
  %1868 = vsyncmov %s1867
  %s1869 = vpop.sfrf %1868
  %p1870 = scmp.eq.s32.totalorder %s1869, 0
  %p1871 = pneg %p1870
  %1873 = shalt.err (%p1871)
  %s1874 = scalar_lea.sflag [#allocation3], 58
  %1875 = vsyncmov %s1874
  %s1876 = vpop.sfrf %1875
  %p1877 = scmp.eq.s32.totalorder %s1876, 0
  %p1878 = pneg %p1877
  %1880 = shalt.err (%p1878)
  %s1881 = scalar_lea.sflag [#allocation3], 59
  %1882 = vsyncmov %s1881
  %s1883 = vpop.sfrf %1882
  %p1884 = scmp.eq.s32.totalorder %s1883, 0
  %p1885 = pneg %p1884
  %1887 = shalt.err (%p1885)
  %s1888 = scalar_lea.sflag [#allocation3], 60
  %1889 = vsyncmov %s1888
  %s1890 = vpop.sfrf %1889
  %p1891 = scmp.eq.s32.totalorder %s1890, 0
  %p1892 = pneg %p1891
  %1894 = shalt.err (%p1892)
  %s1895 = scalar_lea.sflag [#allocation3], 61
  %1896 = vsyncmov %s1895
  %s1897 = vpop.sfrf %1896
  %p1898 = scmp.eq.s32.totalorder %s1897, 0
  %p1899 = pneg %p1898
  %1901 = shalt.err (%p1899)
  %s1902 = scalar_lea.sflag [#allocation3], 62
  %1903 = vsyncmov %s1902
  %s1904 = vpop.sfrf %1903
  %p1905 = scmp.eq.s32.totalorder %s1904, 0
  %p1906 = pneg %p1905
  %1908 = shalt.err (%p1906)
  %s1909 = scalar_lea.sflag [#allocation3], 63
  %1910 = vsyncmov %s1909
  %s1911 = vpop.sfrf %1910
  %p1912 = scmp.eq.s32.totalorder %s1911, 0
  %p1913 = pneg %p1912
  %1915 = shalt.err (%p1913)

</llo_original>
